<compile_context>
chip_gen: v7x
topology: tpu7x:2x2x1
jax: 0.10.0
libtpu: 0.0.40
codegen_flags: <defaults>
</compile_context>

<pallas_src>
import jax
import jax.numpy as jnp
from jax.experimental import pallas as pl
from jax.experimental.pallas import tpu as pltpu


def _make_main_kernel(H, W, Cin, Cout, dilations, P, mxu_dtype):
    HW = H * W

    def kernel(x_ref, dwg_ref, wblk_ref, bias_ref, wg_ref, bg_ref,
               wf4_ref, wf5_ref, out_ref, s1_ref, s2_ref, pad_ref):
        # x_ref block: (1, H, W, Cin) raw (un-normalized) input.
        x4 = x_ref[...].astype(jnp.float32)
        x2 = x4.reshape(HW, Cin)                                        # (HW, Cin)

        # ---- shared zero-padded RAW-x scratch (all BN folding lives in the
        #      weights / bias): zero border strips only, write the interior once.
        pad_ref[0:P, :, :] = jnp.zeros((P, W + 2 * P, Cin), jnp.float32)
        pad_ref[P + H:P + H + P, :, :] = jnp.zeros((P, W + 2 * P, Cin), jnp.float32)
        pad_ref[P:P + H, 0:P, :] = jnp.zeros((H, P, Cin), jnp.float32)
        pad_ref[P:P + H, P + W:P + W + P, :] = jnp.zeros((H, P, Cin), jnp.float32)
        pad_ref[P:P + H, P:P + W, :] = x4.reshape(H, W, Cin)

        # ---- branches 2..4: dilated 3x3 depthwise (BN gamma*rstd folded into taps)
        parts = [x2]                           # branch 1 consumes raw x (fold in wblk)
        for b, d in enumerate(dilations):
            dwacc = jnp.zeros((H, W, Cin), jnp.float32)
            for kj in range(3):                # W-shift hoisted: 3 sublane slices, not 9
                ws = P + (kj - 1) * d
                xw = pad_ref[:, ws:ws + W, :]  # (H+2P, W, Cin)
                for ki in range(3):
                    hs = P + (ki - 1) * d
                    row = b * 9 + ki * 3 + kj
                    dwacc = dwacc + xw[hs:hs + H] * dwg_ref[row:row + 1, :]
            parts.append(dwacc.reshape(HW, Cin))

        # ---- merged projections: branch-1 1x1 conv + three pointwise convs as ONE
        #      block-diagonal K=4*Cin matmul; the exact BN constant term (including
        #      its interaction with the conv zero padding) is a precomputed bias.
        z = jnp.concatenate(parts, axis=-1)                             # (HW, 4*Cin)
        y = jnp.maximum(
            jnp.dot(z.astype(mxu_dtype), wblk_ref[...].astype(mxu_dtype),
                    preferred_element_type=jnp.float32) + bias_ref[...], 0.0)  # (HW,128)

        # ---- merged final 1x1 projection over the four spatial branches (K=128)
        acc = jnp.dot(y.astype(mxu_dtype), wf4_ref[...].astype(mxu_dtype),
                      preferred_element_type=jnp.float32)               # (HW, Cout)

        # ---- branch 5: GAP of raw x -> 1x1 conv (+bias) -> ReLU -> final 1x1 slice
        #      (bilinear align_corners upsample from 1x1 == spatial broadcast).
        gap = jnp.mean(x2, axis=0, keepdims=True)                       # (1, Cin)
        y5 = jnp.maximum(
            jnp.dot(gap, wg_ref[...], preferred_element_type=jnp.float32)
            + bg_ref[...], 0.0)                                         # (1, 32)
        c5 = jnp.dot(y5, wf5_ref[...], preferred_element_type=jnp.float32)  # (1, Cout)

        o = acc + c5                                                    # pre-final-BN
        out_ref[...] = o.reshape(1, HW, Cout)
        # per-image partial sums for the final BN batch stats (avoids an extra
        # full HBM read of the pre-BN activations in the wrapper).
        s1_ref[...] = jnp.sum(o, axis=0, keepdims=True).reshape(1, 1, Cout)
        s2_ref[...] = jnp.sum(o * o, axis=0, keepdims=True).reshape(1, 1, Cout)

    return kernel


def _bn_relu_kernel(a_ref, s_ref, b_ref, o_ref):
    # a/o blocks: (1, H, W*Cout) -- lane-dense (128-multiple lane width);
    # s/b blocks: (1, W*Cout) per-channel scale/shift tiled over W.
    o_ref[...] = jnp.maximum(a_ref[...] * s_ref[...] + b_ref[...], 0.0)


def _depthwise_bias_terms(dw, pw, cvec, dilations, H, W):
    """Exact constant-term contribution through zero-padded dilated depthwise + pointwise.

    cvec[b] = beta_b - gamma_b*rstd*mean (per input channel).
    Returns (3, H*W, 32): per-branch, per-pixel bias added before the ReLU.
    """
    Cin = dw.shape[1]
    h = jnp.arange(H)
    w = jnp.arange(W)
    terms = []
    for b, d in enumerate(dilations):
        cb = jnp.zeros((H, W, Cin), jnp.float32)
        for ki in range(3):
            ih = ((h + (ki - 1) * d >= 0) & (h + (ki - 1) * d < H)).astype(jnp.float32)
            for kj in range(3):
                iw = ((w + (kj - 1) * d >= 0) & (w + (kj - 1) * d < W)).astype(jnp.float32)
                cb = cb + (ih[:, None, None] * iw[None, :, None]
                           * dw[b * 9 + ki * 3 + kj][None, None, :])
        bt = jnp.einsum('hwc,co->hwo', cvec[b][None, None, :] * cb, pw[b])
        terms.append(bt.reshape(H * W, 32))
    return jnp.stack(terms, axis=0)


def init_aspp_params(key, inplanes, outplanes):
    """Deterministic synthetic parameters matching the module's shapes."""
    ks = jax.random.split(key, 10)

    def nrm(k, shape, scale=0.1):
        return (scale * jax.random.normal(k, shape)).astype(jnp.float32)

    return dict(
        bn_g=(1.0 + nrm(ks[0], (4, inplanes))),        # per-branch BN gamma
        bn_b=nrm(ks[1], (4, inplanes)),                # per-branch BN beta
        w1=nrm(ks[2], (inplanes, 32)),                 # aspp1 1x1 conv weight (Cin,32)
        dw=nrm(ks[3], (27, inplanes)),                 # 3 branches x 3x3 depthwise kernels
        pw=nrm(ks[4], (3, inplanes, 32)),              # 3 branches pointwise 1x1 weights
        wg=nrm(ks[5], (inplanes, 32)),                 # global-pool 1x1 conv weight
        bg=nrm(ks[6], (1, 32)),                        # global-pool 1x1 conv bias
        wf=nrm(ks[7], (160, outplanes)),               # final 1x1 conv weight (160,Cout)
        gf=(1.0 + nrm(ks[8], (1, outplanes))),         # final BN gamma
        bf=nrm(ks[9], (1, outplanes)),                 # final BN beta
    )


def aspp_forward(x_nchw, params, output_stride=16, mxu_dtype=jnp.float32):
    dil_map = {1: [1, 24, 40, 56], 2: [1, 12, 20, 28], 4: [1, 5, 10, 14],
               8: [1, 3, 5, 7], 16: [1, 2, 3, 4]}
    dilations = tuple(dil_map[output_stride][1:])       # the three 3x3 branches
    P = max(dilations)
    eps = 1e-5

    x = jnp.transpose(x_nchw, (0, 2, 3, 1)).astype(jnp.float32)   # NCHW -> NHWC
    N, H, W, Cin = x.shape
    HW = H * W
    Cout = params['wf'].shape[1]

    # ---------- pre-pass: input BN batch stats (one-pass sum / sum-of-squares) ----------
    xf = x.reshape(N * HW, Cin)
    cnt = float(N * HW)
    mean = jnp.sum(xf, axis=0) / cnt
    var = jnp.maximum(jnp.sum(xf * xf, axis=0) / cnt - mean * mean, 0.0)
    rstd = jax.lax.rsqrt(var + eps)

    bn_g, bn_b = params['bn_g'], params['bn_b']
    g_r = bn_g * rstd[None, :]                   # (4,Cin) gamma*rstd   (full BN fold)
    c_b = bn_b - g_r * mean[None, :]             # (4,Cin) beta - gamma*rstd*mean

    # branch 1: BN fully folded into the 1x1 conv weight + a constant bias
    w1f = g_r[0][:, None] * params['w1']                       # (Cin,32)
    b1f = c_b[0] @ params['w1']                                # (32,)

    # branches 2..4: gamma*rstd folded into the depthwise taps; the constant BN term
    # (interacting with the conv's zero padding) becomes an exact per-pixel bias.
    dwg = params['dw'] * jnp.repeat(g_r[1:4], 9, axis=0)       # (27,Cin)
    bt = _depthwise_bias_terms(params['dw'], params['pw'], c_b[1:4],
                               dilations, H, W)                # (3,HW,32)

    # merged block-diagonal projection (4*Cin -> 128) + per-pixel bias (HW,128)
    wblk = jnp.zeros((4 * Cin, 128), jnp.float32)
    wblk = wblk.at[0:Cin, 0:32].set(w1f)
    for b in range(3):
        wblk = wblk.at[(b + 1) * Cin:(b + 2) * Cin,
                       32 * (b + 1):32 * (b + 2)].set(params['pw'][b])
    bias_all = jnp.concatenate(
        [jnp.broadcast_to(b1f[None, :], (HW, 32)), bt[0], bt[1], bt[2]], axis=-1)

    wf4 = params['wf'][:128]                                   # (128,Cout)
    wf5 = params['wf'][128:]                                   # (32,Cout)

    # ---------- main kernel: per-image branches + merged projections ----------
    kernel = _make_main_kernel(H, W, Cin, Cout, dilations, P, mxu_dtype)

    itemsz = 4
    param_bytes = itemsz * (27 * Cin + 4 * Cin * 128 + HW * 128 + Cin * 32 + 32
                            + 160 * Cout)
    blk_bytes = itemsz * (HW * Cin + HW * Cout + 2 * Cout)
    pad_bytes = itemsz * (H + 2 * P) * (W + 2 * P) * Cin
    temp_bytes = itemsz * HW * (8 * Cin + 128 + 2 * Cout) * 2
    vmem_limit = int(min(max(2 * blk_bytes + param_bytes + pad_bytes
                             + temp_bytes + (4 << 20), 16 << 20), 48 << 20))

    flops = 2 * N * HW * (27 * Cin + 4 * Cin * 128 + 128 * Cout) \
        + 2 * N * (Cin * 32 + 32 * Cout)
    bytes_accessed = itemsz * N * HW * (Cin + Cout) + param_bytes

    acc, ps1, ps2 = pl.pallas_call(
        kernel,
        out_shape=(jax.ShapeDtypeStruct((N, HW, Cout), jnp.float32),
                   jax.ShapeDtypeStruct((N, 1, Cout), jnp.float32),
                   jax.ShapeDtypeStruct((N, 1, Cout), jnp.float32)),
        grid=(N,),
        in_specs=[
            pl.BlockSpec((1, H, W, Cin), lambda n: (n, 0, 0, 0)),  # raw x
            pl.BlockSpec((27, Cin), lambda n: (0, 0)),             # depthwise (BN folded)
            pl.BlockSpec((4 * Cin, 128), lambda n: (0, 0)),        # block-diag projection
            pl.BlockSpec((HW, 128), lambda n: (0, 0)),             # per-pixel bias
            pl.BlockSpec((Cin, 32), lambda n: (0, 0)),             # global-pool conv W
            pl.BlockSpec((1, 32), lambda n: (0, 0)),               # global-pool conv b
            pl.BlockSpec((128, Cout), lambda n: (0, 0)),           # wf[:128]
            pl.BlockSpec((32, Cout), lambda n: (0, 0)),            # wf[128:]
        ],
        out_specs=[
            pl.BlockSpec((1, HW, Cout), lambda n: (n, 0, 0)),      # pre-final-BN act
            pl.BlockSpec((1, 1, Cout), lambda n: (n, 0, 0)),       # per-image sum
            pl.BlockSpec((1, 1, Cout), lambda n: (n, 0, 0)),       # per-image sum-of-sq
        ],
        scratch_shapes=[pltpu.VMEM((H + 2 * P, W + 2 * P, Cin), jnp.float32)],
        compiler_params=pltpu.CompilerParams(
            dimension_semantics=("parallel",),
            vmem_limit_bytes=vmem_limit),
        cost_estimate=pl.CostEstimate(flops=int(flops), transcendentals=0,
                                      bytes_accessed=int(bytes_accessed)),
    )(x, dwg, wblk, bias_all, params['wg'], params['bg'], wf4, wf5)

    # ---------- post-pass: final BN from per-image partial sums + lane-dense BN/ReLU ----------
    fs1 = jnp.sum(ps1[:, 0, :], axis=0)
    fs2 = jnp.sum(ps2[:, 0, :], axis=0)
    fm = fs1 / cnt
    fv = jnp.maximum(fs2 / cnt - fm * fm, 0.0)
    fr = jax.lax.rsqrt(fv + eps)
    scale = params['gf'][0] * fr                                  # (Cout,)
    shift = params['bf'][0] - scale * fm                          # (Cout,)
    scale_t = jnp.tile(scale, W)[None, :]                         # (1, W*Cout)
    shift_t = jnp.tile(shift, W)[None, :]

    acc_ld = acc.reshape(N, H, W * Cout)                          # contiguous, free reshape
    out_ld = pl.pallas_call(
        _bn_relu_kernel,
        out_shape=jax.ShapeDtypeStruct((N, H, W * Cout), jnp.float32),
        grid=(N,),
        in_specs=[
            pl.BlockSpec((1, H, W * Cout), lambda n: (n, 0, 0)),
            pl.BlockSpec((1, W * Cout), lambda n: (0, 0)),
            pl.BlockSpec((1, W * Cout), lambda n: (0, 0)),
        ],
        out_specs=pl.BlockSpec((1, H, W * Cout), lambda n: (n, 0, 0)),
        compiler_params=pltpu.CompilerParams(dimension_semantics=("parallel",)),
    )(acc_ld, scale_t, shift_t)

    # Dropout2d(0.05) -> identity (eval mode).
    out = out_ld.reshape(N, H, W, Cout)
    return jnp.transpose(out, (0, 3, 1, 2))                       # NHWC -> NCHW


if __name__ == "__main__":
    key = jax.random.PRNGKey(0)
    k_x, k_p = jax.random.split(key)

    N, inplanes, H, W = 2, 8, 16, 16
    outplanes = 16
    x = jax.random.normal(k_x, (N, inplanes, H, W), dtype=jnp.float32)  # NCHW input
    params = init_aspp_params(k_p, inplanes, outplanes)

    fwd = jax.jit(lambda xx: aspp_forward(xx, params, output_stride=16))
    out = fwd(x)
    jax.block_until_ready(out)

    assert out.shape == (N, outplanes, H, W)
    assert bool(jnp.all(jnp.isfinite(out)))
    print("KERNEL_OK")
</pallas_src>

<mosaic_0001>
module attributes {stable_mosaic.version = 11 : i64} {
  func.func @kernel(%arg0: i32, %arg1: memref<1x16x16x8xf32, #tpu.memory_space<vmem>>, %arg2: memref<27x8xf32, #tpu.memory_space<vmem>>, %arg3: memref<32x128xf32, #tpu.memory_space<vmem>>, %arg4: memref<256x128xf32, #tpu.memory_space<vmem>>, %arg5: memref<8x32xf32, #tpu.memory_space<vmem>>, %arg6: memref<1x32xf32, #tpu.memory_space<vmem>>, %arg7: memref<128x16xf32, #tpu.memory_space<vmem>>, %arg8: memref<32x16xf32, #tpu.memory_space<vmem>>, %arg9: memref<1x256x16xf32, #tpu.memory_space<vmem>>, %arg10: memref<1x1x16xf32, #tpu.memory_space<vmem>>, %arg11: memref<1x1x16xf32, #tpu.memory_space<vmem>>, %arg12: memref<24x24x8xf32, #tpu.memory_space<vmem>>) attributes {dimension_semantics = [#tpu.dimension_semantics<parallel>], iteration_bounds = array<i64: 2>, scalar_prefetch = 0 : i64, scratch_operands = 1 : i64, tpu.core_type = #tpu.core_type<tc>, window_params = [{transform_indices = @transform_0, window_bounds = array<i64: 1, 16, 16, 8>}, {pipeline_mode = #tpu.pipeline_mode<synchronous>, transform_indices = @transform_1, window_bounds = array<i64: 27, 8>}, {pipeline_mode = #tpu.pipeline_mode<synchronous>, transform_indices = @transform_2, window_bounds = array<i64: 32, 128>}, {pipeline_mode = #tpu.pipeline_mode<synchronous>, transform_indices = @transform_3, window_bounds = array<i64: 256, 128>}, {pipeline_mode = #tpu.pipeline_mode<synchronous>, transform_indices = @transform_4, window_bounds = array<i64: 8, 32>}, {pipeline_mode = #tpu.pipeline_mode<synchronous>, transform_indices = @transform_5, window_bounds = array<i64: 1, 32>}, {pipeline_mode = #tpu.pipeline_mode<synchronous>, transform_indices = @transform_6, window_bounds = array<i64: 128, 16>}, {pipeline_mode = #tpu.pipeline_mode<synchronous>, transform_indices = @transform_7, window_bounds = array<i64: 32, 16>}, {transform_indices = @transform_8, window_bounds = array<i64: 1, 256, 16>}, {transform_indices = @transform_9, window_bounds = array<i64: 1, 1, 16>}, {transform_indices = @transform_10, window_bounds = array<i64: 1, 1, 16>}]} {
    %c0 = arith.constant 0 : index
    %c0_0 = arith.constant 0 : index
    %c0_1 = arith.constant 0 : index
    %c0_2 = arith.constant 0 : index
    %0 = vector.load %arg1[%c0, %c0_0, %c0_1, %c0_2] : memref<1x16x16x8xf32, #tpu.memory_space<vmem>>, vector<1x16x16x8xf32>
    %1 = vector.shape_cast %0 : vector<1x16x16x8xf32> to vector<256x8xf32>
    %cst = arith.constant 0.000000e+00 : f32
    %2 = vector.broadcast %cst : f32 to vector<4x24x8xf32>
    %c0_3 = arith.constant 0 : index
    %c0_4 = arith.constant 0 : index
    %c0_5 = arith.constant 0 : index
    %3 = vector.load %arg12[%c0_3, %c0_4, %c0_5] : memref<24x24x8xf32, #tpu.memory_space<vmem>>, vector<4x24x8xf32>
    tpu.vector_store %arg12[%c0_3, %c0_4, %c0_5], %2 {strides = array<i32>} : memref<24x24x8xf32, #tpu.memory_space<vmem>>, vector<4x24x8xf32>,
    %cst_6 = arith.constant 0.000000e+00 : f32
    %4 = vector.broadcast %cst_6 : f32 to vector<4x24x8xf32>
    %c20 = arith.constant 20 : index
    %c0_7 = arith.constant 0 : index
    %c0_8 = arith.constant 0 : index
    %5 = vector.load %arg12[%c20, %c0_7, %c0_8] : memref<24x24x8xf32, #tpu.memory_space<vmem>>, vector<4x24x8xf32>
    tpu.vector_store %arg12[%c20, %c0_7, %c0_8], %4 {strides = array<i32>} : memref<24x24x8xf32, #tpu.memory_space<vmem>>, vector<4x24x8xf32>,
    %cst_9 = arith.constant 0.000000e+00 : f32
    %6 = vector.broadcast %cst_9 : f32 to vector<16x4x8xf32>
    %c4 = arith.constant 4 : index
    %c0_10 = arith.constant 0 : index
    %c0_11 = arith.constant 0 : index
    %7 = vector.load %arg12[%c4, %c0_10, %c0_11] : memref<24x24x8xf32, #tpu.memory_space<vmem>>, vector<16x4x8xf32>
    tpu.vector_store %arg12[%c4, %c0_10, %c0_11], %6 {strides = array<i32>} : memref<24x24x8xf32, #tpu.memory_space<vmem>>, vector<16x4x8xf32>,
    %cst_12 = arith.constant 0.000000e+00 : f32
    %8 = vector.broadcast %cst_12 : f32 to vector<16x4x8xf32>
    %c4_13 = arith.constant 4 : index
    %c20_14 = arith.constant 20 : index
    %c0_15 = arith.constant 0 : index
    %9 = vector.load %arg12[%c4_13, %c20_14, %c0_15] : memref<24x24x8xf32, #tpu.memory_space<vmem>>, vector<16x4x8xf32>
    tpu.vector_store %arg12[%c4_13, %c20_14, %c0_15], %8 {strides = array<i32>} : memref<24x24x8xf32, #tpu.memory_space<vmem>>, vector<16x4x8xf32>,
    %10 = vector.shape_cast %0 : vector<1x16x16x8xf32> to vector<16x16x8xf32>
    %c4_16 = arith.constant 4 : index
    %c4_17 = arith.constant 4 : index
    %c0_18 = arith.constant 0 : index
    %11 = vector.load %arg12[%c4_16, %c4_17, %c0_18] : memref<24x24x8xf32, #tpu.memory_space<vmem>>, vector<16x16x8xf32>
    tpu.vector_store %arg12[%c4_16, %c4_17, %c0_18], %10 {strides = array<i32>} : memref<24x24x8xf32, #tpu.memory_space<vmem>>, vector<16x16x8xf32>,
    %cst_19 = arith.constant 0.000000e+00 : f32
    %12 = vector.broadcast %cst_19 : f32 to vector<16x16x8xf32>
    %c0_20 = arith.constant 0 : index
    %c2 = arith.constant 2 : index
    %c0_21 = arith.constant 0 : index
    %13 = vector.load %arg12[%c0_20, %c2, %c0_21] : memref<24x24x8xf32, #tpu.memory_space<vmem>>, vector<24x16x8xf32>
    %14 = vector.extract_strided_slice %13 {offsets = [2, 0, 0], sizes = [16, 16, 8], strides = [1, 1, 1]} : vector<24x16x8xf32> to vector<16x16x8xf32>
    %c0_22 = arith.constant 0 : index
    %c0_23 = arith.constant 0 : index
    %15 = vector.load %arg2[%c0_22, %c0_23] : memref<27x8xf32, #tpu.memory_space<vmem>>, vector<1x8xf32>
    %16 = vector.shape_cast %15 : vector<1x8xf32> to vector<1x1x8xf32>
    %17 = vector.broadcast %16 : vector<1x1x8xf32> to vector<16x16x8xf32>
    %18 = arith.mulf %14, %17 : vector<16x16x8xf32>
    %19 = arith.addf %12, %18 : vector<16x16x8xf32>
    %20 = vector.extract_strided_slice %13 {offsets = [4, 0, 0], sizes = [16, 16, 8], strides = [1, 1, 1]} : vector<24x16x8xf32> to vector<16x16x8xf32>
    %c3 = arith.constant 3 : index
    %c0_24 = arith.constant 0 : index
    %21 = vector.load %arg2[%c3, %c0_24] : memref<27x8xf32, #tpu.memory_space<vmem>>, vector<1x8xf32>
    %22 = vector.shape_cast %21 : vector<1x8xf32> to vector<1x1x8xf32>
    %23 = vector.broadcast %22 : vector<1x1x8xf32> to vector<16x16x8xf32>
    %24 = arith.mulf %20, %23 : vector<16x16x8xf32>
    %25 = arith.addf %19, %24 : vector<16x16x8xf32>
    %26 = vector.extract_strided_slice %13 {offsets = [6, 0, 0], sizes = [16, 16, 8], strides = [1, 1, 1]} : vector<24x16x8xf32> to vector<16x16x8xf32>
    %c6 = arith.constant 6 : index
    %c0_25 = arith.constant 0 : index
    %27 = vector.load %arg2[%c6, %c0_25] : memref<27x8xf32, #tpu.memory_space<vmem>>, vector<1x8xf32>
    %28 = vector.shape_cast %27 : vector<1x8xf32> to vector<1x1x8xf32>
    %29 = vector.broadcast %28 : vector<1x1x8xf32> to vector<16x16x8xf32>
    %30 = arith.mulf %26, %29 : vector<16x16x8xf32>
    %31 = arith.addf %25, %30 : vector<16x16x8xf32>
    %c0_26 = arith.constant 0 : index
    %c4_27 = arith.constant 4 : index
    %c0_28 = arith.constant 0 : index
    %32 = vector.load %arg12[%c0_26, %c4_27, %c0_28] : memref<24x24x8xf32, #tpu.memory_space<vmem>>, vector<24x16x8xf32>
    %33 = vector.extract_strided_slice %32 {offsets = [2, 0, 0], sizes = [16, 16, 8], strides = [1, 1, 1]} : vector<24x16x8xf32> to vector<16x16x8xf32>
    %c1 = arith.constant 1 : index
    %c0_29 = arith.constant 0 : index
    %34 = vector.load %arg2[%c1, %c0_29] : memref<27x8xf32, #tpu.memory_space<vmem>>, vector<1x8xf32>
    %35 = vector.shape_cast %34 : vector<1x8xf32> to vector<1x1x8xf32>
    %36 = vector.broadcast %35 : vector<1x1x8xf32> to vector<16x16x8xf32>
    %37 = arith.mulf %33, %36 : vector<16x16x8xf32>
    %38 = arith.addf %31, %37 : vector<16x16x8xf32>
    %39 = vector.extract_strided_slice %32 {offsets = [4, 0, 0], sizes = [16, 16, 8], strides = [1, 1, 1]} : vector<24x16x8xf32> to vector<16x16x8xf32>
    %c4_30 = arith.constant 4 : index
    %c0_31 = arith.constant 0 : index
    %40 = vector.load %arg2[%c4_30, %c0_31] : memref<27x8xf32, #tpu.memory_space<vmem>>, vector<1x8xf32>
    %41 = vector.shape_cast %40 : vector<1x8xf32> to vector<1x1x8xf32>
    %42 = vector.broadcast %41 : vector<1x1x8xf32> to vector<16x16x8xf32>
    %43 = arith.mulf %39, %42 : vector<16x16x8xf32>
    %44 = arith.addf %38, %43 : vector<16x16x8xf32>
    %45 = vector.extract_strided_slice %32 {offsets = [6, 0, 0], sizes = [16, 16, 8], strides = [1, 1, 1]} : vector<24x16x8xf32> to vector<16x16x8xf32>
    %c7 = arith.constant 7 : index
    %c0_32 = arith.constant 0 : index
    %46 = vector.load %arg2[%c7, %c0_32] : memref<27x8xf32, #tpu.memory_space<vmem>>, vector<1x8xf32>
    %47 = vector.shape_cast %46 : vector<1x8xf32> to vector<1x1x8xf32>
    %48 = vector.broadcast %47 : vector<1x1x8xf32> to vector<16x16x8xf32>
    %49 = arith.mulf %45, %48 : vector<16x16x8xf32>
    %50 = arith.addf %44, %49 : vector<16x16x8xf32>
    %c0_33 = arith.constant 0 : index
    %c6_34 = arith.constant 6 : index
    %c0_35 = arith.constant 0 : index
    %51 = vector.load %arg12[%c0_33, %c6_34, %c0_35] : memref<24x24x8xf32, #tpu.memory_space<vmem>>, vector<24x16x8xf32>
    %52 = vector.extract_strided_slice %51 {offsets = [2, 0, 0], sizes = [16, 16, 8], strides = [1, 1, 1]} : vector<24x16x8xf32> to vector<16x16x8xf32>
    %c2_36 = arith.constant 2 : index
    %c0_37 = arith.constant 0 : index
    %53 = vector.load %arg2[%c2_36, %c0_37] : memref<27x8xf32, #tpu.memory_space<vmem>>, vector<1x8xf32>
    %54 = vector.shape_cast %53 : vector<1x8xf32> to vector<1x1x8xf32>
    %55 = vector.broadcast %54 : vector<1x1x8xf32> to vector<16x16x8xf32>
    %56 = arith.mulf %52, %55 : vector<16x16x8xf32>
    %57 = arith.addf %50, %56 : vector<16x16x8xf32>
    %58 = vector.extract_strided_slice %51 {offsets = [4, 0, 0], sizes = [16, 16, 8], strides = [1, 1, 1]} : vector<24x16x8xf32> to vector<16x16x8xf32>
    %c5 = arith.constant 5 : index
    %c0_38 = arith.constant 0 : index
    %59 = vector.load %arg2[%c5, %c0_38] : memref<27x8xf32, #tpu.memory_space<vmem>>, vector<1x8xf32>
    %60 = vector.shape_cast %59 : vector<1x8xf32> to vector<1x1x8xf32>
    %61 = vector.broadcast %60 : vector<1x1x8xf32> to vector<16x16x8xf32>
    %62 = arith.mulf %58, %61 : vector<16x16x8xf32>
    %63 = arith.addf %57, %62 : vector<16x16x8xf32>
    %64 = vector.extract_strided_slice %51 {offsets = [6, 0, 0], sizes = [16, 16, 8], strides = [1, 1, 1]} : vector<24x16x8xf32> to vector<16x16x8xf32>
    %c8 = arith.constant 8 : index
    %c0_39 = arith.constant 0 : index
    %65 = vector.load %arg2[%c8, %c0_39] : memref<27x8xf32, #tpu.memory_space<vmem>>, vector<1x8xf32>
    %66 = vector.shape_cast %65 : vector<1x8xf32> to vector<1x1x8xf32>
    %67 = vector.broadcast %66 : vector<1x1x8xf32> to vector<16x16x8xf32>
    %68 = arith.mulf %64, %67 : vector<16x16x8xf32>
    %69 = arith.addf %63, %68 : vector<16x16x8xf32>
    %70 = vector.shape_cast %69 : vector<16x16x8xf32> to vector<256x8xf32>
    %cst_40 = arith.constant 0.000000e+00 : f32
    %71 = vector.broadcast %cst_40 : f32 to vector<16x16x8xf32>
    %c0_41 = arith.constant 0 : index
    %c1_42 = arith.constant 1 : index
    %c0_43 = arith.constant 0 : index
    %72 = vector.load %arg12[%c0_41, %c1_42, %c0_43] : memref<24x24x8xf32, #tpu.memory_space<vmem>>, vector<24x16x8xf32>
    %73 = vector.extract_strided_slice %72 {offsets = [1, 0, 0], sizes = [16, 16, 8], strides = [1, 1, 1]} : vector<24x16x8xf32> to vector<16x16x8xf32>
    %c9 = arith.constant 9 : index
    %c0_44 = arith.constant 0 : index
    %74 = vector.load %arg2[%c9, %c0_44] : memref<27x8xf32, #tpu.memory_space<vmem>>, vector<1x8xf32>
    %75 = vector.shape_cast %74 : vector<1x8xf32> to vector<1x1x8xf32>
    %76 = vector.broadcast %75 : vector<1x1x8xf32> to vector<16x16x8xf32>
    %77 = arith.mulf %73, %76 : vector<16x16x8xf32>
    %78 = arith.addf %71, %77 : vector<16x16x8xf32>
    %79 = vector.extract_strided_slice %72 {offsets = [4, 0, 0], sizes = [16, 16, 8], strides = [1, 1, 1]} : vector<24x16x8xf32> to vector<16x16x8xf32>
    %c12 = arith.constant 12 : index
    %c0_45 = arith.constant 0 : index
    %80 = vector.load %arg2[%c12, %c0_45] : memref<27x8xf32, #tpu.memory_space<vmem>>, vector<1x8xf32>
    %81 = vector.shape_cast %80 : vector<1x8xf32> to vector<1x1x8xf32>
    %82 = vector.broadcast %81 : vector<1x1x8xf32> to vector<16x16x8xf32>
    %83 = arith.mulf %79, %82 : vector<16x16x8xf32>
    %84 = arith.addf %78, %83 : vector<16x16x8xf32>
    %85 = vector.extract_strided_slice %72 {offsets = [7, 0, 0], sizes = [16, 16, 8], strides = [1, 1, 1]} : vector<24x16x8xf32> to vector<16x16x8xf32>
    %c15 = arith.constant 15 : index
    %c0_46 = arith.constant 0 : index
    %86 = vector.load %arg2[%c15, %c0_46] : memref<27x8xf32, #tpu.memory_space<vmem>>, vector<1x8xf32>
    %87 = vector.shape_cast %86 : vector<1x8xf32> to vector<1x1x8xf32>
    %88 = vector.broadcast %87 : vector<1x1x8xf32> to vector<16x16x8xf32>
    %89 = arith.mulf %85, %88 : vector<16x16x8xf32>
    %90 = arith.addf %84, %89 : vector<16x16x8xf32>
    %c0_47 = arith.constant 0 : index
    %c4_48 = arith.constant 4 : index
    %c0_49 = arith.constant 0 : index
    %91 = vector.load %arg12[%c0_47, %c4_48, %c0_49] : memref<24x24x8xf32, #tpu.memory_space<vmem>>, vector<24x16x8xf32>
    %92 = vector.extract_strided_slice %91 {offsets = [1, 0, 0], sizes = [16, 16, 8], strides = [1, 1, 1]} : vector<24x16x8xf32> to vector<16x16x8xf32>
    %c10 = arith.constant 10 : index
    %c0_50 = arith.constant 0 : index
    %93 = vector.load %arg2[%c10, %c0_50] : memref<27x8xf32, #tpu.memory_space<vmem>>, vector<1x8xf32>
    %94 = vector.shape_cast %93 : vector<1x8xf32> to vector<1x1x8xf32>
    %95 = vector.broadcast %94 : vector<1x1x8xf32> to vector<16x16x8xf32>
    %96 = arith.mulf %92, %95 : vector<16x16x8xf32>
    %97 = arith.addf %90, %96 : vector<16x16x8xf32>
    %98 = vector.extract_strided_slice %91 {offsets = [4, 0, 0], sizes = [16, 16, 8], strides = [1, 1, 1]} : vector<24x16x8xf32> to vector<16x16x8xf32>
    %c13 = arith.constant 13 : index
    %c0_51 = arith.constant 0 : index
    %99 = vector.load %arg2[%c13, %c0_51] : memref<27x8xf32, #tpu.memory_space<vmem>>, vector<1x8xf32>
    %100 = vector.shape_cast %99 : vector<1x8xf32> to vector<1x1x8xf32>
    %101 = vector.broadcast %100 : vector<1x1x8xf32> to vector<16x16x8xf32>
    %102 = arith.mulf %98, %101 : vector<16x16x8xf32>
    %103 = arith.addf %97, %102 : vector<16x16x8xf32>
    %104 = vector.extract_strided_slice %91 {offsets = [7, 0, 0], sizes = [16, 16, 8], strides = [1, 1, 1]} : vector<24x16x8xf32> to vector<16x16x8xf32>
    %c16 = arith.constant 16 : index
    %c0_52 = arith.constant 0 : index
    %105 = vector.load %arg2[%c16, %c0_52] : memref<27x8xf32, #tpu.memory_space<vmem>>, vector<1x8xf32>
    %106 = vector.shape_cast %105 : vector<1x8xf32> to vector<1x1x8xf32>
    %107 = vector.broadcast %106 : vector<1x1x8xf32> to vector<16x16x8xf32>
    %108 = arith.mulf %104, %107 : vector<16x16x8xf32>
    %109 = arith.addf %103, %108 : vector<16x16x8xf32>
    %c0_53 = arith.constant 0 : index
    %c7_54 = arith.constant 7 : index
    %c0_55 = arith.constant 0 : index
    %110 = vector.load %arg12[%c0_53, %c7_54, %c0_55] : memref<24x24x8xf32, #tpu.memory_space<vmem>>, vector<24x16x8xf32>
    %111 = vector.extract_strided_slice %110 {offsets = [1, 0, 0], sizes = [16, 16, 8], strides = [1, 1, 1]} : vector<24x16x8xf32> to vector<16x16x8xf32>
    %c11 = arith.constant 11 : index
    %c0_56 = arith.constant 0 : index
    %112 = vector.load %arg2[%c11, %c0_56] : memref<27x8xf32, #tpu.memory_space<vmem>>, vector<1x8xf32>
    %113 = vector.shape_cast %112 : vector<1x8xf32> to vector<1x1x8xf32>
    %114 = vector.broadcast %113 : vector<1x1x8xf32> to vector<16x16x8xf32>
    %115 = arith.mulf %111, %114 : vector<16x16x8xf32>
    %116 = arith.addf %109, %115 : vector<16x16x8xf32>
    %117 = vector.extract_strided_slice %110 {offsets = [4, 0, 0], sizes = [16, 16, 8], strides = [1, 1, 1]} : vector<24x16x8xf32> to vector<16x16x8xf32>
    %c14 = arith.constant 14 : index
    %c0_57 = arith.constant 0 : index
    %118 = vector.load %arg2[%c14, %c0_57] : memref<27x8xf32, #tpu.memory_space<vmem>>, vector<1x8xf32>
    %119 = vector.shape_cast %118 : vector<1x8xf32> to vector<1x1x8xf32>
    %120 = vector.broadcast %119 : vector<1x1x8xf32> to vector<16x16x8xf32>
    %121 = arith.mulf %117, %120 : vector<16x16x8xf32>
    %122 = arith.addf %116, %121 : vector<16x16x8xf32>
    %123 = vector.extract_strided_slice %110 {offsets = [7, 0, 0], sizes = [16, 16, 8], strides = [1, 1, 1]} : vector<24x16x8xf32> to vector<16x16x8xf32>
    %c17 = arith.constant 17 : index
    %c0_58 = arith.constant 0 : index
    %124 = vector.load %arg2[%c17, %c0_58] : memref<27x8xf32, #tpu.memory_space<vmem>>, vector<1x8xf32>
    %125 = vector.shape_cast %124 : vector<1x8xf32> to vector<1x1x8xf32>
    %126 = vector.broadcast %125 : vector<1x1x8xf32> to vector<16x16x8xf32>
    %127 = arith.mulf %123, %126 : vector<16x16x8xf32>
    %128 = arith.addf %122, %127 : vector<16x16x8xf32>
    %129 = vector.shape_cast %128 : vector<16x16x8xf32> to vector<256x8xf32>
    %cst_59 = arith.constant 0.000000e+00 : f32
    %130 = vector.broadcast %cst_59 : f32 to vector<16x16x8xf32>
    %c0_60 = arith.constant 0 : index
    %c0_61 = arith.constant 0 : index
    %c0_62 = arith.constant 0 : index
    %131 = vector.load %arg12[%c0_60, %c0_61, %c0_62] : memref<24x24x8xf32, #tpu.memory_space<vmem>>, vector<24x16x8xf32>
    %132 = vector.extract_strided_slice %131 {offsets = [0, 0, 0], sizes = [16, 16, 8], strides = [1, 1, 1]} : vector<24x16x8xf32> to vector<16x16x8xf32>
    %c18 = arith.constant 18 : index
    %c0_63 = arith.constant 0 : index
    %133 = vector.load %arg2[%c18, %c0_63] : memref<27x8xf32, #tpu.memory_space<vmem>>, vector<1x8xf32>
    %134 = vector.shape_cast %133 : vector<1x8xf32> to vector<1x1x8xf32>
    %135 = vector.broadcast %134 : vector<1x1x8xf32> to vector<16x16x8xf32>
    %136 = arith.mulf %132, %135 : vector<16x16x8xf32>
    %137 = arith.addf %130, %136 : vector<16x16x8xf32>
    %138 = vector.extract_strided_slice %131 {offsets = [4, 0, 0], sizes = [16, 16, 8], strides = [1, 1, 1]} : vector<24x16x8xf32> to vector<16x16x8xf32>
    %c21 = arith.constant 21 : index
    %c0_64 = arith.constant 0 : index
    %139 = vector.load %arg2[%c21, %c0_64] : memref<27x8xf32, #tpu.memory_space<vmem>>, vector<1x8xf32>
    %140 = vector.shape_cast %139 : vector<1x8xf32> to vector<1x1x8xf32>
    %141 = vector.broadcast %140 : vector<1x1x8xf32> to vector<16x16x8xf32>
    %142 = arith.mulf %138, %141 : vector<16x16x8xf32>
    %143 = arith.addf %137, %142 : vector<16x16x8xf32>
    %144 = vector.extract_strided_slice %131 {offsets = [8, 0, 0], sizes = [16, 16, 8], strides = [1, 1, 1]} : vector<24x16x8xf32> to vector<16x16x8xf32>
    %c24 = arith.constant 24 : index
    %c0_65 = arith.constant 0 : index
    %145 = vector.load %arg2[%c24, %c0_65] : memref<27x8xf32, #tpu.memory_space<vmem>>, vector<1x8xf32>
    %146 = vector.shape_cast %145 : vector<1x8xf32> to vector<1x1x8xf32>
    %147 = vector.broadcast %146 : vector<1x1x8xf32> to vector<16x16x8xf32>
    %148 = arith.mulf %144, %147 : vector<16x16x8xf32>
    %149 = arith.addf %143, %148 : vector<16x16x8xf32>
    %c0_66 = arith.constant 0 : index
    %c4_67 = arith.constant 4 : index
    %c0_68 = arith.constant 0 : index
    %150 = vector.load %arg12[%c0_66, %c4_67, %c0_68] : memref<24x24x8xf32, #tpu.memory_space<vmem>>, vector<24x16x8xf32>
    %151 = vector.extract_strided_slice %150 {offsets = [0, 0, 0], sizes = [16, 16, 8], strides = [1, 1, 1]} : vector<24x16x8xf32> to vector<16x16x8xf32>
    %c19 = arith.constant 19 : index
    %c0_69 = arith.constant 0 : index
    %152 = vector.load %arg2[%c19, %c0_69] : memref<27x8xf32, #tpu.memory_space<vmem>>, vector<1x8xf32>
    %153 = vector.shape_cast %152 : vector<1x8xf32> to vector<1x1x8xf32>
    %154 = vector.broadcast %153 : vector<1x1x8xf32> to vector<16x16x8xf32>
    %155 = arith.mulf %151, %154 : vector<16x16x8xf32>
    %156 = arith.addf %149, %155 : vector<16x16x8xf32>
    %157 = vector.extract_strided_slice %150 {offsets = [4, 0, 0], sizes = [16, 16, 8], strides = [1, 1, 1]} : vector<24x16x8xf32> to vector<16x16x8xf32>
    %c22 = arith.constant 22 : index
    %c0_70 = arith.constant 0 : index
    %158 = vector.load %arg2[%c22, %c0_70] : memref<27x8xf32, #tpu.memory_space<vmem>>, vector<1x8xf32>
    %159 = vector.shape_cast %158 : vector<1x8xf32> to vector<1x1x8xf32>
    %160 = vector.broadcast %159 : vector<1x1x8xf32> to vector<16x16x8xf32>
    %161 = arith.mulf %157, %160 : vector<16x16x8xf32>
    %162 = arith.addf %156, %161 : vector<16x16x8xf32>
    %163 = vector.extract_strided_slice %150 {offsets = [8, 0, 0], sizes = [16, 16, 8], strides = [1, 1, 1]} : vector<24x16x8xf32> to vector<16x16x8xf32>
    %c25 = arith.constant 25 : index
    %c0_71 = arith.constant 0 : index
    %164 = vector.load %arg2[%c25, %c0_71] : memref<27x8xf32, #tpu.memory_space<vmem>>, vector<1x8xf32>
    %165 = vector.shape_cast %164 : vector<1x8xf32> to vector<1x1x8xf32>
    %166 = vector.broadcast %165 : vector<1x1x8xf32> to vector<16x16x8xf32>
    %167 = arith.mulf %163, %166 : vector<16x16x8xf32>
    %168 = arith.addf %162, %167 : vector<16x16x8xf32>
    %c0_72 = arith.constant 0 : index
    %c8_73 = arith.constant 8 : index
    %c0_74 = arith.constant 0 : index
    %169 = vector.load %arg12[%c0_72, %c8_73, %c0_74] : memref<24x24x8xf32, #tpu.memory_space<vmem>>, vector<24x16x8xf32>
    %170 = vector.extract_strided_slice %169 {offsets = [0, 0, 0], sizes = [16, 16, 8], strides = [1, 1, 1]} : vector<24x16x8xf32> to vector<16x16x8xf32>
    %c20_75 = arith.constant 20 : index
    %c0_76 = arith.constant 0 : index
    %171 = vector.load %arg2[%c20_75, %c0_76] : memref<27x8xf32, #tpu.memory_space<vmem>>, vector<1x8xf32>
    %172 = vector.shape_cast %171 : vector<1x8xf32> to vector<1x1x8xf32>
    %173 = vector.broadcast %172 : vector<1x1x8xf32> to vector<16x16x8xf32>
    %174 = arith.mulf %170, %173 : vector<16x16x8xf32>
    %175 = arith.addf %168, %174 : vector<16x16x8xf32>
    %176 = vector.extract_strided_slice %169 {offsets = [4, 0, 0], sizes = [16, 16, 8], strides = [1, 1, 1]} : vector<24x16x8xf32> to vector<16x16x8xf32>
    %c23 = arith.constant 23 : index
    %c0_77 = arith.constant 0 : index
    %177 = vector.load %arg2[%c23, %c0_77] : memref<27x8xf32, #tpu.memory_space<vmem>>, vector<1x8xf32>
    %178 = vector.shape_cast %177 : vector<1x8xf32> to vector<1x1x8xf32>
    %179 = vector.broadcast %178 : vector<1x1x8xf32> to vector<16x16x8xf32>
    %180 = arith.mulf %176, %179 : vector<16x16x8xf32>
    %181 = arith.addf %175, %180 : vector<16x16x8xf32>
    %182 = vector.extract_strided_slice %169 {offsets = [8, 0, 0], sizes = [16, 16, 8], strides = [1, 1, 1]} : vector<24x16x8xf32> to vector<16x16x8xf32>
    %c26 = arith.constant 26 : index
    %c0_78 = arith.constant 0 : index
    %183 = vector.load %arg2[%c26, %c0_78] : memref<27x8xf32, #tpu.memory_space<vmem>>, vector<1x8xf32>
    %184 = vector.shape_cast %183 : vector<1x8xf32> to vector<1x1x8xf32>
    %185 = vector.broadcast %184 : vector<1x1x8xf32> to vector<16x16x8xf32>
    %186 = arith.mulf %182, %185 : vector<16x16x8xf32>
    %187 = arith.addf %181, %186 : vector<16x16x8xf32>
    %188 = vector.shape_cast %187 : vector<16x16x8xf32> to vector<256x8xf32>
    %189 = tpu.concatenate %1, %70, %129, %188 in 1 : vector<256x8xf32>, vector<256x8xf32>, vector<256x8xf32>, vector<256x8xf32> -> vector<256x32xf32>
    %c0_79 = arith.constant 0 : index
    %c0_80 = arith.constant 0 : index
    %190 = vector.load %arg3[%c0_79, %c0_80] : memref<32x128xf32, #tpu.memory_space<vmem>>, vector<32x128xf32>
    %cst_81 = arith.constant dense<0.000000e+00> : vector<256x128xf32>
    %191 = tpu.matmul %189, %190, %cst_81 {dimension_numbers = #tpu.dot_dimension_numbers<[1], [0], [0], [1], [0, 0, 1, 1], [], []>} : vector<256x32xf32>, vector<32x128xf32>, vector<256x128xf32> -> vector<256x128xf32>
    %c0_82 = arith.constant 0 : index
    %c0_83 = arith.constant 0 : index
    %192 = vector.load %arg4[%c0_82, %c0_83] : memref<256x128xf32, #tpu.memory_space<vmem>>, vector<256x128xf32>
    %193 = arith.addf %191, %192 : vector<256x128xf32>
    %cst_84 = arith.constant 0.000000e+00 : f32
    %194 = vector.broadcast %cst_84 : f32 to vector<256x128xf32>
    %195 = arith.maximumf %193, %194 : vector<256x128xf32>
    %c0_85 = arith.constant 0 : index
    %c0_86 = arith.constant 0 : index
    %196 = vector.load %arg7[%c0_85, %c0_86] : memref<128x16xf32, #tpu.memory_space<vmem>>, vector<128x16xf32>
    %cst_87 = arith.constant dense<0.000000e+00> : vector<256x16xf32>
    %197 = tpu.matmul %195, %196, %cst_87 {dimension_numbers = #tpu.dot_dimension_numbers<[1], [0], [0], [1], [0, 0, 1, 1], [], []>} : vector<256x128xf32>, vector<128x16xf32>, vector<256x16xf32> -> vector<256x16xf32>
    %cst_88 = arith.constant dense<0.000000e+00> : vector<8xf32>
    %198 = vector.multi_reduction <add>, %1, %cst_88 [0] : vector<256x8xf32> to vector<8xf32>
    %199 = vector.shape_cast %198 : vector<8xf32> to vector<1x8xf32>
    %cst_89 = arith.constant 2.560000e+02 : f32
    %200 = vector.broadcast %cst_89 : f32 to vector<1x8xf32>
    %201 = arith.divf %199, %200 : vector<1x8xf32>
    %c0_90 = arith.constant 0 : index
    %c0_91 = arith.constant 0 : index
    %202 = vector.load %arg5[%c0_90, %c0_91] : memref<8x32xf32, #tpu.memory_space<vmem>>, vector<8x32xf32>
    %cst_92 = arith.constant dense<0.000000e+00> : vector<1x32xf32>
    %203 = tpu.matmul %201, %202, %cst_92 {dimension_numbers = #tpu.dot_dimension_numbers<[1], [0], [0], [1], [0, 0, 1, 1], [], []>} : vector<1x8xf32>, vector<8x32xf32>, vector<1x32xf32> -> vector<1x32xf32>
    %c0_93 = arith.constant 0 : index
    %c0_94 = arith.constant 0 : index
    %204 = vector.load %arg6[%c0_93, %c0_94] : memref<1x32xf32, #tpu.memory_space<vmem>>, vector<1x32xf32>
    %205 = arith.addf %203, %204 : vector<1x32xf32>
    %cst_95 = arith.constant 0.000000e+00 : f32
    %206 = vector.broadcast %cst_95 : f32 to vector<1x32xf32>
    %207 = arith.maximumf %205, %206 : vector<1x32xf32>
    %c0_96 = arith.constant 0 : index
    %c0_97 = arith.constant 0 : index
    %208 = vector.load %arg8[%c0_96, %c0_97] : memref<32x16xf32, #tpu.memory_space<vmem>>, vector<32x16xf32>
    %cst_98 = arith.constant dense<0.000000e+00> : vector<1x16xf32>
    %209 = tpu.matmul %207, %208, %cst_98 {dimension_numbers = #tpu.dot_dimension_numbers<[1], [0], [0], [1], [0, 0, 1, 1], [], []>} : vector<1x32xf32>, vector<32x16xf32>, vector<1x16xf32> -> vector<1x16xf32>
    %210 = vector.broadcast %209 : vector<1x16xf32> to vector<256x16xf32>
    %211 = arith.addf %197, %210 : vector<256x16xf32>
    %212 = vector.shape_cast %211 : vector<256x16xf32> to vector<1x256x16xf32>
    %c0_99 = arith.constant 0 : index
    %c0_100 = arith.constant 0 : index
    %c0_101 = arith.constant 0 : index
    %213 = vector.load %arg9[%c0_99, %c0_100, %c0_101] : memref<1x256x16xf32, #tpu.memory_space<vmem>>, vector<1x256x16xf32>
    tpu.vector_store %arg9[%c0_99, %c0_100, %c0_101], %212 {strides = array<i32>} : memref<1x256x16xf32, #tpu.memory_space<vmem>>, vector<1x256x16xf32>,
    %cst_102 = arith.constant dense<0.000000e+00> : vector<16xf32>
    %214 = vector.multi_reduction <add>, %211, %cst_102 [0] : vector<256x16xf32> to vector<16xf32>
    %215 = vector.shape_cast %214 : vector<16xf32> to vector<1x16xf32>
    %216 = vector.shape_cast %215 : vector<1x16xf32> to vector<1x1x16xf32>
    %c0_103 = arith.constant 0 : index
    %c0_104 = arith.constant 0 : index
    %c0_105 = arith.constant 0 : index
    %217 = vector.load %arg10[%c0_103, %c0_104, %c0_105] : memref<1x1x16xf32, #tpu.memory_space<vmem>>, vector<1x1x16xf32>
    tpu.vector_store %arg10[%c0_103, %c0_104, %c0_105], %216 {strides = array<i32>} : memref<1x1x16xf32, #tpu.memory_space<vmem>>, vector<1x1x16xf32>,
    %218 = arith.mulf %211, %211 : vector<256x16xf32>
    %cst_106 = arith.constant dense<0.000000e+00> : vector<16xf32>
    %219 = vector.multi_reduction <add>, %218, %cst_106 [0] : vector<256x16xf32> to vector<16xf32>
    %220 = vector.shape_cast %219 : vector<16xf32> to vector<1x16xf32>
    %221 = vector.shape_cast %220 : vector<1x16xf32> to vector<1x1x16xf32>
    %c0_107 = arith.constant 0 : index
    %c0_108 = arith.constant 0 : index
    %c0_109 = arith.constant 0 : index
    %222 = vector.load %arg11[%c0_107, %c0_108, %c0_109] : memref<1x1x16xf32, #tpu.memory_space<vmem>>, vector<1x1x16xf32>
    tpu.vector_store %arg11[%c0_107, %c0_108, %c0_109], %221 {strides = array<i32>} : memref<1x1x16xf32, #tpu.memory_space<vmem>>, vector<1x1x16xf32>,
    return
  }
  func.func @transform_0(%arg0: i32) -> (i32, i32, i32, i32) {
    %c0_i32 = arith.constant 0 : i32
    %c0_i32_0 = arith.constant 0 : i32
    %c0_i32_1 = arith.constant 0 : i32
    %c0_i32_2 = arith.constant 0 : i32
    return %arg0, %c0_i32, %c0_i32_0, %c0_i32_1 : i32, i32, i32, i32
  }
  func.func @transform_1(%arg0: i32) -> (i32, i32) {
    %c0_i32 = arith.constant 0 : i32
    %c0_i32_0 = arith.constant 0 : i32
    %c0_i32_1 = arith.constant 0 : i32
    return %c0_i32, %c0_i32_0 : i32, i32
  }
  func.func @transform_2(%arg0: i32) -> (i32, i32) {
    %c0_i32 = arith.constant 0 : i32
    %c0_i32_0 = arith.constant 0 : i32
    %c0_i32_1 = arith.constant 0 : i32
    return %c0_i32, %c0_i32_0 : i32, i32
  }
  func.func @transform_3(%arg0: i32) -> (i32, i32) {
    %c0_i32 = arith.constant 0 : i32
    %c0_i32_0 = arith.constant 0 : i32
    %c0_i32_1 = arith.constant 0 : i32
    return %c0_i32, %c0_i32_0 : i32, i32
  }
  func.func @transform_4(%arg0: i32) -> (i32, i32) {
    %c0_i32 = arith.constant 0 : i32
    %c0_i32_0 = arith.constant 0 : i32
    %c0_i32_1 = arith.constant 0 : i32
    return %c0_i32, %c0_i32_0 : i32, i32
  }
  func.func @transform_5(%arg0: i32) -> (i32, i32) {
    %c0_i32 = arith.constant 0 : i32
    %c0_i32_0 = arith.constant 0 : i32
    %c0_i32_1 = arith.constant 0 : i32
    return %c0_i32, %c0_i32_0 : i32, i32
  }
  func.func @transform_6(%arg0: i32) -> (i32, i32) {
    %c0_i32 = arith.constant 0 : i32
    %c0_i32_0 = arith.constant 0 : i32
    %c0_i32_1 = arith.constant 0 : i32
    return %c0_i32, %c0_i32_0 : i32, i32
  }
  func.func @transform_7(%arg0: i32) -> (i32, i32) {
    %c0_i32 = arith.constant 0 : i32
    %c0_i32_0 = arith.constant 0 : i32
    %c0_i32_1 = arith.constant 0 : i32
    return %c0_i32, %c0_i32_0 : i32, i32
  }
  func.func @transform_8(%arg0: i32) -> (i32, i32, i32) {
    %c0_i32 = arith.constant 0 : i32
    %c0_i32_0 = arith.constant 0 : i32
    %c0_i32_1 = arith.constant 0 : i32
    return %arg0, %c0_i32, %c0_i32_0 : i32, i32, i32
  }
  func.func @transform_9(%arg0: i32) -> (i32, i32, i32) {
    %c0_i32 = arith.constant 0 : i32
    %c0_i32_0 = arith.constant 0 : i32
    %c0_i32_1 = arith.constant 0 : i32
    return %arg0, %c0_i32, %c0_i32_0 : i32, i32, i32
  }
  func.func @transform_10(%arg0: i32) -> (i32, i32, i32) {
    %c0_i32 = arith.constant 0 : i32
    %c0_i32_0 = arith.constant 0 : i32
    %c0_i32_1 = arith.constant 0 : i32
    return %arg0, %c0_i32, %c0_i32_0 : i32, i32, i32
  }
}

module attributes {stable_mosaic.version = 11 : i64} {
  func.func @_bn_relu_kernel(%arg0: i32, %arg1: memref<1x16x256xf32, #tpu.memory_space<vmem>>, %arg2: memref<1x256xf32, #tpu.memory_space<vmem>>, %arg3: memref<1x256xf32, #tpu.memory_space<vmem>>, %arg4: memref<1x16x256xf32, #tpu.memory_space<vmem>>) attributes {dimension_semantics = [#tpu.dimension_semantics<parallel>], iteration_bounds = array<i64: 2>, scalar_prefetch = 0 : i64, scratch_operands = 0 : i64, tpu.core_type = #tpu.core_type<tc>, window_params = [{transform_indices = @transform_0, window_bounds = array<i64: 1, 16, 256>}, {pipeline_mode = #tpu.pipeline_mode<synchronous>, transform_indices = @transform_1, window_bounds = array<i64: 1, 256>}, {pipeline_mode = #tpu.pipeline_mode<synchronous>, transform_indices = @transform_2, window_bounds = array<i64: 1, 256>}, {transform_indices = @transform_3, window_bounds = array<i64: 1, 16, 256>}]} {
    %c0 = arith.constant 0 : index
    %c0_0 = arith.constant 0 : index
    %c0_1 = arith.constant 0 : index
    %0 = vector.load %arg1[%c0, %c0_0, %c0_1] : memref<1x16x256xf32, #tpu.memory_space<vmem>>, vector<1x16x256xf32>
    %c0_2 = arith.constant 0 : index
    %c0_3 = arith.constant 0 : index
    %1 = vector.load %arg2[%c0_2, %c0_3] : memref<1x256xf32, #tpu.memory_space<vmem>>, vector<1x256xf32>
    %2 = vector.shape_cast %1 : vector<1x256xf32> to vector<1x1x256xf32>
    %3 = vector.broadcast %2 : vector<1x1x256xf32> to vector<1x16x256xf32>
    %4 = arith.mulf %0, %3 : vector<1x16x256xf32>
    %c0_4 = arith.constant 0 : index
    %c0_5 = arith.constant 0 : index
    %5 = vector.load %arg3[%c0_4, %c0_5] : memref<1x256xf32, #tpu.memory_space<vmem>>, vector<1x256xf32>
    %6 = vector.shape_cast %5 : vector<1x256xf32> to vector<1x1x256xf32>
    %7 = vector.broadcast %6 : vector<1x1x256xf32> to vector<1x16x256xf32>
    %8 = arith.addf %4, %7 : vector<1x16x256xf32>
    %cst = arith.constant 0.000000e+00 : f32
    %9 = vector.broadcast %cst : f32 to vector<1x16x256xf32>
    %10 = arith.maximumf %8, %9 : vector<1x16x256xf32>
    %c0_6 = arith.constant 0 : index
    %c0_7 = arith.constant 0 : index
    %c0_8 = arith.constant 0 : index
    %11 = vector.load %arg4[%c0_6, %c0_7, %c0_8] : memref<1x16x256xf32, #tpu.memory_space<vmem>>, vector<1x16x256xf32>
    tpu.vector_store %arg4[%c0_6, %c0_7, %c0_8], %10 {strides = array<i32>} : memref<1x16x256xf32, #tpu.memory_space<vmem>>, vector<1x16x256xf32>,
    return
  }
  func.func @transform_0(%arg0: i32) -> (i32, i32, i32) {
    %c0_i32 = arith.constant 0 : i32
    %c0_i32_0 = arith.constant 0 : i32
    %c0_i32_1 = arith.constant 0 : i32
    return %arg0, %c0_i32, %c0_i32_0 : i32, i32, i32
  }
  func.func @transform_1(%arg0: i32) -> (i32, i32) {
    %c0_i32 = arith.constant 0 : i32
    %c0_i32_0 = arith.constant 0 : i32
    %c0_i32_1 = arith.constant 0 : i32
    return %c0_i32, %c0_i32_0 : i32, i32
  }
  func.func @transform_2(%arg0: i32) -> (i32, i32) {
    %c0_i32 = arith.constant 0 : i32
    %c0_i32_0 = arith.constant 0 : i32
    %c0_i32_1 = arith.constant 0 : i32
    return %c0_i32, %c0_i32_0 : i32, i32
  }
  func.func @transform_3(%arg0: i32) -> (i32, i32, i32) {
    %c0_i32 = arith.constant 0 : i32
    %c0_i32_0 = arith.constant 0 : i32
    %c0_i32_1 = arith.constant 0 : i32
    return %arg0, %c0_i32, %c0_i32_0 : i32, i32, i32
  }
}

</mosaic_0001>

<llo_original>
// kernel: tile.13
$region0: #{tile.13}
  #allocation0 [shape = 's32[1]{0}', space=sflag, size = 0x4, scoped, tag = 'scoped memory for tile.13']
  %s0 = inlined_call_operand.vmem [shape: f32[16], index: 0, kind: input, shape index: {}]
  %s1 = inlined_call_operand.vmem [shape: f32[16,16], index: 1, kind: output, shape index: {}]
  // Predicated region
  $region2: #{tile.13} parent=0 // pred_check
    _
  $region3: #{tile.13} parent=0 // pred_check_branch
    %3 = sbr.rel (0) target = $region5
  $region4: #{tile.13} parent=0 // pred_region
    _
  $region5: #{tile.13} parent=0 // pred_fallthru
    _
  %v4 = vld [vmem:[%s0] ss:$0 sm:$0xff]
  %5 = vst [vmem:[%s1] sm:$0xff] %v4
  %s6 = scalar_lea.vmem %s1, 8
  %7 = vst [vmem:[%s6] sm:$0xff] %v4

// kernel: tile.14
$region0: #{tile.14}
  %s0 = inlined_call_operand.vmem [shape: f32[16,16], index: 0, kind: input, shape index: {}]
  %s1 = inlined_call_operand.vmem [shape: f32[1,256], index: 1, kind: output, shape index: {}]
  $region1: #{tile.14} parent=0
    #allocation0 [shape = 'u8[8192]{0}', space=vmem, size = 0x2000, scoped, tag = 'scoped mem for output reshape']
    %s2 = smov 3
    %v3 = vld [vmem:[%s0] ss:$8 sm:%s2]
    %vm4 = vcmask 130048
    %5 = vst.msk [vmem:[#allocation0] ss:$8 sm:$0x3] %vm4, %v3
    %s6 = scalar_lea.vmem %s0, 7
    %s7 = smov 3
    %v8 = vld [vmem:[%s6] ss:$8 sm:%s7]
    %9 = vrot.lane.b32.xlu0 %v8, 112
    %v10 = vpop.permute.xlu0 %9
    %vm11 = vcmask 1048448
    %12 = vst.msk [vmem:[#allocation0] ss:$8 sm:$0x3] %vm11, %v10
    %s13 = scalar_lea.vmem %s0, 6
    %s14 = smov 3
    %v15 = vld [vmem:[%s13] ss:$8 sm:%s14]
    %16 = vrot.lane.b32.xlu0 %v15, 96
    %v17 = vpop.permute.xlu0 %16
    %vm18 = vcmask 917248
    %19 = vst.msk [vmem:[#allocation0] ss:$8 sm:$0x3] %vm18, %v17
    %s20 = scalar_lea.vmem %s0, 5
    %s21 = smov 3
    %v22 = vld [vmem:[%s20] ss:$8 sm:%s21]
    %23 = vrot.lane.b32.xlu0 %v22, 80
    %v24 = vpop.permute.xlu0 %23
    %vm25 = vcmask 786048
    %26 = vst.msk [vmem:[#allocation0] ss:$8 sm:$0x3] %vm25, %v24
    %s27 = scalar_lea.vmem %s0, 4
    %s28 = smov 3
    %v29 = vld [vmem:[%s27] ss:$8 sm:%s28]
    %30 = vrot.lane.b32.xlu0 %v29, 64
    %v31 = vpop.permute.xlu0 %30
    %vm32 = vcmask 654848
    %33 = vst.msk [vmem:[#allocation0] ss:$8 sm:$0x3] %vm32, %v31
    %s34 = scalar_lea.vmem %s0, 3
    %s35 = smov 3
    %v36 = vld [vmem:[%s34] ss:$8 sm:%s35]
    %37 = vrot.lane.b32.xlu0 %v36, 48
    %v38 = vpop.permute.xlu0 %37
    %vm39 = vcmask 523648
    %40 = vst.msk [vmem:[#allocation0] ss:$8 sm:$0x3] %vm39, %v38
    %s41 = scalar_lea.vmem %s0, 2
    %s42 = smov 3
    %v43 = vld [vmem:[%s41] ss:$8 sm:%s42]
    %44 = vrot.lane.b32.xlu0 %v43, 32
    %v45 = vpop.permute.xlu0 %44
    %vm46 = vcmask 392448
    %47 = vst.msk [vmem:[#allocation0] ss:$8 sm:$0x3] %vm46, %v45
    %s48 = scalar_lea.vmem %s0, 1
    %s49 = smov 3
    %v50 = vld [vmem:[%s48] ss:$8 sm:%s49]
    %51 = vrot.lane.b32.xlu0 %v50, 16
    %v52 = vpop.permute.xlu0 %51
    %vm53 = vcmask 261248
    %54 = vst.msk [vmem:[#allocation0] ss:$8 sm:$0x3] %vm53, %v52
    %s56 = sshllo.u32 0, 1
    %v58 = vld [vmem:[#allocation0] sm:%s56]
    %s59 = sshllo.u32 0, 1
    %60 = vst [vmem:[%s1] sm:%s59] %v58
    %s61 = scalar_lea.vmem [#allocation0], 8
    %v62 = vld [vmem:[%s61] sm:%s56]
    %s63 = sshllo.u32 0, 1
    %s64 = scalar_lea.vmem %s1, 1
    %65 = vst [vmem:[%s64] sm:%s63] %v62

// kernel: _lambda_.3
$region0: #{_lambda_.3}
  #allocation0 [shape = 'u32[]', space=smem, size = 0x4, offset = 0x4, fixed_abs, tag = 'smem constant byte address 0x4 - core index']
  #allocation1 [shape = 'u32[144,128]{1,0:T(1,128)}', space=vmem, size = 0x12000, scoped, tag = 'internal scratch']
  %s0 = inlined_call_operand.vmem [shape: f32[2,16,256], index: 0, kind: input, shape index: {}]
  %s1 = inlined_call_operand.vmem [shape: f32[1,256], index: 1, kind: input, shape index: {}]
  %s2 = inlined_call_operand.vmem [shape: f32[1,256], index: 2, kind: input, shape index: {}]
  %s3 = inlined_call_operand.vmem [shape: f32[2,16,256], index: 3, kind: output, shape index: {}]
  %s4 = sld [smem:[#allocation0]]
  $region45: #{_lambda_.3} parent=0
    _
  %s6 = ssub.s32 1, %s4
  %s7 = scalar_select 0, %s6, %s4
  loop: start=0, step=1, limit=4
  $region2: #{_lambda_.3} parent=0 // loop_pre_header
    _
  $region3: #{_lambda_.3} parent=0 // loop_header
    %s9 = sphi 0, %s13
    %p10 = scmp.ge.s32.totalorder %s9, 4
    %s19 = sphi 0, %s21
    %s22 = sphi 0, %s19
    %s23 = sphi 0, %s22
    %s39 = sphi 0, %s23
    %s43 = sphi 0, %s43
    %s45 = sphi 0, %s43
    %s46 = sphi 0, %s45
    %s60 = sphi 0, %s46
    %s64 = sphi 0, %s64
    %s66 = sphi 0, %s64
    %s67 = sphi 0, %s66
    %s81 = sphi 0, %s67
    %s87 = sphi 0, %s89
    %s90 = sphi 0, %s87
    %s91 = sphi 0, %s90
    %s107 = sphi 0, %s91
  $region4: #{_lambda_.3} parent=0 // loop_header_branch
    %12 = sbr.rel (%p10) target = $region8
  $region5: #{_lambda_.3} parent=0 // loop_body
    %s14 = ssub.s32 %s9, 1
    %s15 = ssub.s32 %s9, 2
    %s16 = sadd.s32 %s9, 1
    %s17 = ssub.s32 %s9, %s16
    %p18 = scmp.eq.s32.totalorder %s17, 0
    %s20 = sadd.s32 %s19, 1
    %s21 = scalar_select %p18, %s19, %s20
    %p24 = pneg %p18
    %p25 = scmp.eq.s32.totalorder %s9, 1
    %p26 = por %p24, %p25
    %p27 = scmp.ne.s32.totalorder %s19, %s22
    %p28 = scmp.eq.s32.totalorder %s9, 0
    %p29 = por %p27, %p28
    %p30 = scmp.ne.s32.totalorder %s19, %s22
    %p31 = scmp.eq.s32.totalorder %s14, 1
    %p32 = por %p30, %p31
    %p33 = scmp.ne.s32.totalorder %s22, %s23
    %p34 = scmp.eq.s32.totalorder %s14, 0
    %p35 = por %p33, %p34
    %p36 = scmp.ne.s32.totalorder %s22, %s23
    %p37 = scmp.eq.s32.totalorder %s15, 1
    %p38 = por %p36, %p37
    %p40 = scmp.ne.s32.totalorder %s23, %s39
    %p41 = scmp.eq.s32.totalorder %s15, 0
    %p42 = por %p40, %p41
    %s44 = sadd.s32 %s43, 1
    %p47 = scmp.eq.s32.totalorder %s9, 1
    %p48 = scmp.ne.s32.totalorder %s43, %s45
    %p49 = scmp.eq.s32.totalorder %s9, 0
    %p50 = por %p48, %p49
    %p51 = scmp.ne.s32.totalorder %s43, %s45
    %p52 = scmp.eq.s32.totalorder %s14, 1
    %p53 = por %p51, %p52
    %p54 = scmp.ne.s32.totalorder %s45, %s46
    %p55 = scmp.eq.s32.totalorder %s14, 0
    %p56 = por %p54, %p55
    %p57 = scmp.ne.s32.totalorder %s45, %s46
    %p58 = scmp.eq.s32.totalorder %s15, 1
    %p59 = por %p57, %p58
    %p61 = scmp.ne.s32.totalorder %s46, %s60
    %p62 = scmp.eq.s32.totalorder %s15, 0
    %p63 = por %p61, %p62
    %s65 = sadd.s32 %s64, 1
    %p68 = scmp.eq.s32.totalorder %s9, 1
    %p69 = scmp.ne.s32.totalorder %s64, %s66
    %p70 = scmp.eq.s32.totalorder %s9, 0
    %p71 = por %p69, %p70
    %p72 = scmp.ne.s32.totalorder %s64, %s66
    %p73 = scmp.eq.s32.totalorder %s14, 1
    %p74 = por %p72, %p73
    %p75 = scmp.ne.s32.totalorder %s66, %s67
    %p76 = scmp.eq.s32.totalorder %s14, 0
    %p77 = por %p75, %p76
    %p78 = scmp.ne.s32.totalorder %s66, %s67
    %p79 = scmp.eq.s32.totalorder %s15, 1
    %p80 = por %p78, %p79
    %p82 = scmp.ne.s32.totalorder %s67, %s81
    %p83 = scmp.eq.s32.totalorder %s15, 0
    %p84 = por %p82, %p83
    %s85 = ssub.s32 %s9, %s16
    %p86 = scmp.eq.s32.totalorder %s85, 0
    %s88 = sadd.s32 %s87, 1
    %s89 = scalar_select %p86, %s87, %s88
    %p92 = pneg %p86
    %p93 = scmp.eq.s32.totalorder %s9, 1
    %p94 = por %p92, %p93
    %p95 = scmp.ne.s32.totalorder %s87, %s90
    %p96 = scmp.eq.s32.totalorder %s9, 0
    %p97 = por %p95, %p96
    %p98 = scmp.ne.s32.totalorder %s87, %s90
    %p99 = scmp.eq.s32.totalorder %s14, 1
    %p100 = por %p98, %p99
    %p101 = scmp.ne.s32.totalorder %s90, %s91
    %p102 = scmp.eq.s32.totalorder %s14, 0
    %p103 = por %p101, %p102
    %p104 = scmp.ne.s32.totalorder %s90, %s91
    %p105 = scmp.eq.s32.totalorder %s15, 1
    %p106 = por %p104, %p105
    %p108 = scmp.ne.s32.totalorder %s91, %s107
    %p109 = scmp.eq.s32.totalorder %s15, 0
    %p110 = por %p108, %p109
    %p111 = scmp.le.s32.totalorder 1, %s9
    %p112 = scmp.lt.s32.totalorder %s9, 3
    %p113 = pnand %p111, %p112
    %p114 = pneg %p113
    // Predicated region
    $region9: #{_lambda_.3} parent=5 // pred_check
      _
    $region10: #{_lambda_.3} parent=5 // pred_check_branch
      %116 = sbr.rel (%p113) target = $region12
    $region11: #{_lambda_.3} parent=5 // pred_region
      %s117 = ssub.s32 %s9, 1
      // Predicated region
      $region13: #{_lambda_.3} parent=11 // pred_check
        %p118 = pneg %p56
      $region14: #{_lambda_.3} parent=11 // pred_check_branch
        %120 = sbr.rel (%p118) target = $region16
      $region15: #{_lambda_.3} parent=11 // pred_region
        _
      $region16: #{_lambda_.3} parent=11 // pred_fallthru
        _
      // Predicated region
      $region17: #{_lambda_.3} parent=11 // pred_check
        %p121 = pneg %p77
      $region18: #{_lambda_.3} parent=11 // pred_check_branch
        %123 = sbr.rel (%p121) target = $region20
      $region19: #{_lambda_.3} parent=11 // pred_region
        _
      $region20: #{_lambda_.3} parent=11 // pred_fallthru
        _
    $region12: #{_lambda_.3} parent=5 // pred_fallthru
      _
    %p124 = scmp.lt.s32.totalorder %s9, 2
    // Predicated region
    $region21: #{_lambda_.3} parent=5 // pred_check
      %p125 = pneg %p124
    $region22: #{_lambda_.3} parent=5 // pred_check_branch
      %127 = sbr.rel (%p125) target = $region24
    $region23: #{_lambda_.3} parent=5 // pred_region
      // Predicated region
      $region25: #{_lambda_.3} parent=23 // pred_check
        %p128 = pneg %p29
      $region26: #{_lambda_.3} parent=23 // pred_check_branch
        %130 = sbr.rel (%p128) target = $region28
      $region27: #{_lambda_.3} parent=23 // pred_region
        %p131 = scmp.lt.s32.totalorder %s9, 1
        %s132 = scalar_select %p131, %s9, 1
        %s133 = smul.addr %s132, 4
        %s134 = smul.addr %s133, 8
        %s135 = scalar_lea.vmem %s0, %s134
      $region28: #{_lambda_.3} parent=23 // pred_fallthru
        _
    $region24: #{_lambda_.3} parent=5 // pred_fallthru
      _
    %p136 = scmp.le.s32.totalorder 1, %s9
    %p137 = scmp.lt.s32.totalorder %s9, 3
    %p138 = pnand %p136, %p137
    %p139 = pneg %p138
    // Predicated region
    $region29: #{_lambda_.3} parent=5 // pred_check
      _
    $region30: #{_lambda_.3} parent=5 // pred_check_branch
      %141 = sbr.rel (%p138) target = $region32
    $region31: #{_lambda_.3} parent=5 // pred_region
      %s142 = ssub.s32 %s9, 1
      %p143 = scmp.lt.s32.totalorder %s14, 1
      %s144 = scalar_select %p143, %s14, 1
      %s145 = smul.addr %s144, 4
      %s146 = smul.addr %s145, 8
      %s147 = scalar_lea.vmem %s0, %s146
      %p148 = pneg %p35
      %p149 = pneg %p32
      %p150 = pneg %p56
      %p151 = pneg %p53
      %p152 = pneg %p77
      %p153 = pneg %p74
      %p154 = pneg %p103
      %p155 = pneg %p100
      %p156 = scmp.lt.s32.totalorder %s14, 1
      %s157 = scalar_select %p156, %s14, 1
      %s158 = smul.addr %s157, 4
      %s159 = smul.addr %s158, 8
      %s160 = scalar_lea.vmem %s3, %s159
      %p161 = scmp.lt.s32.totalorder %s14, 1
      %s162 = scalar_select %p161, %s14, 1
      %s163 = smul.addr %s162, 4
      %s164 = smul.addr %s163, 8
      %s165 = scalar_lea.vmem %s0, %s164
      %p166 = scmp.lt.s32.totalorder %s14, 1
      %s167 = scalar_select %p166, %s14, 1
      %s168 = smul.addr %s167, 4
      %s169 = smul.addr %s168, 8
      %s170 = scalar_lea.vmem %s3, %s169
      %v171 = vld [vmem:[%s165] sm:$0xff]
      %v172 = vld [vmem:[%s165 + $0x8] sm:$0xff]
      %v173 = vld [vmem:[%s165 + $0x10] sm:$0xff]
      %v174 = vld [vmem:[%s165 + $0x18] sm:$0xff]
      %v175 = vld [vmem:[%s1] sm:$0x3]
      %v177 = vlaneseq
      %v178 = vshrl.u32 %v177, 7
      %v179 = vsub.s32 0, %v178
      %v180 = vrot.slane %v175, %v179
      %v181 = vlaneseq
      %v182 = vshrl.u32 %v181, 7
      %v183 = vsub.s32 1, %v182
      %v184 = vrot.slane %v175, %v183
      %v187 = vmul.f32 %v171, %v180
      %v188 = vmul.f32 %v172, %v184
      %v189 = vmul.f32 %v173, %v180
      %v190 = vmul.f32 %v174, %v184
      %v191 = vld [vmem:[%s2] sm:$0x3]
      %v193 = vlaneseq
      %v194 = vshrl.u32 %v193, 7
      %v195 = vsub.s32 0, %v194
      %v196 = vrot.slane %v191, %v195
      %v197 = vlaneseq
      %v198 = vshrl.u32 %v197, 7
      %v199 = vsub.s32 1, %v198
      %v200 = vrot.slane %v191, %v199
      %v203 = vadd.f32 %v187, %v196
      %v204 = vadd.f32 %v188, %v200
      %v205 = vadd.f32 %v189, %v196
      %v206 = vadd.f32 %v190, %v200
      %v207 = vmax.f32 %v203, 0.0
      %v208 = vmax.f32 %v204, 0.0
      %v209 = vmax.f32 %v205, 0.0
      %v210 = vmax.f32 %v206, 0.0
      %211 = vst [vmem:[%s170] sm:$0xff] %v207
      %212 = vst [vmem:[%s170 + $0x8] sm:$0xff] %v208
      %213 = vst [vmem:[%s170 + $0x10] sm:$0xff] %v209
      %214 = vst [vmem:[%s170 + $0x18] sm:$0xff] %v210
      %p215 = scmp.lt.s32.totalorder %s14, 1
      %s216 = scalar_select %p215, %s14, 1
      %s217 = smul.addr %s216, 4
      %s218 = smul.addr %s217, 8
      %s219 = scalar_lea.vmem %s3, %s218
      // Predicated region
      $region33: #{_lambda_.3} parent=31 // pred_check
        %p220 = pneg %p100
      $region34: #{_lambda_.3} parent=31 // pred_check_branch
        %222 = sbr.rel (%p220) target = $region36
      $region35: #{_lambda_.3} parent=31 // pred_region
        _
      $region36: #{_lambda_.3} parent=31 // pred_fallthru
        _
    $region32: #{_lambda_.3} parent=5 // pred_fallthru
      _
    %p223 = scmp.le.s32.totalorder 2, %s9
    // Predicated region
    $region37: #{_lambda_.3} parent=5 // pred_check
      %p224 = pneg %p223
    $region38: #{_lambda_.3} parent=5 // pred_check_branch
      %226 = sbr.rel (%p224) target = $region40
    $region39: #{_lambda_.3} parent=5 // pred_region
      %s227 = ssub.s32 %s9, 2
      // Predicated region
      $region41: #{_lambda_.3} parent=39 // pred_check
        %p228 = pneg %p106
      $region42: #{_lambda_.3} parent=39 // pred_check_branch
        %230 = sbr.rel (%p228) target = $region44
      $region43: #{_lambda_.3} parent=39 // pred_region
        %p231 = scmp.lt.s32.totalorder %s15, 1
        %s232 = scalar_select %p231, %s15, 1
        %s233 = smul.addr %s232, 4
        %s234 = smul.addr %s233, 8
        %s235 = scalar_lea.vmem %s3, %s234
      $region44: #{_lambda_.3} parent=39 // pred_fallthru
        _
    $region40: #{_lambda_.3} parent=5 // pred_fallthru
      _
  $region6: #{_lambda_.3} parent=0 // loop_footer
    %s13 = sadd.s32 1, %s9
  $region7: #{_lambda_.3} parent=0 // loop_footer_branch
    %8 = sbr.rel target = $region3
  $region8: #{_lambda_.3} parent=0 // loop_exit
    _

// kernel: _lambda_.2
$region0: #{_lambda_.2}
  #allocation0 [shape = 'u32[]', space=smem, size = 0x4, offset = 0x4, fixed_abs, tag = 'smem constant byte address 0x4 - core index']
  #allocation1 [shape = 'u32[144,128]{1,0:T(1,128)}', space=vmem, size = 0x12000, scoped, tag = 'internal scratch']
  #allocation2 [shape = 'f32[24,24,8]{2,1,0:T(8,128)}', space=vmem, size = 0x48000, scoped, tag = 'scratch operand']
  %s0 = inlined_call_operand.vmem [shape: f32[2,16,16,8], index: 0, kind: input, shape index: {}]
  %s1 = inlined_call_operand.vmem [shape: f32[27,8], index: 1, kind: input, shape index: {}]
  %s2 = inlined_call_operand.vmem [shape: f32[32,128], index: 2, kind: input, shape index: {}]
  %s3 = inlined_call_operand.vmem [shape: f32[256,128], index: 3, kind: input, shape index: {}]
  %s4 = inlined_call_operand.vmem [shape: f32[8,32], index: 4, kind: input, shape index: {}]
  %s5 = inlined_call_operand.vmem [shape: f32[1,32], index: 5, kind: input, shape index: {}]
  %s6 = inlined_call_operand.vmem [shape: f32[128,16], index: 6, kind: input, shape index: {}]
  %s7 = inlined_call_operand.vmem [shape: f32[32,16], index: 7, kind: input, shape index: {}]
  %s8 = inlined_call_operand.vmem [shape: f32[2,256,16], index: 8, kind: output, shape index: {0}]
  %s9 = inlined_call_operand.vmem [shape: f32[2,1,16], index: 9, kind: output, shape index: {1}]
  %s10 = inlined_call_operand.vmem [shape: f32[2,1,16], index: 10, kind: output, shape index: {2}]
  %11 = xla_tuple %s8, %s9, %s10
  %s12 = sld [smem:[#allocation0]]
  $region81: #{_lambda_.2} parent=0
    _
  %s14 = ssub.s32 1, %s12
  %s15 = scalar_select 0, %s14, %s12
  loop: start=0, step=1, limit=4
  $region2: #{_lambda_.2} parent=0 // loop_pre_header
    _
  $region3: #{_lambda_.2} parent=0 // loop_header
    %s17 = sphi 0, %s21
    %p18 = scmp.ge.s32.totalorder %s17, 4
    %s27 = sphi 0, %s29
    %s30 = sphi 0, %s27
    %s31 = sphi 0, %s30
    %s47 = sphi 0, %s31
    %s51 = sphi 0, %s51
    %s53 = sphi 0, %s51
    %s54 = sphi 0, %s53
    %s68 = sphi 0, %s54
    %s72 = sphi 0, %s72
    %s74 = sphi 0, %s72
    %s75 = sphi 0, %s74
    %s89 = sphi 0, %s75
    %s93 = sphi 0, %s93
    %s95 = sphi 0, %s93
    %s96 = sphi 0, %s95
    %s110 = sphi 0, %s96
    %s114 = sphi 0, %s114
    %s116 = sphi 0, %s114
    %s117 = sphi 0, %s116
    %s131 = sphi 0, %s117
    %s135 = sphi 0, %s135
    %s137 = sphi 0, %s135
    %s138 = sphi 0, %s137
    %s152 = sphi 0, %s138
    %s156 = sphi 0, %s156
    %s158 = sphi 0, %s156
    %s159 = sphi 0, %s158
    %s173 = sphi 0, %s159
    %s177 = sphi 0, %s177
    %s179 = sphi 0, %s177
    %s180 = sphi 0, %s179
    %s194 = sphi 0, %s180
    %s200 = sphi 0, %s202
    %s203 = sphi 0, %s200
    %s204 = sphi 0, %s203
    %s220 = sphi 0, %s204
    %s226 = sphi 0, %s228
    %s229 = sphi 0, %s226
    %s230 = sphi 0, %s229
    %s246 = sphi 0, %s230
    %s252 = sphi 0, %s254
    %s255 = sphi 0, %s252
    %s256 = sphi 0, %s255
    %s272 = sphi 0, %s256
  $region4: #{_lambda_.2} parent=0 // loop_header_branch
    %20 = sbr.rel (%p18) target = $region8
  $region5: #{_lambda_.2} parent=0 // loop_body
    %s22 = ssub.s32 %s17, 1
    %s23 = ssub.s32 %s17, 2
    %s24 = sadd.s32 %s17, 1
    %s25 = ssub.s32 %s17, %s24
    %p26 = scmp.eq.s32.totalorder %s25, 0
    %s28 = sadd.s32 %s27, 1
    %s29 = scalar_select %p26, %s27, %s28
    %p32 = pneg %p26
    %p33 = scmp.eq.s32.totalorder %s17, 1
    %p34 = por %p32, %p33
    %p35 = scmp.ne.s32.totalorder %s27, %s30
    %p36 = scmp.eq.s32.totalorder %s17, 0
    %p37 = por %p35, %p36
    %p38 = scmp.ne.s32.totalorder %s27, %s30
    %p39 = scmp.eq.s32.totalorder %s22, 1
    %p40 = por %p38, %p39
    %p41 = scmp.ne.s32.totalorder %s30, %s31
    %p42 = scmp.eq.s32.totalorder %s22, 0
    %p43 = por %p41, %p42
    %p44 = scmp.ne.s32.totalorder %s30, %s31
    %p45 = scmp.eq.s32.totalorder %s23, 1
    %p46 = por %p44, %p45
    %p48 = scmp.ne.s32.totalorder %s31, %s47
    %p49 = scmp.eq.s32.totalorder %s23, 0
    %p50 = por %p48, %p49
    %s52 = sadd.s32 %s51, 1
    %p55 = scmp.eq.s32.totalorder %s17, 1
    %p56 = scmp.ne.s32.totalorder %s51, %s53
    %p57 = scmp.eq.s32.totalorder %s17, 0
    %p58 = por %p56, %p57
    %p59 = scmp.ne.s32.totalorder %s51, %s53
    %p60 = scmp.eq.s32.totalorder %s22, 1
    %p61 = por %p59, %p60
    %p62 = scmp.ne.s32.totalorder %s53, %s54
    %p63 = scmp.eq.s32.totalorder %s22, 0
    %p64 = por %p62, %p63
    %p65 = scmp.ne.s32.totalorder %s53, %s54
    %p66 = scmp.eq.s32.totalorder %s23, 1
    %p67 = por %p65, %p66
    %p69 = scmp.ne.s32.totalorder %s54, %s68
    %p70 = scmp.eq.s32.totalorder %s23, 0
    %p71 = por %p69, %p70
    %s73 = sadd.s32 %s72, 1
    %p76 = scmp.eq.s32.totalorder %s17, 1
    %p77 = scmp.ne.s32.totalorder %s72, %s74
    %p78 = scmp.eq.s32.totalorder %s17, 0
    %p79 = por %p77, %p78
    %p80 = scmp.ne.s32.totalorder %s72, %s74
    %p81 = scmp.eq.s32.totalorder %s22, 1
    %p82 = por %p80, %p81
    %p83 = scmp.ne.s32.totalorder %s74, %s75
    %p84 = scmp.eq.s32.totalorder %s22, 0
    %p85 = por %p83, %p84
    %p86 = scmp.ne.s32.totalorder %s74, %s75
    %p87 = scmp.eq.s32.totalorder %s23, 1
    %p88 = por %p86, %p87
    %p90 = scmp.ne.s32.totalorder %s75, %s89
    %p91 = scmp.eq.s32.totalorder %s23, 0
    %p92 = por %p90, %p91
    %s94 = sadd.s32 %s93, 1
    %p97 = scmp.eq.s32.totalorder %s17, 1
    %p98 = scmp.ne.s32.totalorder %s93, %s95
    %p99 = scmp.eq.s32.totalorder %s17, 0
    %p100 = por %p98, %p99
    %p101 = scmp.ne.s32.totalorder %s93, %s95
    %p102 = scmp.eq.s32.totalorder %s22, 1
    %p103 = por %p101, %p102
    %p104 = scmp.ne.s32.totalorder %s95, %s96
    %p105 = scmp.eq.s32.totalorder %s22, 0
    %p106 = por %p104, %p105
    %p107 = scmp.ne.s32.totalorder %s95, %s96
    %p108 = scmp.eq.s32.totalorder %s23, 1
    %p109 = por %p107, %p108
    %p111 = scmp.ne.s32.totalorder %s96, %s110
    %p112 = scmp.eq.s32.totalorder %s23, 0
    %p113 = por %p111, %p112
    %s115 = sadd.s32 %s114, 1
    %p118 = scmp.eq.s32.totalorder %s17, 1
    %p119 = scmp.ne.s32.totalorder %s114, %s116
    %p120 = scmp.eq.s32.totalorder %s17, 0
    %p121 = por %p119, %p120
    %p122 = scmp.ne.s32.totalorder %s114, %s116
    %p123 = scmp.eq.s32.totalorder %s22, 1
    %p124 = por %p122, %p123
    %p125 = scmp.ne.s32.totalorder %s116, %s117
    %p126 = scmp.eq.s32.totalorder %s22, 0
    %p127 = por %p125, %p126
    %p128 = scmp.ne.s32.totalorder %s116, %s117
    %p129 = scmp.eq.s32.totalorder %s23, 1
    %p130 = por %p128, %p129
    %p132 = scmp.ne.s32.totalorder %s117, %s131
    %p133 = scmp.eq.s32.totalorder %s23, 0
    %p134 = por %p132, %p133
    %s136 = sadd.s32 %s135, 1
    %p139 = scmp.eq.s32.totalorder %s17, 1
    %p140 = scmp.ne.s32.totalorder %s135, %s137
    %p141 = scmp.eq.s32.totalorder %s17, 0
    %p142 = por %p140, %p141
    %p143 = scmp.ne.s32.totalorder %s135, %s137
    %p144 = scmp.eq.s32.totalorder %s22, 1
    %p145 = por %p143, %p144
    %p146 = scmp.ne.s32.totalorder %s137, %s138
    %p147 = scmp.eq.s32.totalorder %s22, 0
    %p148 = por %p146, %p147
    %p149 = scmp.ne.s32.totalorder %s137, %s138
    %p150 = scmp.eq.s32.totalorder %s23, 1
    %p151 = por %p149, %p150
    %p153 = scmp.ne.s32.totalorder %s138, %s152
    %p154 = scmp.eq.s32.totalorder %s23, 0
    %p155 = por %p153, %p154
    %s157 = sadd.s32 %s156, 1
    %p160 = scmp.eq.s32.totalorder %s17, 1
    %p161 = scmp.ne.s32.totalorder %s156, %s158
    %p162 = scmp.eq.s32.totalorder %s17, 0
    %p163 = por %p161, %p162
    %p164 = scmp.ne.s32.totalorder %s156, %s158
    %p165 = scmp.eq.s32.totalorder %s22, 1
    %p166 = por %p164, %p165
    %p167 = scmp.ne.s32.totalorder %s158, %s159
    %p168 = scmp.eq.s32.totalorder %s22, 0
    %p169 = por %p167, %p168
    %p170 = scmp.ne.s32.totalorder %s158, %s159
    %p171 = scmp.eq.s32.totalorder %s23, 1
    %p172 = por %p170, %p171
    %p174 = scmp.ne.s32.totalorder %s159, %s173
    %p175 = scmp.eq.s32.totalorder %s23, 0
    %p176 = por %p174, %p175
    %s178 = sadd.s32 %s177, 1
    %p181 = scmp.eq.s32.totalorder %s17, 1
    %p182 = scmp.ne.s32.totalorder %s177, %s179
    %p183 = scmp.eq.s32.totalorder %s17, 0
    %p184 = por %p182, %p183
    %p185 = scmp.ne.s32.totalorder %s177, %s179
    %p186 = scmp.eq.s32.totalorder %s22, 1
    %p187 = por %p185, %p186
    %p188 = scmp.ne.s32.totalorder %s179, %s180
    %p189 = scmp.eq.s32.totalorder %s22, 0
    %p190 = por %p188, %p189
    %p191 = scmp.ne.s32.totalorder %s179, %s180
    %p192 = scmp.eq.s32.totalorder %s23, 1
    %p193 = por %p191, %p192
    %p195 = scmp.ne.s32.totalorder %s180, %s194
    %p196 = scmp.eq.s32.totalorder %s23, 0
    %p197 = por %p195, %p196
    %s198 = ssub.s32 %s17, %s24
    %p199 = scmp.eq.s32.totalorder %s198, 0
    %s201 = sadd.s32 %s200, 1
    %s202 = scalar_select %p199, %s200, %s201
    %p205 = pneg %p199
    %p206 = scmp.eq.s32.totalorder %s17, 1
    %p207 = por %p205, %p206
    %p208 = scmp.ne.s32.totalorder %s200, %s203
    %p209 = scmp.eq.s32.totalorder %s17, 0
    %p210 = por %p208, %p209
    %p211 = scmp.ne.s32.totalorder %s200, %s203
    %p212 = scmp.eq.s32.totalorder %s22, 1
    %p213 = por %p211, %p212
    %p214 = scmp.ne.s32.totalorder %s203, %s204
    %p215 = scmp.eq.s32.totalorder %s22, 0
    %p216 = por %p214, %p215
    %p217 = scmp.ne.s32.totalorder %s203, %s204
    %p218 = scmp.eq.s32.totalorder %s23, 1
    %p219 = por %p217, %p218
    %p221 = scmp.ne.s32.totalorder %s204, %s220
    %p222 = scmp.eq.s32.totalorder %s23, 0
    %p223 = por %p221, %p222
    %s224 = ssub.s32 %s17, %s24
    %p225 = scmp.eq.s32.totalorder %s224, 0
    %s227 = sadd.s32 %s226, 1
    %s228 = scalar_select %p225, %s226, %s227
    %p231 = pneg %p225
    %p232 = scmp.eq.s32.totalorder %s17, 1
    %p233 = por %p231, %p232
    %p234 = scmp.ne.s32.totalorder %s226, %s229
    %p235 = scmp.eq.s32.totalorder %s17, 0
    %p236 = por %p234, %p235
    %p237 = scmp.ne.s32.totalorder %s226, %s229
    %p238 = scmp.eq.s32.totalorder %s22, 1
    %p239 = por %p237, %p238
    %p240 = scmp.ne.s32.totalorder %s229, %s230
    %p241 = scmp.eq.s32.totalorder %s22, 0
    %p242 = por %p240, %p241
    %p243 = scmp.ne.s32.totalorder %s229, %s230
    %p244 = scmp.eq.s32.totalorder %s23, 1
    %p245 = por %p243, %p244
    %p247 = scmp.ne.s32.totalorder %s230, %s246
    %p248 = scmp.eq.s32.totalorder %s23, 0
    %p249 = por %p247, %p248
    %s250 = ssub.s32 %s17, %s24
    %p251 = scmp.eq.s32.totalorder %s250, 0
    %s253 = sadd.s32 %s252, 1
    %s254 = scalar_select %p251, %s252, %s253
    %p257 = pneg %p251
    %p258 = scmp.eq.s32.totalorder %s17, 1
    %p259 = por %p257, %p258
    %p260 = scmp.ne.s32.totalorder %s252, %s255
    %p261 = scmp.eq.s32.totalorder %s17, 0
    %p262 = por %p260, %p261
    %p263 = scmp.ne.s32.totalorder %s252, %s255
    %p264 = scmp.eq.s32.totalorder %s22, 1
    %p265 = por %p263, %p264
    %p266 = scmp.ne.s32.totalorder %s255, %s256
    %p267 = scmp.eq.s32.totalorder %s22, 0
    %p268 = por %p266, %p267
    %p269 = scmp.ne.s32.totalorder %s255, %s256
    %p270 = scmp.eq.s32.totalorder %s23, 1
    %p271 = por %p269, %p270
    %p273 = scmp.ne.s32.totalorder %s256, %s272
    %p274 = scmp.eq.s32.totalorder %s23, 0
    %p275 = por %p273, %p274
    %p276 = scmp.le.s32.totalorder 1, %s17
    %p277 = scmp.lt.s32.totalorder %s17, 3
    %p278 = pnand %p276, %p277
    %p279 = pneg %p278
    // Predicated region
    $region9: #{_lambda_.2} parent=5 // pred_check
      _
    $region10: #{_lambda_.2} parent=5 // pred_check_branch
      %281 = sbr.rel (%p278) target = $region12
    $region11: #{_lambda_.2} parent=5 // pred_region
      %s282 = ssub.s32 %s17, 1
      // Predicated region
      $region13: #{_lambda_.2} parent=11 // pred_check
        %p283 = pneg %p64
      $region14: #{_lambda_.2} parent=11 // pred_check_branch
        %285 = sbr.rel (%p283) target = $region16
      $region15: #{_lambda_.2} parent=11 // pred_region
        _
      $region16: #{_lambda_.2} parent=11 // pred_fallthru
        _
      // Predicated region
      $region17: #{_lambda_.2} parent=11 // pred_check
        %p286 = pneg %p85
      $region18: #{_lambda_.2} parent=11 // pred_check_branch
        %288 = sbr.rel (%p286) target = $region20
      $region19: #{_lambda_.2} parent=11 // pred_region
        _
      $region20: #{_lambda_.2} parent=11 // pred_fallthru
        _
      // Predicated region
      $region21: #{_lambda_.2} parent=11 // pred_check
        %p289 = pneg %p106
      $region22: #{_lambda_.2} parent=11 // pred_check_branch
        %291 = sbr.rel (%p289) target = $region24
      $region23: #{_lambda_.2} parent=11 // pred_region
        _
      $region24: #{_lambda_.2} parent=11 // pred_fallthru
        _
      // Predicated region
      $region25: #{_lambda_.2} parent=11 // pred_check
        %p292 = pneg %p127
      $region26: #{_lambda_.2} parent=11 // pred_check_branch
        %294 = sbr.rel (%p292) target = $region28
      $region27: #{_lambda_.2} parent=11 // pred_region
        _
      $region28: #{_lambda_.2} parent=11 // pred_fallthru
        _
      // Predicated region
      $region29: #{_lambda_.2} parent=11 // pred_check
        %p295 = pneg %p148
      $region30: #{_lambda_.2} parent=11 // pred_check_branch
        %297 = sbr.rel (%p295) target = $region32
      $region31: #{_lambda_.2} parent=11 // pred_region
        _
      $region32: #{_lambda_.2} parent=11 // pred_fallthru
        _
      // Predicated region
      $region33: #{_lambda_.2} parent=11 // pred_check
        %p298 = pneg %p169
      $region34: #{_lambda_.2} parent=11 // pred_check_branch
        %300 = sbr.rel (%p298) target = $region36
      $region35: #{_lambda_.2} parent=11 // pred_region
        _
      $region36: #{_lambda_.2} parent=11 // pred_fallthru
        _
      // Predicated region
      $region37: #{_lambda_.2} parent=11 // pred_check
        %p301 = pneg %p190
      $region38: #{_lambda_.2} parent=11 // pred_check_branch
        %303 = sbr.rel (%p301) target = $region40
      $region39: #{_lambda_.2} parent=11 // pred_region
        _
      $region40: #{_lambda_.2} parent=11 // pred_fallthru
        _
    $region12: #{_lambda_.2} parent=5 // pred_fallthru
      _
    %p304 = scmp.lt.s32.totalorder %s17, 2
    // Predicated region
    $region41: #{_lambda_.2} parent=5 // pred_check
      %p305 = pneg %p304
    $region42: #{_lambda_.2} parent=5 // pred_check_branch
      %307 = sbr.rel (%p305) target = $region44
    $region43: #{_lambda_.2} parent=5 // pred_region
      // Predicated region
      $region45: #{_lambda_.2} parent=43 // pred_check
        %p308 = pneg %p37
      $region46: #{_lambda_.2} parent=43 // pred_check_branch
        %310 = sbr.rel (%p308) target = $region48
      $region47: #{_lambda_.2} parent=43 // pred_region
        %p311 = scmp.lt.s32.totalorder %s17, 1
        %s312 = scalar_select %p311, %s17, 1
        %s313 = smul.addr %s312, 32
        %s314 = smul.addr %s313, 8
        %s315 = scalar_lea.vmem %s0, %s314
      $region48: #{_lambda_.2} parent=43 // pred_fallthru
        _
    $region44: #{_lambda_.2} parent=5 // pred_fallthru
      _
    %p316 = scmp.le.s32.totalorder 1, %s17
    %p317 = scmp.lt.s32.totalorder %s17, 3
    %p318 = pnand %p316, %p317
    %p319 = pneg %p318
    // Predicated region
    $region49: #{_lambda_.2} parent=5 // pred_check
      _
    $region50: #{_lambda_.2} parent=5 // pred_check_branch
      %321 = sbr.rel (%p318) target = $region52
    $region51: #{_lambda_.2} parent=5 // pred_region
      %s322 = ssub.s32 %s17, 1
      %p323 = scmp.lt.s32.totalorder %s22, 1
      %s324 = scalar_select %p323, %s22, 1
      %s325 = smul.addr %s324, 32
      %s326 = smul.addr %s325, 8
      %s327 = scalar_lea.vmem %s0, %s326
      %p328 = pneg %p43
      %p329 = pneg %p40
      %p330 = pneg %p64
      %p331 = pneg %p61
      %p332 = pneg %p85
      %p333 = pneg %p82
      %p334 = pneg %p106
      %p335 = pneg %p103
      %p336 = pneg %p127
      %p337 = pneg %p124
      %p338 = pneg %p148
      %p339 = pneg %p145
      %p340 = pneg %p169
      %p341 = pneg %p166
      %p342 = pneg %p190
      %p343 = pneg %p187
      %p344 = pneg %p216
      %p345 = pneg %p213
      %p346 = scmp.lt.s32.totalorder %s22, 1
      %s347 = scalar_select %p346, %s22, 1
      %s348 = smul.addr %s347, 32
      %s349 = smul.addr %s348, 8
      %s350 = scalar_lea.vmem %s8, %s349
      %p351 = pneg %p242
      %p352 = pneg %p239
      %p353 = scmp.lt.s32.totalorder %s22, 1
      %s354 = scalar_select %p353, %s22, 1
      %s355 = scalar_lea.vmem %s9, %s354
      %p356 = pneg %p268
      %p357 = pneg %p265
      %p358 = scmp.lt.s32.totalorder %s22, 1
      %s359 = scalar_select %p358, %s22, 1
      %s360 = scalar_lea.vmem %s10, %s359
      %p361 = scmp.lt.s32.totalorder %s22, 1
      %s362 = scalar_select %p361, %s22, 1
      %s363 = smul.addr %s362, 32
      %s364 = smul.addr %s363, 8
      %s365 = scalar_lea.vmem %s0, %s364
      %p366 = scmp.lt.s32.totalorder %s22, 1
      %s367 = scalar_select %p366, %s22, 1
      %s368 = smul.addr %s367, 32
      %s369 = smul.addr %s368, 8
      %s370 = scalar_lea.vmem %s8, %s369
      %p371 = scmp.lt.s32.totalorder %s22, 1
      %s372 = scalar_select %p371, %s22, 1
      %s373 = scalar_lea.vmem %s9, %s372
      %p374 = scmp.lt.s32.totalorder %s22, 1
      %s375 = scalar_select %p374, %s22, 1
      %s376 = scalar_lea.vmem %s10, %s375
      %v377 = vld [vmem:[%s365] sm:$0xff]
      %v378 = vld [vmem:[%s365 + $0x8] sm:$0xff]
      %v379 = vld [vmem:[%s365 + $0x10] sm:$0xff]
      %v380 = vld [vmem:[%s365 + $0x18] sm:$0xff]
      %v381 = vld [vmem:[%s365 + $0x20] sm:$0xff]
      %v382 = vld [vmem:[%s365 + $0x28] sm:$0xff]
      %v383 = vld [vmem:[%s365 + $0x30] sm:$0xff]
      %v384 = vld [vmem:[%s365 + $0x38] sm:$0xff]
      %v385 = vld [vmem:[%s365 + $0x40] sm:$0xff]
      %v386 = vld [vmem:[%s365 + $0x48] sm:$0xff]
      %v387 = vld [vmem:[%s365 + $0x50] sm:$0xff]
      %v388 = vld [vmem:[%s365 + $0x58] sm:$0xff]
      %v389 = vld [vmem:[%s365 + $0x60] sm:$0xff]
      %v390 = vld [vmem:[%s365 + $0x68] sm:$0xff]
      %v391 = vld [vmem:[%s365 + $0x70] sm:$0xff]
      %v392 = vld [vmem:[%s365 + $0x78] sm:$0xff]
      %v393 = vld [vmem:[%s365 + $0x80] sm:$0xff]
      %v394 = vld [vmem:[%s365 + $0x88] sm:$0xff]
      %v395 = vld [vmem:[%s365 + $0x90] sm:$0xff]
      %v396 = vld [vmem:[%s365 + $0x98] sm:$0xff]
      %v397 = vld [vmem:[%s365 + $0xa0] sm:$0xff]
      %v398 = vld [vmem:[%s365 + $0xa8] sm:$0xff]
      %v399 = vld [vmem:[%s365 + $0xb0] sm:$0xff]
      %v400 = vld [vmem:[%s365 + $0xb8] sm:$0xff]
      %v401 = vld [vmem:[%s365 + $0xc0] sm:$0xff]
      %v402 = vld [vmem:[%s365 + $0xc8] sm:$0xff]
      %v403 = vld [vmem:[%s365 + $0xd0] sm:$0xff]
      %v404 = vld [vmem:[%s365 + $0xd8] sm:$0xff]
      %v405 = vld [vmem:[%s365 + $0xe0] sm:$0xff]
      %v406 = vld [vmem:[%s365 + $0xe8] sm:$0xff]
      %v407 = vld [vmem:[%s365 + $0xf0] sm:$0xff]
      %v408 = vld [vmem:[%s365 + $0xf8] sm:$0xff]
      %vm409 = vcmask 64512
      %410 = vst.msk [vmem:[#allocation2] sm:$0xff] %vm409, 0.0
      %411 = vst.msk [vmem:[#allocation2 + $0x8] sm:$0xff] %vm409, 0.0
      %412 = vst.msk [vmem:[#allocation2 + $0x10] sm:$0xff] %vm409, 0.0
      %413 = vst.msk [vmem:[#allocation2 + $0x18] sm:$0xff] %vm409, 0.0
      %414 = vst.msk [vmem:[#allocation2 + $0x20] sm:$0xff] %vm409, 0.0
      %415 = vst.msk [vmem:[#allocation2 + $0x28] sm:$0xff] %vm409, 0.0
      %416 = vst.msk [vmem:[#allocation2 + $0x30] sm:$0xff] %vm409, 0.0
      %417 = vst.msk [vmem:[#allocation2 + $0x38] sm:$0xff] %vm409, 0.0
      %418 = vst.msk [vmem:[#allocation2 + $0x40] sm:$0xff] %vm409, 0.0
      %419 = vst.msk [vmem:[#allocation2 + $0x48] sm:$0xff] %vm409, 0.0
      %420 = vst.msk [vmem:[#allocation2 + $0x50] sm:$0xff] %vm409, 0.0
      %421 = vst.msk [vmem:[#allocation2 + $0x58] sm:$0xff] %vm409, 0.0
      %s422 = scalar_lea.vmem [#allocation2], 480
      %423 = vst.msk [vmem:[%s422] sm:$0xff] %vm409, 0.0
      %424 = vst.msk [vmem:[%s422 + $0x8] sm:$0xff] %vm409, 0.0
      %425 = vst.msk [vmem:[%s422 + $0x10] sm:$0xff] %vm409, 0.0
      %426 = vst.msk [vmem:[%s422 + $0x18] sm:$0xff] %vm409, 0.0
      %427 = vst.msk [vmem:[%s422 + $0x20] sm:$0xff] %vm409, 0.0
      %428 = vst.msk [vmem:[%s422 + $0x28] sm:$0xff] %vm409, 0.0
      %429 = vst.msk [vmem:[%s422 + $0x30] sm:$0xff] %vm409, 0.0
      %430 = vst.msk [vmem:[%s422 + $0x38] sm:$0xff] %vm409, 0.0
      %431 = vst.msk [vmem:[%s422 + $0x40] sm:$0xff] %vm409, 0.0
      %432 = vst.msk [vmem:[%s422 + $0x48] sm:$0xff] %vm409, 0.0
      %433 = vst.msk [vmem:[%s422 + $0x50] sm:$0xff] %vm409, 0.0
      %434 = vst.msk [vmem:[%s422 + $0x58] sm:$0xff] %vm409, 0.0
      %s435 = scalar_lea.vmem [#allocation2], 96
      %vm436 = vcmask 60416
      %437 = vst.msk [vmem:[%s435] sm:$0xf] %vm436, 0.0
      %438 = vst.msk [vmem:[%s435 + $0x18] sm:$0xf] %vm436, 0.0
      %439 = vst.msk [vmem:[%s435 + $0x30] sm:$0xf] %vm436, 0.0
      %440 = vst.msk [vmem:[%s435 + $0x48] sm:$0xf] %vm436, 0.0
      %441 = vst.msk [vmem:[%s435 + $0x60] sm:$0xf] %vm436, 0.0
      %442 = vst.msk [vmem:[%s435 + $0x78] sm:$0xf] %vm436, 0.0
      %443 = vst.msk [vmem:[%s435 + $0x90] sm:$0xf] %vm436, 0.0
      %444 = vst.msk [vmem:[%s435 + $0xa8] sm:$0xf] %vm436, 0.0
      %445 = vst.msk [vmem:[%s435 + $0xc0] sm:$0xf] %vm436, 0.0
      %446 = vst.msk [vmem:[%s435 + $0xd8] sm:$0xf] %vm436, 0.0
      %447 = vst.msk [vmem:[%s435 + $0xf0] sm:$0xf] %vm436, 0.0
      %448 = vst.msk [vmem:[%s435 + $0x108] sm:$0xf] %vm436, 0.0
      %449 = vst.msk [vmem:[%s435 + $0x120] sm:$0xf] %vm436, 0.0
      %450 = vst.msk [vmem:[%s435 + $0x138] sm:$0xf] %vm436, 0.0
      %451 = vst.msk [vmem:[%s435 + $0x150] sm:$0xf] %vm436, 0.0
      %452 = vst.msk [vmem:[%s435 + $0x168] sm:$0xf] %vm436, 0.0
      %453 = vst.msk [vmem:[%s435 + $0x14] sm:$0xf] %vm436, 0.0
      %454 = vst.msk [vmem:[%s435 + $0x2c] sm:$0xf] %vm436, 0.0
      %455 = vst.msk [vmem:[%s435 + $0x44] sm:$0xf] %vm436, 0.0
      %456 = vst.msk [vmem:[%s435 + $0x5c] sm:$0xf] %vm436, 0.0
      %457 = vst.msk [vmem:[%s435 + $0x74] sm:$0xf] %vm436, 0.0
      %458 = vst.msk [vmem:[%s435 + $0x8c] sm:$0xf] %vm436, 0.0
      %459 = vst.msk [vmem:[%s435 + $0xa4] sm:$0xf] %vm436, 0.0
      %460 = vst.msk [vmem:[%s435 + $0xbc] sm:$0xf] %vm436, 0.0
      %461 = vst.msk [vmem:[%s435 + $0xd4] sm:$0xf] %vm436, 0.0
      %462 = vst.msk [vmem:[%s435 + $0xec] sm:$0xf] %vm436, 0.0
      %463 = vst.msk [vmem:[%s435 + $0x104] sm:$0xf] %vm436, 0.0
      %464 = vst.msk [vmem:[%s435 + $0x11c] sm:$0xf] %vm436, 0.0
      %465 = vst.msk [vmem:[%s435 + $0x134] sm:$0xf] %vm436, 0.0
      %466 = vst.msk [vmem:[%s435 + $0x14c] sm:$0xf] %vm436, 0.0
      %467 = vst.msk [vmem:[%s435 + $0x164] sm:$0xf] %vm436, 0.0
      %468 = vst.msk [vmem:[%s435 + $0x17c] sm:$0xf] %vm436, 0.0
      %469 = vst.msk [vmem:[%s435 + $0x4] sm:$0xff] %vm409, %v377
      %470 = vst.msk [vmem:[%s435 + $0xc] sm:$0xff] %vm409, %v378
      %471 = vst.msk [vmem:[%s435 + $0x1c] sm:$0xff] %vm409, %v379
      %472 = vst.msk [vmem:[%s435 + $0x24] sm:$0xff] %vm409, %v380
      %473 = vst.msk [vmem:[%s435 + $0x34] sm:$0xff] %vm409, %v381
      %474 = vst.msk [vmem:[%s435 + $0x3c] sm:$0xff] %vm409, %v382
      %475 = vst.msk [vmem:[%s435 + $0x4c] sm:$0xff] %vm409, %v383
      %476 = vst.msk [vmem:[%s435 + $0x54] sm:$0xff] %vm409, %v384
      %477 = vst.msk [vmem:[%s435 + $0x64] sm:$0xff] %vm409, %v385
      %478 = vst.msk [vmem:[%s435 + $0x6c] sm:$0xff] %vm409, %v386
      %479 = vst.msk [vmem:[%s435 + $0x7c] sm:$0xff] %vm409, %v387
      %480 = vst.msk [vmem:[%s435 + $0x84] sm:$0xff] %vm409, %v388
      %481 = vst.msk [vmem:[%s435 + $0x94] sm:$0xff] %vm409, %v389
      %482 = vst.msk [vmem:[%s435 + $0x9c] sm:$0xff] %vm409, %v390
      %483 = vst.msk [vmem:[%s435 + $0xac] sm:$0xff] %vm409, %v391
      %484 = vst.msk [vmem:[%s435 + $0xb4] sm:$0xff] %vm409, %v392
      %485 = vst.msk [vmem:[%s435 + $0xc4] sm:$0xff] %vm409, %v393
      %486 = vst.msk [vmem:[%s435 + $0xcc] sm:$0xff] %vm409, %v394
      %487 = vst.msk [vmem:[%s435 + $0xdc] sm:$0xff] %vm409, %v395
      %488 = vst.msk [vmem:[%s435 + $0xe4] sm:$0xff] %vm409, %v396
      %489 = vst.msk [vmem:[%s435 + $0xf4] sm:$0xff] %vm409, %v397
      %490 = vst.msk [vmem:[%s435 + $0xfc] sm:$0xff] %vm409, %v398
      %491 = vst.msk [vmem:[%s435 + $0x10c] sm:$0xff] %vm409, %v399
      %492 = vst.msk [vmem:[%s435 + $0x114] sm:$0xff] %vm409, %v400
      %493 = vst.msk [vmem:[%s435 + $0x124] sm:$0xff] %vm409, %v401
      %494 = vst.msk [vmem:[%s435 + $0x12c] sm:$0xff] %vm409, %v402
      %495 = vst.msk [vmem:[%s435 + $0x13c] sm:$0xff] %vm409, %v403
      %496 = vst.msk [vmem:[%s435 + $0x144] sm:$0xff] %vm409, %v404
      %497 = vst.msk [vmem:[%s435 + $0x154] sm:$0xff] %vm409, %v405
      %498 = vst.msk [vmem:[%s435 + $0x15c] sm:$0xff] %vm409, %v406
      %499 = vst.msk [vmem:[%s435 + $0x16c] sm:$0xff] %vm409, %v407
      %500 = vst.msk [vmem:[%s435 + $0x174] sm:$0xff] %vm409, %v408
      %v501 = vld [vmem:[#allocation2 + $0x32] sm:$0xff]
      %v502 = vld [vmem:[#allocation2 + $0x3a] sm:$0xff]
      %v503 = vld [vmem:[#allocation2 + $0x4a] sm:$0xff]
      %v504 = vld [vmem:[#allocation2 + $0x52] sm:$0xff]
      %v505 = vld [vmem:[#allocation2 + $0x62] sm:$0xff]
      %v506 = vld [vmem:[#allocation2 + $0x6a] sm:$0xff]
      %v507 = vld [vmem:[#allocation2 + $0x7a] sm:$0xff]
      %v508 = vld [vmem:[#allocation2 + $0x82] sm:$0xff]
      %v509 = vld [vmem:[#allocation2 + $0x92] sm:$0xff]
      %v510 = vld [vmem:[#allocation2 + $0x9a] sm:$0xff]
      %v511 = vld [vmem:[#allocation2 + $0xaa] sm:$0xff]
      %v512 = vld [vmem:[#allocation2 + $0xb2] sm:$0xff]
      %v513 = vld [vmem:[#allocation2 + $0xc2] sm:$0xff]
      %v514 = vld [vmem:[#allocation2 + $0xca] sm:$0xff]
      %v515 = vld [vmem:[#allocation2 + $0xda] sm:$0xff]
      %v516 = vld [vmem:[#allocation2 + $0xe2] sm:$0xff]
      %v517 = vld [vmem:[#allocation2 + $0xf2] sm:$0xff]
      %v518 = vld [vmem:[#allocation2 + $0xfa] sm:$0xff]
      %v519 = vld [vmem:[#allocation2 + $0x10a] sm:$0xff]
      %v520 = vld [vmem:[#allocation2 + $0x112] sm:$0xff]
      %v521 = vld [vmem:[#allocation2 + $0x122] sm:$0xff]
      %v522 = vld [vmem:[#allocation2 + $0x12a] sm:$0xff]
      %v523 = vld [vmem:[#allocation2 + $0x13a] sm:$0xff]
      %v524 = vld [vmem:[#allocation2 + $0x142] sm:$0xff]
      %v525 = vld [vmem:[#allocation2 + $0x152] sm:$0xff]
      %v526 = vld [vmem:[#allocation2 + $0x15a] sm:$0xff]
      %v527 = vld [vmem:[#allocation2 + $0x16a] sm:$0xff]
      %v528 = vld [vmem:[#allocation2 + $0x172] sm:$0xff]
      %v529 = vld [vmem:[#allocation2 + $0x182] sm:$0xff]
      %v530 = vld [vmem:[#allocation2 + $0x18a] sm:$0xff]
      %v531 = vld [vmem:[#allocation2 + $0x19a] sm:$0xff]
      %v532 = vld [vmem:[#allocation2 + $0x1a2] sm:$0xff]
      %v533 = vld [vmem:[#allocation2 + $0x1b2] sm:$0xff]
      %v534 = vld [vmem:[#allocation2 + $0x1ba] sm:$0xff]
      %v535 = vld [vmem:[#allocation2 + $0x1ca] sm:$0xff]
      %v536 = vld [vmem:[#allocation2 + $0x1d2] sm:$0xff]
      %v537 = vld [vmem:[#allocation2 + $0x1e2] sm:$0xff]
      %v538 = vld [vmem:[#allocation2 + $0x1ea] sm:$0xff]
      %v539 = vld [vmem:[#allocation2 + $0x1fa] sm:$0xff]
      %v540 = vld [vmem:[#allocation2 + $0x202] sm:$0xff]
      %v541 = vld [vmem:[%s1] sm:$0x1]
      %v542 = vlaneseq
      %v543 = vshrl.u32 %v542, 7
      %v544 = vsub.s32 0, %v543
      %v545 = vrot.slane %v541, %v544
      %v546 = vmul.f32 %v501, %v545
      %v547 = vmul.f32 %v502, %v545
      %v548 = vmul.f32 %v503, %v545
      %v549 = vmul.f32 %v504, %v545
      %v550 = vmul.f32 %v505, %v545
      %v551 = vmul.f32 %v506, %v545
      %v552 = vmul.f32 %v507, %v545
      %v553 = vmul.f32 %v508, %v545
      %v554 = vmul.f32 %v509, %v545
      %v555 = vmul.f32 %v510, %v545
      %v556 = vmul.f32 %v511, %v545
      %v557 = vmul.f32 %v512, %v545
      %v558 = vmul.f32 %v513, %v545
      %v559 = vmul.f32 %v514, %v545
      %v560 = vmul.f32 %v515, %v545
      %v561 = vmul.f32 %v516, %v545
      %v562 = vmul.f32 %v517, %v545
      %v563 = vmul.f32 %v518, %v545
      %v564 = vmul.f32 %v519, %v545
      %v565 = vmul.f32 %v520, %v545
      %v566 = vmul.f32 %v521, %v545
      %v567 = vmul.f32 %v522, %v545
      %v568 = vmul.f32 %v523, %v545
      %v569 = vmul.f32 %v524, %v545
      %v570 = vmul.f32 %v525, %v545
      %v571 = vmul.f32 %v526, %v545
      %v572 = vmul.f32 %v527, %v545
      %v573 = vmul.f32 %v528, %v545
      %v574 = vmul.f32 %v529, %v545
      %v575 = vmul.f32 %v530, %v545
      %v576 = vmul.f32 %v531, %v545
      %v577 = vmul.f32 %v532, %v545
      %v578 = vadd.f32 %v546, 0.0
      %v579 = vadd.f32 %v547, 0.0
      %v580 = vadd.f32 %v548, 0.0
      %v581 = vadd.f32 %v549, 0.0
      %v582 = vadd.f32 %v550, 0.0
      %v583 = vadd.f32 %v551, 0.0
      %v584 = vadd.f32 %v552, 0.0
      %v585 = vadd.f32 %v553, 0.0
      %v586 = vadd.f32 %v554, 0.0
      %v587 = vadd.f32 %v555, 0.0
      %v588 = vadd.f32 %v556, 0.0
      %v589 = vadd.f32 %v557, 0.0
      %v590 = vadd.f32 %v558, 0.0
      %v591 = vadd.f32 %v559, 0.0
      %v592 = vadd.f32 %v560, 0.0
      %v593 = vadd.f32 %v561, 0.0
      %v594 = vadd.f32 %v562, 0.0
      %v595 = vadd.f32 %v563, 0.0
      %v596 = vadd.f32 %v564, 0.0
      %v597 = vadd.f32 %v565, 0.0
      %v598 = vadd.f32 %v566, 0.0
      %v599 = vadd.f32 %v567, 0.0
      %v600 = vadd.f32 %v568, 0.0
      %v601 = vadd.f32 %v569, 0.0
      %v602 = vadd.f32 %v570, 0.0
      %v603 = vadd.f32 %v571, 0.0
      %v604 = vadd.f32 %v572, 0.0
      %v605 = vadd.f32 %v573, 0.0
      %v606 = vadd.f32 %v574, 0.0
      %v607 = vadd.f32 %v575, 0.0
      %v608 = vadd.f32 %v576, 0.0
      %v609 = vadd.f32 %v577, 0.0
      %v610 = vld [vmem:[%s1 + $0x3] sm:$0x1]
      %v611 = vlaneseq
      %v612 = vshrl.u32 %v611, 7
      %v613 = vsub.s32 0, %v612
      %v614 = vrot.slane %v610, %v613
      %v615 = vmul.f32 %v505, %v614
      %v616 = vmul.f32 %v506, %v614
      %v617 = vmul.f32 %v507, %v614
      %v618 = vmul.f32 %v508, %v614
      %v619 = vmul.f32 %v509, %v614
      %v620 = vmul.f32 %v510, %v614
      %v621 = vmul.f32 %v511, %v614
      %v622 = vmul.f32 %v512, %v614
      %v623 = vmul.f32 %v513, %v614
      %v624 = vmul.f32 %v514, %v614
      %v625 = vmul.f32 %v515, %v614
      %v626 = vmul.f32 %v516, %v614
      %v627 = vmul.f32 %v517, %v614
      %v628 = vmul.f32 %v518, %v614
      %v629 = vmul.f32 %v519, %v614
      %v630 = vmul.f32 %v520, %v614
      %v631 = vmul.f32 %v521, %v614
      %v632 = vmul.f32 %v522, %v614
      %v633 = vmul.f32 %v523, %v614
      %v634 = vmul.f32 %v524, %v614
      %v635 = vmul.f32 %v525, %v614
      %v636 = vmul.f32 %v526, %v614
      %v637 = vmul.f32 %v527, %v614
      %v638 = vmul.f32 %v528, %v614
      %v639 = vmul.f32 %v529, %v614
      %v640 = vmul.f32 %v530, %v614
      %v641 = vmul.f32 %v531, %v614
      %v642 = vmul.f32 %v532, %v614
      %v643 = vmul.f32 %v533, %v614
      %v644 = vmul.f32 %v534, %v614
      %v645 = vmul.f32 %v535, %v614
      %v646 = vmul.f32 %v536, %v614
      %v647 = vadd.f32 %v578, %v615
      %v648 = vadd.f32 %v579, %v616
      %v649 = vadd.f32 %v580, %v617
      %v650 = vadd.f32 %v581, %v618
      %v651 = vadd.f32 %v582, %v619
      %v652 = vadd.f32 %v583, %v620
      %v653 = vadd.f32 %v584, %v621
      %v654 = vadd.f32 %v585, %v622
      %v655 = vadd.f32 %v586, %v623
      %v656 = vadd.f32 %v587, %v624
      %v657 = vadd.f32 %v588, %v625
      %v658 = vadd.f32 %v589, %v626
      %v659 = vadd.f32 %v590, %v627
      %v660 = vadd.f32 %v591, %v628
      %v661 = vadd.f32 %v592, %v629
      %v662 = vadd.f32 %v593, %v630
      %v663 = vadd.f32 %v594, %v631
      %v664 = vadd.f32 %v595, %v632
      %v665 = vadd.f32 %v596, %v633
      %v666 = vadd.f32 %v597, %v634
      %v667 = vadd.f32 %v598, %v635
      %v668 = vadd.f32 %v599, %v636
      %v669 = vadd.f32 %v600, %v637
      %v670 = vadd.f32 %v601, %v638
      %v671 = vadd.f32 %v602, %v639
      %v672 = vadd.f32 %v603, %v640
      %v673 = vadd.f32 %v604, %v641
      %v674 = vadd.f32 %v605, %v642
      %v675 = vadd.f32 %v606, %v643
      %v676 = vadd.f32 %v607, %v644
      %v677 = vadd.f32 %v608, %v645
      %v678 = vadd.f32 %v609, %v646
      %v679 = vld [vmem:[%s1 + $0x6] sm:$0x1]
      %v680 = vlaneseq
      %v681 = vshrl.u32 %v680, 7
      %v682 = vsub.s32 0, %v681
      %v683 = vrot.slane %v679, %v682
      %v684 = vmul.f32 %v509, %v683
      %v685 = vmul.f32 %v510, %v683
      %v686 = vmul.f32 %v511, %v683
      %v687 = vmul.f32 %v512, %v683
      %v688 = vmul.f32 %v513, %v683
      %v689 = vmul.f32 %v514, %v683
      %v690 = vmul.f32 %v515, %v683
      %v691 = vmul.f32 %v516, %v683
      %v692 = vmul.f32 %v517, %v683
      %v693 = vmul.f32 %v518, %v683
      %v694 = vmul.f32 %v519, %v683
      %v695 = vmul.f32 %v520, %v683
      %v696 = vmul.f32 %v521, %v683
      %v697 = vmul.f32 %v522, %v683
      %v698 = vmul.f32 %v523, %v683
      %v699 = vmul.f32 %v524, %v683
      %v700 = vmul.f32 %v525, %v683
      %v701 = vmul.f32 %v526, %v683
      %v702 = vmul.f32 %v527, %v683
      %v703 = vmul.f32 %v528, %v683
      %v704 = vmul.f32 %v529, %v683
      %v705 = vmul.f32 %v530, %v683
      %v706 = vmul.f32 %v531, %v683
      %v707 = vmul.f32 %v532, %v683
      %v708 = vmul.f32 %v533, %v683
      %v709 = vmul.f32 %v534, %v683
      %v710 = vmul.f32 %v535, %v683
      %v711 = vmul.f32 %v536, %v683
      %v712 = vmul.f32 %v537, %v683
      %v713 = vmul.f32 %v538, %v683
      %v714 = vmul.f32 %v539, %v683
      %v715 = vmul.f32 %v540, %v683
      %v716 = vadd.f32 %v647, %v684
      %v717 = vadd.f32 %v648, %v685
      %v718 = vadd.f32 %v649, %v686
      %v719 = vadd.f32 %v650, %v687
      %v720 = vadd.f32 %v651, %v688
      %v721 = vadd.f32 %v652, %v689
      %v722 = vadd.f32 %v653, %v690
      %v723 = vadd.f32 %v654, %v691
      %v724 = vadd.f32 %v655, %v692
      %v725 = vadd.f32 %v656, %v693
      %v726 = vadd.f32 %v657, %v694
      %v727 = vadd.f32 %v658, %v695
      %v728 = vadd.f32 %v659, %v696
      %v729 = vadd.f32 %v660, %v697
      %v730 = vadd.f32 %v661, %v698
      %v731 = vadd.f32 %v662, %v699
      %v732 = vadd.f32 %v663, %v700
      %v733 = vadd.f32 %v664, %v701
      %v734 = vadd.f32 %v665, %v702
      %v735 = vadd.f32 %v666, %v703
      %v736 = vadd.f32 %v667, %v704
      %v737 = vadd.f32 %v668, %v705
      %v738 = vadd.f32 %v669, %v706
      %v739 = vadd.f32 %v670, %v707
      %v740 = vadd.f32 %v671, %v708
      %v741 = vadd.f32 %v672, %v709
      %v742 = vadd.f32 %v673, %v710
      %v743 = vadd.f32 %v674, %v711
      %v744 = vadd.f32 %v675, %v712
      %v745 = vadd.f32 %v676, %v713
      %v746 = vadd.f32 %v677, %v714
      %v747 = vadd.f32 %v678, %v715
      %v748 = vld [vmem:[#allocation2 + $0x4] sm:$0xff]
      %v749 = vld [vmem:[#allocation2 + $0xc] sm:$0xff]
      %v750 = vld [vmem:[#allocation2 + $0x1c] sm:$0xff]
      %v751 = vld [vmem:[#allocation2 + $0x24] sm:$0xff]
      %v752 = vld [vmem:[#allocation2 + $0x34] sm:$0xff]
      %v753 = vld [vmem:[#allocation2 + $0x3c] sm:$0xff]
      %v754 = vld [vmem:[#allocation2 + $0x4c] sm:$0xff]
      %v755 = vld [vmem:[#allocation2 + $0x54] sm:$0xff]
      %v756 = vld [vmem:[#allocation2 + $0x64] sm:$0xff]
      %v757 = vld [vmem:[#allocation2 + $0x6c] sm:$0xff]
      %v758 = vld [vmem:[#allocation2 + $0x7c] sm:$0xff]
      %v759 = vld [vmem:[#allocation2 + $0x84] sm:$0xff]
      %v760 = vld [vmem:[#allocation2 + $0x94] sm:$0xff]
      %v761 = vld [vmem:[#allocation2 + $0x9c] sm:$0xff]
      %v762 = vld [vmem:[#allocation2 + $0xac] sm:$0xff]
      %v763 = vld [vmem:[#allocation2 + $0xb4] sm:$0xff]
      %v764 = vld [vmem:[#allocation2 + $0xc4] sm:$0xff]
      %v765 = vld [vmem:[#allocation2 + $0xcc] sm:$0xff]
      %v766 = vld [vmem:[#allocation2 + $0xdc] sm:$0xff]
      %v767 = vld [vmem:[#allocation2 + $0xe4] sm:$0xff]
      %v768 = vld [vmem:[#allocation2 + $0xf4] sm:$0xff]
      %v769 = vld [vmem:[#allocation2 + $0xfc] sm:$0xff]
      %v770 = vld [vmem:[#allocation2 + $0x10c] sm:$0xff]
      %v771 = vld [vmem:[#allocation2 + $0x114] sm:$0xff]
      %v772 = vld [vmem:[#allocation2 + $0x124] sm:$0xff]
      %v773 = vld [vmem:[#allocation2 + $0x12c] sm:$0xff]
      %v774 = vld [vmem:[#allocation2 + $0x13c] sm:$0xff]
      %v775 = vld [vmem:[#allocation2 + $0x144] sm:$0xff]
      %v776 = vld [vmem:[#allocation2 + $0x154] sm:$0xff]
      %v777 = vld [vmem:[#allocation2 + $0x15c] sm:$0xff]
      %v778 = vld [vmem:[#allocation2 + $0x16c] sm:$0xff]
      %v779 = vld [vmem:[#allocation2 + $0x174] sm:$0xff]
      %v780 = vld [vmem:[#allocation2 + $0x184] sm:$0xff]
      %v781 = vld [vmem:[#allocation2 + $0x18c] sm:$0xff]
      %v782 = vld [vmem:[#allocation2 + $0x19c] sm:$0xff]
      %v783 = vld [vmem:[#allocation2 + $0x1a4] sm:$0xff]
      %v784 = vld [vmem:[#allocation2 + $0x1b4] sm:$0xff]
      %v785 = vld [vmem:[#allocation2 + $0x1bc] sm:$0xff]
      %v786 = vld [vmem:[#allocation2 + $0x1cc] sm:$0xff]
      %v787 = vld [vmem:[#allocation2 + $0x1d4] sm:$0xff]
      %v788 = vld [vmem:[#allocation2 + $0x1e4] sm:$0xff]
      %v789 = vld [vmem:[#allocation2 + $0x1ec] sm:$0xff]
      %v790 = vld [vmem:[#allocation2 + $0x1fc] sm:$0xff]
      %v791 = vld [vmem:[#allocation2 + $0x204] sm:$0xff]
      %v792 = vld [vmem:[#allocation2 + $0x214] sm:$0xff]
      %v793 = vld [vmem:[#allocation2 + $0x21c] sm:$0xff]
      %v794 = vld [vmem:[#allocation2 + $0x22c] sm:$0xff]
      %v795 = vld [vmem:[#allocation2 + $0x234] sm:$0xff]
      %v796 = vld [vmem:[%s1 + $0x1] sm:$0x1]
      %v797 = vlaneseq
      %v798 = vshrl.u32 %v797, 7
      %v799 = vsub.s32 0, %v798
      %v800 = vrot.slane %v796, %v799
      %v801 = vmul.f32 %v752, %v800
      %v802 = vmul.f32 %v753, %v800
      %v803 = vmul.f32 %v754, %v800
      %v804 = vmul.f32 %v755, %v800
      %v805 = vmul.f32 %v756, %v800
      %v806 = vmul.f32 %v757, %v800
      %v807 = vmul.f32 %v758, %v800
      %v808 = vmul.f32 %v759, %v800
      %v809 = vmul.f32 %v760, %v800
      %v810 = vmul.f32 %v761, %v800
      %v811 = vmul.f32 %v762, %v800
      %v812 = vmul.f32 %v763, %v800
      %v813 = vmul.f32 %v764, %v800
      %v814 = vmul.f32 %v765, %v800
      %v815 = vmul.f32 %v766, %v800
      %v816 = vmul.f32 %v767, %v800
      %v817 = vmul.f32 %v768, %v800
      %v818 = vmul.f32 %v769, %v800
      %v819 = vmul.f32 %v770, %v800
      %v820 = vmul.f32 %v771, %v800
      %v821 = vmul.f32 %v772, %v800
      %v822 = vmul.f32 %v773, %v800
      %v823 = vmul.f32 %v774, %v800
      %v824 = vmul.f32 %v775, %v800
      %v825 = vmul.f32 %v776, %v800
      %v826 = vmul.f32 %v777, %v800
      %v827 = vmul.f32 %v778, %v800
      %v828 = vmul.f32 %v779, %v800
      %v829 = vmul.f32 %v780, %v800
      %v830 = vmul.f32 %v781, %v800
      %v831 = vmul.f32 %v782, %v800
      %v832 = vmul.f32 %v783, %v800
      %v833 = vadd.f32 %v716, %v801
      %v834 = vadd.f32 %v717, %v802
      %v835 = vadd.f32 %v718, %v803
      %v836 = vadd.f32 %v719, %v804
      %v837 = vadd.f32 %v720, %v805
      %v838 = vadd.f32 %v721, %v806
      %v839 = vadd.f32 %v722, %v807
      %v840 = vadd.f32 %v723, %v808
      %v841 = vadd.f32 %v724, %v809
      %v842 = vadd.f32 %v725, %v810
      %v843 = vadd.f32 %v726, %v811
      %v844 = vadd.f32 %v727, %v812
      %v845 = vadd.f32 %v728, %v813
      %v846 = vadd.f32 %v729, %v814
      %v847 = vadd.f32 %v730, %v815
      %v848 = vadd.f32 %v731, %v816
      %v849 = vadd.f32 %v732, %v817
      %v850 = vadd.f32 %v733, %v818
      %v851 = vadd.f32 %v734, %v819
      %v852 = vadd.f32 %v735, %v820
      %v853 = vadd.f32 %v736, %v821
      %v854 = vadd.f32 %v737, %v822
      %v855 = vadd.f32 %v738, %v823
      %v856 = vadd.f32 %v739, %v824
      %v857 = vadd.f32 %v740, %v825
      %v858 = vadd.f32 %v741, %v826
      %v859 = vadd.f32 %v742, %v827
      %v860 = vadd.f32 %v743, %v828
      %v861 = vadd.f32 %v744, %v829
      %v862 = vadd.f32 %v745, %v830
      %v863 = vadd.f32 %v746, %v831
      %v864 = vadd.f32 %v747, %v832
      %v865 = vld [vmem:[%s1 + $0x4] sm:$0x1]
      %v866 = vlaneseq
      %v867 = vshrl.u32 %v866, 7
      %v868 = vsub.s32 0, %v867
      %v869 = vrot.slane %v865, %v868
      %v870 = vmul.f32 %v756, %v869
      %v871 = vmul.f32 %v757, %v869
      %v872 = vmul.f32 %v758, %v869
      %v873 = vmul.f32 %v759, %v869
      %v874 = vmul.f32 %v760, %v869
      %v875 = vmul.f32 %v761, %v869
      %v876 = vmul.f32 %v762, %v869
      %v877 = vmul.f32 %v763, %v869
      %v878 = vmul.f32 %v764, %v869
      %v879 = vmul.f32 %v765, %v869
      %v880 = vmul.f32 %v766, %v869
      %v881 = vmul.f32 %v767, %v869
      %v882 = vmul.f32 %v768, %v869
      %v883 = vmul.f32 %v769, %v869
      %v884 = vmul.f32 %v770, %v869
      %v885 = vmul.f32 %v771, %v869
      %v886 = vmul.f32 %v772, %v869
      %v887 = vmul.f32 %v773, %v869
      %v888 = vmul.f32 %v774, %v869
      %v889 = vmul.f32 %v775, %v869
      %v890 = vmul.f32 %v776, %v869
      %v891 = vmul.f32 %v777, %v869
      %v892 = vmul.f32 %v778, %v869
      %v893 = vmul.f32 %v779, %v869
      %v894 = vmul.f32 %v780, %v869
      %v895 = vmul.f32 %v781, %v869
      %v896 = vmul.f32 %v782, %v869
      %v897 = vmul.f32 %v783, %v869
      %v898 = vmul.f32 %v784, %v869
      %v899 = vmul.f32 %v785, %v869
      %v900 = vmul.f32 %v786, %v869
      %v901 = vmul.f32 %v787, %v869
      %v902 = vadd.f32 %v833, %v870
      %v903 = vadd.f32 %v834, %v871
      %v904 = vadd.f32 %v835, %v872
      %v905 = vadd.f32 %v836, %v873
      %v906 = vadd.f32 %v837, %v874
      %v907 = vadd.f32 %v838, %v875
      %v908 = vadd.f32 %v839, %v876
      %v909 = vadd.f32 %v840, %v877
      %v910 = vadd.f32 %v841, %v878
      %v911 = vadd.f32 %v842, %v879
      %v912 = vadd.f32 %v843, %v880
      %v913 = vadd.f32 %v844, %v881
      %v914 = vadd.f32 %v845, %v882
      %v915 = vadd.f32 %v846, %v883
      %v916 = vadd.f32 %v847, %v884
      %v917 = vadd.f32 %v848, %v885
      %v918 = vadd.f32 %v849, %v886
      %v919 = vadd.f32 %v850, %v887
      %v920 = vadd.f32 %v851, %v888
      %v921 = vadd.f32 %v852, %v889
      %v922 = vadd.f32 %v853, %v890
      %v923 = vadd.f32 %v854, %v891
      %v924 = vadd.f32 %v855, %v892
      %v925 = vadd.f32 %v856, %v893
      %v926 = vadd.f32 %v857, %v894
      %v927 = vadd.f32 %v858, %v895
      %v928 = vadd.f32 %v859, %v896
      %v929 = vadd.f32 %v860, %v897
      %v930 = vadd.f32 %v861, %v898
      %v931 = vadd.f32 %v862, %v899
      %v932 = vadd.f32 %v863, %v900
      %v933 = vadd.f32 %v864, %v901
      %v934 = vld [vmem:[%s1 + $0x7] sm:$0x1]
      %v935 = vlaneseq
      %v936 = vshrl.u32 %v935, 7
      %v937 = vsub.s32 0, %v936
      %v938 = vrot.slane %v934, %v937
      %v939 = vmul.f32 %v760, %v938
      %v940 = vmul.f32 %v761, %v938
      %v941 = vmul.f32 %v762, %v938
      %v942 = vmul.f32 %v763, %v938
      %v943 = vmul.f32 %v764, %v938
      %v944 = vmul.f32 %v765, %v938
      %v945 = vmul.f32 %v766, %v938
      %v946 = vmul.f32 %v767, %v938
      %v947 = vmul.f32 %v768, %v938
      %v948 = vmul.f32 %v769, %v938
      %v949 = vmul.f32 %v770, %v938
      %v950 = vmul.f32 %v771, %v938
      %v951 = vmul.f32 %v772, %v938
      %v952 = vmul.f32 %v773, %v938
      %v953 = vmul.f32 %v774, %v938
      %v954 = vmul.f32 %v775, %v938
      %v955 = vmul.f32 %v776, %v938
      %v956 = vmul.f32 %v777, %v938
      %v957 = vmul.f32 %v778, %v938
      %v958 = vmul.f32 %v779, %v938
      %v959 = vmul.f32 %v780, %v938
      %v960 = vmul.f32 %v781, %v938
      %v961 = vmul.f32 %v782, %v938
      %v962 = vmul.f32 %v783, %v938
      %v963 = vmul.f32 %v784, %v938
      %v964 = vmul.f32 %v785, %v938
      %v965 = vmul.f32 %v786, %v938
      %v966 = vmul.f32 %v787, %v938
      %v967 = vmul.f32 %v788, %v938
      %v968 = vmul.f32 %v789, %v938
      %v969 = vmul.f32 %v790, %v938
      %v970 = vmul.f32 %v791, %v938
      %v971 = vadd.f32 %v902, %v939
      %v972 = vadd.f32 %v903, %v940
      %v973 = vadd.f32 %v904, %v941
      %v974 = vadd.f32 %v905, %v942
      %v975 = vadd.f32 %v906, %v943
      %v976 = vadd.f32 %v907, %v944
      %v977 = vadd.f32 %v908, %v945
      %v978 = vadd.f32 %v909, %v946
      %v979 = vadd.f32 %v910, %v947
      %v980 = vadd.f32 %v911, %v948
      %v981 = vadd.f32 %v912, %v949
      %v982 = vadd.f32 %v913, %v950
      %v983 = vadd.f32 %v914, %v951
      %v984 = vadd.f32 %v915, %v952
      %v985 = vadd.f32 %v916, %v953
      %v986 = vadd.f32 %v917, %v954
      %v987 = vadd.f32 %v918, %v955
      %v988 = vadd.f32 %v919, %v956
      %v989 = vadd.f32 %v920, %v957
      %v990 = vadd.f32 %v921, %v958
      %v991 = vadd.f32 %v922, %v959
      %v992 = vadd.f32 %v923, %v960
      %v993 = vadd.f32 %v924, %v961
      %v994 = vadd.f32 %v925, %v962
      %v995 = vadd.f32 %v926, %v963
      %v996 = vadd.f32 %v927, %v964
      %v997 = vadd.f32 %v928, %v965
      %v998 = vadd.f32 %v929, %v966
      %v999 = vadd.f32 %v930, %v967
      %v1000 = vadd.f32 %v931, %v968
      %v1001 = vadd.f32 %v932, %v969
      %v1002 = vadd.f32 %v933, %v970
      %v1003 = vld [vmem:[#allocation2 + $0x36] sm:$0xff]
      %v1004 = vld [vmem:[#allocation2 + $0x3e] sm:$0xff]
      %v1005 = vld [vmem:[#allocation2 + $0x4e] sm:$0xff]
      %v1006 = vld [vmem:[#allocation2 + $0x56] sm:$0xff]
      %v1007 = vld [vmem:[#allocation2 + $0x66] sm:$0xff]
      %v1008 = vld [vmem:[#allocation2 + $0x6e] sm:$0xff]
      %v1009 = vld [vmem:[#allocation2 + $0x7e] sm:$0xff]
      %v1010 = vld [vmem:[#allocation2 + $0x86] sm:$0xff]
      %v1011 = vld [vmem:[#allocation2 + $0x96] sm:$0xff]
      %v1012 = vld [vmem:[#allocation2 + $0x9e] sm:$0xff]
      %v1013 = vld [vmem:[#allocation2 + $0xae] sm:$0xff]
      %v1014 = vld [vmem:[#allocation2 + $0xb6] sm:$0xff]
      %v1015 = vld [vmem:[#allocation2 + $0xc6] sm:$0xff]
      %v1016 = vld [vmem:[#allocation2 + $0xce] sm:$0xff]
      %v1017 = vld [vmem:[#allocation2 + $0xde] sm:$0xff]
      %v1018 = vld [vmem:[#allocation2 + $0xe6] sm:$0xff]
      %v1019 = vld [vmem:[#allocation2 + $0xf6] sm:$0xff]
      %v1020 = vld [vmem:[#allocation2 + $0xfe] sm:$0xff]
      %v1021 = vld [vmem:[#allocation2 + $0x10e] sm:$0xff]
      %v1022 = vld [vmem:[#allocation2 + $0x116] sm:$0xff]
      %v1023 = vld [vmem:[#allocation2 + $0x126] sm:$0xff]
      %v1024 = vld [vmem:[#allocation2 + $0x12e] sm:$0xff]
      %v1025 = vld [vmem:[#allocation2 + $0x13e] sm:$0xff]
      %v1026 = vld [vmem:[#allocation2 + $0x146] sm:$0xff]
      %v1027 = vld [vmem:[#allocation2 + $0x156] sm:$0xff]
      %v1028 = vld [vmem:[#allocation2 + $0x15e] sm:$0xff]
      %v1029 = vld [vmem:[#allocation2 + $0x16e] sm:$0xff]
      %v1030 = vld [vmem:[#allocation2 + $0x176] sm:$0xff]
      %v1031 = vld [vmem:[#allocation2 + $0x186] sm:$0xff]
      %v1032 = vld [vmem:[#allocation2 + $0x18e] sm:$0xff]
      %v1033 = vld [vmem:[#allocation2 + $0x19e] sm:$0xff]
      %v1034 = vld [vmem:[#allocation2 + $0x1a6] sm:$0xff]
      %v1035 = vld [vmem:[#allocation2 + $0x1b6] sm:$0xff]
      %v1036 = vld [vmem:[#allocation2 + $0x1be] sm:$0xff]
      %v1037 = vld [vmem:[#allocation2 + $0x1ce] sm:$0xff]
      %v1038 = vld [vmem:[#allocation2 + $0x1d6] sm:$0xff]
      %v1039 = vld [vmem:[#allocation2 + $0x1e6] sm:$0xff]
      %v1040 = vld [vmem:[#allocation2 + $0x1ee] sm:$0xff]
      %v1041 = vld [vmem:[#allocation2 + $0x1fe] sm:$0xff]
      %v1042 = vld [vmem:[#allocation2 + $0x206] sm:$0xff]
      %v1043 = vld [vmem:[%s1 + $0x2] sm:$0x1]
      %v1044 = vlaneseq
      %v1045 = vshrl.u32 %v1044, 7
      %v1046 = vsub.s32 0, %v1045
      %v1047 = vrot.slane %v1043, %v1046
      %v1048 = vmul.f32 %v1003, %v1047
      %v1049 = vmul.f32 %v1004, %v1047
      %v1050 = vmul.f32 %v1005, %v1047
      %v1051 = vmul.f32 %v1006, %v1047
      %v1052 = vmul.f32 %v1007, %v1047
      %v1053 = vmul.f32 %v1008, %v1047
      %v1054 = vmul.f32 %v1009, %v1047
      %v1055 = vmul.f32 %v1010, %v1047
      %v1056 = vmul.f32 %v1011, %v1047
      %v1057 = vmul.f32 %v1012, %v1047
      %v1058 = vmul.f32 %v1013, %v1047
      %v1059 = vmul.f32 %v1014, %v1047
      %v1060 = vmul.f32 %v1015, %v1047
      %v1061 = vmul.f32 %v1016, %v1047
      %v1062 = vmul.f32 %v1017, %v1047
      %v1063 = vmul.f32 %v1018, %v1047
      %v1064 = vmul.f32 %v1019, %v1047
      %v1065 = vmul.f32 %v1020, %v1047
      %v1066 = vmul.f32 %v1021, %v1047
      %v1067 = vmul.f32 %v1022, %v1047
      %v1068 = vmul.f32 %v1023, %v1047
      %v1069 = vmul.f32 %v1024, %v1047
      %v1070 = vmul.f32 %v1025, %v1047
      %v1071 = vmul.f32 %v1026, %v1047
      %v1072 = vmul.f32 %v1027, %v1047
      %v1073 = vmul.f32 %v1028, %v1047
      %v1074 = vmul.f32 %v1029, %v1047
      %v1075 = vmul.f32 %v1030, %v1047
      %v1076 = vmul.f32 %v1031, %v1047
      %v1077 = vmul.f32 %v1032, %v1047
      %v1078 = vmul.f32 %v1033, %v1047
      %v1079 = vmul.f32 %v1034, %v1047
      %v1080 = vadd.f32 %v971, %v1048
      %v1081 = vadd.f32 %v972, %v1049
      %v1082 = vadd.f32 %v973, %v1050
      %v1083 = vadd.f32 %v974, %v1051
      %v1084 = vadd.f32 %v975, %v1052
      %v1085 = vadd.f32 %v976, %v1053
      %v1086 = vadd.f32 %v977, %v1054
      %v1087 = vadd.f32 %v978, %v1055
      %v1088 = vadd.f32 %v979, %v1056
      %v1089 = vadd.f32 %v980, %v1057
      %v1090 = vadd.f32 %v981, %v1058
      %v1091 = vadd.f32 %v982, %v1059
      %v1092 = vadd.f32 %v983, %v1060
      %v1093 = vadd.f32 %v984, %v1061
      %v1094 = vadd.f32 %v985, %v1062
      %v1095 = vadd.f32 %v986, %v1063
      %v1096 = vadd.f32 %v987, %v1064
      %v1097 = vadd.f32 %v988, %v1065
      %v1098 = vadd.f32 %v989, %v1066
      %v1099 = vadd.f32 %v990, %v1067
      %v1100 = vadd.f32 %v991, %v1068
      %v1101 = vadd.f32 %v992, %v1069
      %v1102 = vadd.f32 %v993, %v1070
      %v1103 = vadd.f32 %v994, %v1071
      %v1104 = vadd.f32 %v995, %v1072
      %v1105 = vadd.f32 %v996, %v1073
      %v1106 = vadd.f32 %v997, %v1074
      %v1107 = vadd.f32 %v998, %v1075
      %v1108 = vadd.f32 %v999, %v1076
      %v1109 = vadd.f32 %v1000, %v1077
      %v1110 = vadd.f32 %v1001, %v1078
      %v1111 = vadd.f32 %v1002, %v1079
      %v1112 = vld [vmem:[%s1 + $0x5] sm:$0x1]
      %v1113 = vlaneseq
      %v1114 = vshrl.u32 %v1113, 7
      %v1115 = vsub.s32 0, %v1114
      %v1116 = vrot.slane %v1112, %v1115
      %v1117 = vmul.f32 %v1007, %v1116
      %v1118 = vmul.f32 %v1008, %v1116
      %v1119 = vmul.f32 %v1009, %v1116
      %v1120 = vmul.f32 %v1010, %v1116
      %v1121 = vmul.f32 %v1011, %v1116
      %v1122 = vmul.f32 %v1012, %v1116
      %v1123 = vmul.f32 %v1013, %v1116
      %v1124 = vmul.f32 %v1014, %v1116
      %v1125 = vmul.f32 %v1015, %v1116
      %v1126 = vmul.f32 %v1016, %v1116
      %v1127 = vmul.f32 %v1017, %v1116
      %v1128 = vmul.f32 %v1018, %v1116
      %v1129 = vmul.f32 %v1019, %v1116
      %v1130 = vmul.f32 %v1020, %v1116
      %v1131 = vmul.f32 %v1021, %v1116
      %v1132 = vmul.f32 %v1022, %v1116
      %v1133 = vmul.f32 %v1023, %v1116
      %v1134 = vmul.f32 %v1024, %v1116
      %v1135 = vmul.f32 %v1025, %v1116
      %v1136 = vmul.f32 %v1026, %v1116
      %v1137 = vmul.f32 %v1027, %v1116
      %v1138 = vmul.f32 %v1028, %v1116
      %v1139 = vmul.f32 %v1029, %v1116
      %v1140 = vmul.f32 %v1030, %v1116
      %v1141 = vmul.f32 %v1031, %v1116
      %v1142 = vmul.f32 %v1032, %v1116
      %v1143 = vmul.f32 %v1033, %v1116
      %v1144 = vmul.f32 %v1034, %v1116
      %v1145 = vmul.f32 %v1035, %v1116
      %v1146 = vmul.f32 %v1036, %v1116
      %v1147 = vmul.f32 %v1037, %v1116
      %v1148 = vmul.f32 %v1038, %v1116
      %v1149 = vadd.f32 %v1080, %v1117
      %v1150 = vadd.f32 %v1081, %v1118
      %v1151 = vadd.f32 %v1082, %v1119
      %v1152 = vadd.f32 %v1083, %v1120
      %v1153 = vadd.f32 %v1084, %v1121
      %v1154 = vadd.f32 %v1085, %v1122
      %v1155 = vadd.f32 %v1086, %v1123
      %v1156 = vadd.f32 %v1087, %v1124
      %v1157 = vadd.f32 %v1088, %v1125
      %v1158 = vadd.f32 %v1089, %v1126
      %v1159 = vadd.f32 %v1090, %v1127
      %v1160 = vadd.f32 %v1091, %v1128
      %v1161 = vadd.f32 %v1092, %v1129
      %v1162 = vadd.f32 %v1093, %v1130
      %v1163 = vadd.f32 %v1094, %v1131
      %v1164 = vadd.f32 %v1095, %v1132
      %v1165 = vadd.f32 %v1096, %v1133
      %v1166 = vadd.f32 %v1097, %v1134
      %v1167 = vadd.f32 %v1098, %v1135
      %v1168 = vadd.f32 %v1099, %v1136
      %v1169 = vadd.f32 %v1100, %v1137
      %v1170 = vadd.f32 %v1101, %v1138
      %v1171 = vadd.f32 %v1102, %v1139
      %v1172 = vadd.f32 %v1103, %v1140
      %v1173 = vadd.f32 %v1104, %v1141
      %v1174 = vadd.f32 %v1105, %v1142
      %v1175 = vadd.f32 %v1106, %v1143
      %v1176 = vadd.f32 %v1107, %v1144
      %v1177 = vadd.f32 %v1108, %v1145
      %v1178 = vadd.f32 %v1109, %v1146
      %v1179 = vadd.f32 %v1110, %v1147
      %v1180 = vadd.f32 %v1111, %v1148
      %v1181 = vld [vmem:[%s1 + $0x8] sm:$0x1]
      %v1182 = vlaneseq
      %v1183 = vshrl.u32 %v1182, 7
      %v1184 = vsub.s32 0, %v1183
      %v1185 = vrot.slane %v1181, %v1184
      %v1186 = vmul.f32 %v1011, %v1185
      %v1187 = vmul.f32 %v1012, %v1185
      %v1188 = vmul.f32 %v1013, %v1185
      %v1189 = vmul.f32 %v1014, %v1185
      %v1190 = vmul.f32 %v1015, %v1185
      %v1191 = vmul.f32 %v1016, %v1185
      %v1192 = vmul.f32 %v1017, %v1185
      %v1193 = vmul.f32 %v1018, %v1185
      %v1194 = vmul.f32 %v1019, %v1185
      %v1195 = vmul.f32 %v1020, %v1185
      %v1196 = vmul.f32 %v1021, %v1185
      %v1197 = vmul.f32 %v1022, %v1185
      %v1198 = vmul.f32 %v1023, %v1185
      %v1199 = vmul.f32 %v1024, %v1185
      %v1200 = vmul.f32 %v1025, %v1185
      %v1201 = vmul.f32 %v1026, %v1185
      %v1202 = vmul.f32 %v1027, %v1185
      %v1203 = vmul.f32 %v1028, %v1185
      %v1204 = vmul.f32 %v1029, %v1185
      %v1205 = vmul.f32 %v1030, %v1185
      %v1206 = vmul.f32 %v1031, %v1185
      %v1207 = vmul.f32 %v1032, %v1185
      %v1208 = vmul.f32 %v1033, %v1185
      %v1209 = vmul.f32 %v1034, %v1185
      %v1210 = vmul.f32 %v1035, %v1185
      %v1211 = vmul.f32 %v1036, %v1185
      %v1212 = vmul.f32 %v1037, %v1185
      %v1213 = vmul.f32 %v1038, %v1185
      %v1214 = vmul.f32 %v1039, %v1185
      %v1215 = vmul.f32 %v1040, %v1185
      %v1216 = vmul.f32 %v1041, %v1185
      %v1217 = vmul.f32 %v1042, %v1185
      %v1218 = vadd.f32 %v1149, %v1186
      %v1219 = vadd.f32 %v1150, %v1187
      %v1220 = vadd.f32 %v1151, %v1188
      %v1221 = vadd.f32 %v1152, %v1189
      %v1222 = vadd.f32 %v1153, %v1190
      %v1223 = vadd.f32 %v1154, %v1191
      %v1224 = vadd.f32 %v1155, %v1192
      %v1225 = vadd.f32 %v1156, %v1193
      %v1226 = vadd.f32 %v1157, %v1194
      %v1227 = vadd.f32 %v1158, %v1195
      %v1228 = vadd.f32 %v1159, %v1196
      %v1229 = vadd.f32 %v1160, %v1197
      %v1230 = vadd.f32 %v1161, %v1198
      %v1231 = vadd.f32 %v1162, %v1199
      %v1232 = vadd.f32 %v1163, %v1200
      %v1233 = vadd.f32 %v1164, %v1201
      %v1234 = vadd.f32 %v1165, %v1202
      %v1235 = vadd.f32 %v1166, %v1203
      %v1236 = vadd.f32 %v1167, %v1204
      %v1237 = vadd.f32 %v1168, %v1205
      %v1238 = vadd.f32 %v1169, %v1206
      %v1239 = vadd.f32 %v1170, %v1207
      %v1240 = vadd.f32 %v1171, %v1208
      %v1241 = vadd.f32 %v1172, %v1209
      %v1242 = vadd.f32 %v1173, %v1210
      %v1243 = vadd.f32 %v1174, %v1211
      %v1244 = vadd.f32 %v1175, %v1212
      %v1245 = vadd.f32 %v1176, %v1213
      %v1246 = vadd.f32 %v1177, %v1214
      %v1247 = vadd.f32 %v1178, %v1215
      %v1248 = vadd.f32 %v1179, %v1216
      %v1249 = vadd.f32 %v1180, %v1217
      %v1250 = vld [vmem:[#allocation2 + $0x19] sm:$0xff]
      %v1251 = vld [vmem:[#allocation2 + $0x21] sm:$0xff]
      %v1252 = vld [vmem:[#allocation2 + $0x31] sm:$0xff]
      %v1253 = vld [vmem:[#allocation2 + $0x39] sm:$0xff]
      %v1254 = vld [vmem:[#allocation2 + $0x49] sm:$0xff]
      %v1255 = vld [vmem:[#allocation2 + $0x51] sm:$0xff]
      %v1256 = vld [vmem:[#allocation2 + $0x61] sm:$0xff]
      %v1257 = vld [vmem:[#allocation2 + $0x69] sm:$0xff]
      %v1258 = vld [vmem:[#allocation2 + $0x79] sm:$0xff]
      %v1259 = vld [vmem:[#allocation2 + $0x81] sm:$0xff]
      %v1260 = vld [vmem:[#allocation2 + $0x91] sm:$0xff]
      %v1261 = vld [vmem:[#allocation2 + $0x99] sm:$0xff]
      %v1262 = vld [vmem:[#allocation2 + $0xa9] sm:$0xff]
      %v1263 = vld [vmem:[#allocation2 + $0xb1] sm:$0xff]
      %v1264 = vld [vmem:[#allocation2 + $0xc1] sm:$0xff]
      %v1265 = vld [vmem:[#allocation2 + $0xc9] sm:$0xff]
      %v1266 = vld [vmem:[#allocation2 + $0xd9] sm:$0xff]
      %v1267 = vld [vmem:[#allocation2 + $0xe1] sm:$0xff]
      %v1268 = vld [vmem:[#allocation2 + $0xf1] sm:$0xff]
      %v1269 = vld [vmem:[#allocation2 + $0xf9] sm:$0xff]
      %v1270 = vld [vmem:[#allocation2 + $0x109] sm:$0xff]
      %v1271 = vld [vmem:[#allocation2 + $0x111] sm:$0xff]
      %v1272 = vld [vmem:[#allocation2 + $0x121] sm:$0xff]
      %v1273 = vld [vmem:[#allocation2 + $0x129] sm:$0xff]
      %v1274 = vld [vmem:[#allocation2 + $0x139] sm:$0xff]
      %v1275 = vld [vmem:[#allocation2 + $0x141] sm:$0xff]
      %v1276 = vld [vmem:[#allocation2 + $0x151] sm:$0xff]
      %v1277 = vld [vmem:[#allocation2 + $0x159] sm:$0xff]
      %v1278 = vld [vmem:[#allocation2 + $0x169] sm:$0xff]
      %v1279 = vld [vmem:[#allocation2 + $0x171] sm:$0xff]
      %v1280 = vld [vmem:[#allocation2 + $0x181] sm:$0xff]
      %v1281 = vld [vmem:[#allocation2 + $0x189] sm:$0xff]
      %v1282 = vld [vmem:[#allocation2 + $0x199] sm:$0xff]
      %v1283 = vld [vmem:[#allocation2 + $0x1a1] sm:$0xff]
      %v1284 = vld [vmem:[#allocation2 + $0x1b1] sm:$0xff]
      %v1285 = vld [vmem:[#allocation2 + $0x1b9] sm:$0xff]
      %v1286 = vld [vmem:[#allocation2 + $0x1c9] sm:$0xff]
      %v1287 = vld [vmem:[#allocation2 + $0x1d1] sm:$0xff]
      %v1288 = vld [vmem:[#allocation2 + $0x1e1] sm:$0xff]
      %v1289 = vld [vmem:[#allocation2 + $0x1e9] sm:$0xff]
      %v1290 = vld [vmem:[#allocation2 + $0x1f9] sm:$0xff]
      %v1291 = vld [vmem:[#allocation2 + $0x201] sm:$0xff]
      %v1292 = vld [vmem:[#allocation2 + $0x211] sm:$0xff]
      %v1293 = vld [vmem:[#allocation2 + $0x219] sm:$0xff]
      %v1294 = vld [vmem:[%s1 + $0x9] sm:$0x1]
      %v1295 = vlaneseq
      %v1296 = vshrl.u32 %v1295, 7
      %v1297 = vsub.s32 0, %v1296
      %v1298 = vrot.slane %v1294, %v1297
      %v1299 = vmul.f32 %v1250, %v1298
      %v1300 = vmul.f32 %v1251, %v1298
      %v1301 = vmul.f32 %v1252, %v1298
      %v1302 = vmul.f32 %v1253, %v1298
      %v1303 = vmul.f32 %v1254, %v1298
      %v1304 = vmul.f32 %v1255, %v1298
      %v1305 = vmul.f32 %v1256, %v1298
      %v1306 = vmul.f32 %v1257, %v1298
      %v1307 = vmul.f32 %v1258, %v1298
      %v1308 = vmul.f32 %v1259, %v1298
      %v1309 = vmul.f32 %v1260, %v1298
      %v1310 = vmul.f32 %v1261, %v1298
      %v1311 = vmul.f32 %v1262, %v1298
      %v1312 = vmul.f32 %v1263, %v1298
      %v1313 = vmul.f32 %v1264, %v1298
      %v1314 = vmul.f32 %v1265, %v1298
      %v1315 = vmul.f32 %v1266, %v1298
      %v1316 = vmul.f32 %v1267, %v1298
      %v1317 = vmul.f32 %v1268, %v1298
      %v1318 = vmul.f32 %v1269, %v1298
      %v1319 = vmul.f32 %v1270, %v1298
      %v1320 = vmul.f32 %v1271, %v1298
      %v1321 = vmul.f32 %v1272, %v1298
      %v1322 = vmul.f32 %v1273, %v1298
      %v1323 = vmul.f32 %v1274, %v1298
      %v1324 = vmul.f32 %v1275, %v1298
      %v1325 = vmul.f32 %v1276, %v1298
      %v1326 = vmul.f32 %v1277, %v1298
      %v1327 = vmul.f32 %v1278, %v1298
      %v1328 = vmul.f32 %v1279, %v1298
      %v1329 = vmul.f32 %v1280, %v1298
      %v1330 = vmul.f32 %v1281, %v1298
      %v1331 = vadd.f32 %v1299, 0.0
      %v1332 = vadd.f32 %v1300, 0.0
      %v1333 = vadd.f32 %v1301, 0.0
      %v1334 = vadd.f32 %v1302, 0.0
      %v1335 = vadd.f32 %v1303, 0.0
      %v1336 = vadd.f32 %v1304, 0.0
      %v1337 = vadd.f32 %v1305, 0.0
      %v1338 = vadd.f32 %v1306, 0.0
      %v1339 = vadd.f32 %v1307, 0.0
      %v1340 = vadd.f32 %v1308, 0.0
      %v1341 = vadd.f32 %v1309, 0.0
      %v1342 = vadd.f32 %v1310, 0.0
      %v1343 = vadd.f32 %v1311, 0.0
      %v1344 = vadd.f32 %v1312, 0.0
      %v1345 = vadd.f32 %v1313, 0.0
      %v1346 = vadd.f32 %v1314, 0.0
      %v1347 = vadd.f32 %v1315, 0.0
      %v1348 = vadd.f32 %v1316, 0.0
      %v1349 = vadd.f32 %v1317, 0.0
      %v1350 = vadd.f32 %v1318, 0.0
      %v1351 = vadd.f32 %v1319, 0.0
      %v1352 = vadd.f32 %v1320, 0.0
      %v1353 = vadd.f32 %v1321, 0.0
      %v1354 = vadd.f32 %v1322, 0.0
      %v1355 = vadd.f32 %v1323, 0.0
      %v1356 = vadd.f32 %v1324, 0.0
      %v1357 = vadd.f32 %v1325, 0.0
      %v1358 = vadd.f32 %v1326, 0.0
      %v1359 = vadd.f32 %v1327, 0.0
      %v1360 = vadd.f32 %v1328, 0.0
      %v1361 = vadd.f32 %v1329, 0.0
      %v1362 = vadd.f32 %v1330, 0.0
      %v1363 = vld [vmem:[%s1 + $0xc] sm:$0x1]
      %v1364 = vlaneseq
      %v1365 = vshrl.u32 %v1364, 7
      %v1366 = vsub.s32 0, %v1365
      %v1367 = vrot.slane %v1363, %v1366
      %v1368 = vmul.f32 %v1256, %v1367
      %v1369 = vmul.f32 %v1257, %v1367
      %v1370 = vmul.f32 %v1258, %v1367
      %v1371 = vmul.f32 %v1259, %v1367
      %v1372 = vmul.f32 %v1260, %v1367
      %v1373 = vmul.f32 %v1261, %v1367
      %v1374 = vmul.f32 %v1262, %v1367
      %v1375 = vmul.f32 %v1263, %v1367
      %v1376 = vmul.f32 %v1264, %v1367
      %v1377 = vmul.f32 %v1265, %v1367
      %v1378 = vmul.f32 %v1266, %v1367
      %v1379 = vmul.f32 %v1267, %v1367
      %v1380 = vmul.f32 %v1268, %v1367
      %v1381 = vmul.f32 %v1269, %v1367
      %v1382 = vmul.f32 %v1270, %v1367
      %v1383 = vmul.f32 %v1271, %v1367
      %v1384 = vmul.f32 %v1272, %v1367
      %v1385 = vmul.f32 %v1273, %v1367
      %v1386 = vmul.f32 %v1274, %v1367
      %v1387 = vmul.f32 %v1275, %v1367
      %v1388 = vmul.f32 %v1276, %v1367
      %v1389 = vmul.f32 %v1277, %v1367
      %v1390 = vmul.f32 %v1278, %v1367
      %v1391 = vmul.f32 %v1279, %v1367
      %v1392 = vmul.f32 %v1280, %v1367
      %v1393 = vmul.f32 %v1281, %v1367
      %v1394 = vmul.f32 %v1282, %v1367
      %v1395 = vmul.f32 %v1283, %v1367
      %v1396 = vmul.f32 %v1284, %v1367
      %v1397 = vmul.f32 %v1285, %v1367
      %v1398 = vmul.f32 %v1286, %v1367
      %v1399 = vmul.f32 %v1287, %v1367
      %v1400 = vadd.f32 %v1331, %v1368
      %v1401 = vadd.f32 %v1332, %v1369
      %v1402 = vadd.f32 %v1333, %v1370
      %v1403 = vadd.f32 %v1334, %v1371
      %v1404 = vadd.f32 %v1335, %v1372
      %v1405 = vadd.f32 %v1336, %v1373
      %v1406 = vadd.f32 %v1337, %v1374
      %v1407 = vadd.f32 %v1338, %v1375
      %v1408 = vadd.f32 %v1339, %v1376
      %v1409 = vadd.f32 %v1340, %v1377
      %v1410 = vadd.f32 %v1341, %v1378
      %v1411 = vadd.f32 %v1342, %v1379
      %v1412 = vadd.f32 %v1343, %v1380
      %v1413 = vadd.f32 %v1344, %v1381
      %v1414 = vadd.f32 %v1345, %v1382
      %v1415 = vadd.f32 %v1346, %v1383
      %v1416 = vadd.f32 %v1347, %v1384
      %v1417 = vadd.f32 %v1348, %v1385
      %v1418 = vadd.f32 %v1349, %v1386
      %v1419 = vadd.f32 %v1350, %v1387
      %v1420 = vadd.f32 %v1351, %v1388
      %v1421 = vadd.f32 %v1352, %v1389
      %v1422 = vadd.f32 %v1353, %v1390
      %v1423 = vadd.f32 %v1354, %v1391
      %v1424 = vadd.f32 %v1355, %v1392
      %v1425 = vadd.f32 %v1356, %v1393
      %v1426 = vadd.f32 %v1357, %v1394
      %v1427 = vadd.f32 %v1358, %v1395
      %v1428 = vadd.f32 %v1359, %v1396
      %v1429 = vadd.f32 %v1360, %v1397
      %v1430 = vadd.f32 %v1361, %v1398
      %v1431 = vadd.f32 %v1362, %v1399
      %v1432 = vld [vmem:[%s1 + $0xf] sm:$0x1]
      %v1433 = vlaneseq
      %v1434 = vshrl.u32 %v1433, 7
      %v1435 = vsub.s32 0, %v1434
      %v1436 = vrot.slane %v1432, %v1435
      %v1437 = vmul.f32 %v1262, %v1436
      %v1438 = vmul.f32 %v1263, %v1436
      %v1439 = vmul.f32 %v1264, %v1436
      %v1440 = vmul.f32 %v1265, %v1436
      %v1441 = vmul.f32 %v1266, %v1436
      %v1442 = vmul.f32 %v1267, %v1436
      %v1443 = vmul.f32 %v1268, %v1436
      %v1444 = vmul.f32 %v1269, %v1436
      %v1445 = vmul.f32 %v1270, %v1436
      %v1446 = vmul.f32 %v1271, %v1436
      %v1447 = vmul.f32 %v1272, %v1436
      %v1448 = vmul.f32 %v1273, %v1436
      %v1449 = vmul.f32 %v1274, %v1436
      %v1450 = vmul.f32 %v1275, %v1436
      %v1451 = vmul.f32 %v1276, %v1436
      %v1452 = vmul.f32 %v1277, %v1436
      %v1453 = vmul.f32 %v1278, %v1436
      %v1454 = vmul.f32 %v1279, %v1436
      %v1455 = vmul.f32 %v1280, %v1436
      %v1456 = vmul.f32 %v1281, %v1436
      %v1457 = vmul.f32 %v1282, %v1436
      %v1458 = vmul.f32 %v1283, %v1436
      %v1459 = vmul.f32 %v1284, %v1436
      %v1460 = vmul.f32 %v1285, %v1436
      %v1461 = vmul.f32 %v1286, %v1436
      %v1462 = vmul.f32 %v1287, %v1436
      %v1463 = vmul.f32 %v1288, %v1436
      %v1464 = vmul.f32 %v1289, %v1436
      %v1465 = vmul.f32 %v1290, %v1436
      %v1466 = vmul.f32 %v1291, %v1436
      %v1467 = vmul.f32 %v1292, %v1436
      %v1468 = vmul.f32 %v1293, %v1436
      %v1469 = vadd.f32 %v1400, %v1437
      %v1470 = vadd.f32 %v1401, %v1438
      %v1471 = vadd.f32 %v1402, %v1439
      %v1472 = vadd.f32 %v1403, %v1440
      %v1473 = vadd.f32 %v1404, %v1441
      %v1474 = vadd.f32 %v1405, %v1442
      %v1475 = vadd.f32 %v1406, %v1443
      %v1476 = vadd.f32 %v1407, %v1444
      %v1477 = vadd.f32 %v1408, %v1445
      %v1478 = vadd.f32 %v1409, %v1446
      %v1479 = vadd.f32 %v1410, %v1447
      %v1480 = vadd.f32 %v1411, %v1448
      %v1481 = vadd.f32 %v1412, %v1449
      %v1482 = vadd.f32 %v1413, %v1450
      %v1483 = vadd.f32 %v1414, %v1451
      %v1484 = vadd.f32 %v1415, %v1452
      %v1485 = vadd.f32 %v1416, %v1453
      %v1486 = vadd.f32 %v1417, %v1454
      %v1487 = vadd.f32 %v1418, %v1455
      %v1488 = vadd.f32 %v1419, %v1456
      %v1489 = vadd.f32 %v1420, %v1457
      %v1490 = vadd.f32 %v1421, %v1458
      %v1491 = vadd.f32 %v1422, %v1459
      %v1492 = vadd.f32 %v1423, %v1460
      %v1493 = vadd.f32 %v1424, %v1461
      %v1494 = vadd.f32 %v1425, %v1462
      %v1495 = vadd.f32 %v1426, %v1463
      %v1496 = vadd.f32 %v1427, %v1464
      %v1497 = vadd.f32 %v1428, %v1465
      %v1498 = vadd.f32 %v1429, %v1466
      %v1499 = vadd.f32 %v1430, %v1467
      %v1500 = vadd.f32 %v1431, %v1468
      %v1501 = vld [vmem:[%s1 + $0xa] sm:$0x1]
      %v1502 = vlaneseq
      %v1503 = vshrl.u32 %v1502, 7
      %v1504 = vsub.s32 0, %v1503
      %v1505 = vrot.slane %v1501, %v1504
      %v1506 = vmul.f32 %v750, %v1505
      %v1507 = vmul.f32 %v751, %v1505
      %v1508 = vmul.f32 %v752, %v1505
      %v1509 = vmul.f32 %v753, %v1505
      %v1510 = vmul.f32 %v754, %v1505
      %v1511 = vmul.f32 %v755, %v1505
      %v1512 = vmul.f32 %v756, %v1505
      %v1513 = vmul.f32 %v757, %v1505
      %v1514 = vmul.f32 %v758, %v1505
      %v1515 = vmul.f32 %v759, %v1505
      %v1516 = vmul.f32 %v760, %v1505
      %v1517 = vmul.f32 %v761, %v1505
      %v1518 = vmul.f32 %v762, %v1505
      %v1519 = vmul.f32 %v763, %v1505
      %v1520 = vmul.f32 %v764, %v1505
      %v1521 = vmul.f32 %v765, %v1505
      %v1522 = vmul.f32 %v766, %v1505
      %v1523 = vmul.f32 %v767, %v1505
      %v1524 = vmul.f32 %v768, %v1505
      %v1525 = vmul.f32 %v769, %v1505
      %v1526 = vmul.f32 %v770, %v1505
      %v1527 = vmul.f32 %v771, %v1505
      %v1528 = vmul.f32 %v772, %v1505
      %v1529 = vmul.f32 %v773, %v1505
      %v1530 = vmul.f32 %v774, %v1505
      %v1531 = vmul.f32 %v775, %v1505
      %v1532 = vmul.f32 %v776, %v1505
      %v1533 = vmul.f32 %v777, %v1505
      %v1534 = vmul.f32 %v778, %v1505
      %v1535 = vmul.f32 %v779, %v1505
      %v1536 = vmul.f32 %v780, %v1505
      %v1537 = vmul.f32 %v781, %v1505
      %v1538 = vadd.f32 %v1469, %v1506
      %v1539 = vadd.f32 %v1470, %v1507
      %v1540 = vadd.f32 %v1471, %v1508
      %v1541 = vadd.f32 %v1472, %v1509
      %v1542 = vadd.f32 %v1473, %v1510
      %v1543 = vadd.f32 %v1474, %v1511
      %v1544 = vadd.f32 %v1475, %v1512
      %v1545 = vadd.f32 %v1476, %v1513
      %v1546 = vadd.f32 %v1477, %v1514
      %v1547 = vadd.f32 %v1478, %v1515
      %v1548 = vadd.f32 %v1479, %v1516
      %v1549 = vadd.f32 %v1480, %v1517
      %v1550 = vadd.f32 %v1481, %v1518
      %v1551 = vadd.f32 %v1482, %v1519
      %v1552 = vadd.f32 %v1483, %v1520
      %v1553 = vadd.f32 %v1484, %v1521
      %v1554 = vadd.f32 %v1485, %v1522
      %v1555 = vadd.f32 %v1486, %v1523
      %v1556 = vadd.f32 %v1487, %v1524
      %v1557 = vadd.f32 %v1488, %v1525
      %v1558 = vadd.f32 %v1489, %v1526
      %v1559 = vadd.f32 %v1490, %v1527
      %v1560 = vadd.f32 %v1491, %v1528
      %v1561 = vadd.f32 %v1492, %v1529
      %v1562 = vadd.f32 %v1493, %v1530
      %v1563 = vadd.f32 %v1494, %v1531
      %v1564 = vadd.f32 %v1495, %v1532
      %v1565 = vadd.f32 %v1496, %v1533
      %v1566 = vadd.f32 %v1497, %v1534
      %v1567 = vadd.f32 %v1498, %v1535
      %v1568 = vadd.f32 %v1499, %v1536
      %v1569 = vadd.f32 %v1500, %v1537
      %v1570 = vld [vmem:[%s1 + $0xd] sm:$0x1]
      %v1571 = vlaneseq
      %v1572 = vshrl.u32 %v1571, 7
      %v1573 = vsub.s32 0, %v1572
      %v1574 = vrot.slane %v1570, %v1573
      %v1575 = vmul.f32 %v756, %v1574
      %v1576 = vmul.f32 %v757, %v1574
      %v1577 = vmul.f32 %v758, %v1574
      %v1578 = vmul.f32 %v759, %v1574
      %v1579 = vmul.f32 %v760, %v1574
      %v1580 = vmul.f32 %v761, %v1574
      %v1581 = vmul.f32 %v762, %v1574
      %v1582 = vmul.f32 %v763, %v1574
      %v1583 = vmul.f32 %v764, %v1574
      %v1584 = vmul.f32 %v765, %v1574
      %v1585 = vmul.f32 %v766, %v1574
      %v1586 = vmul.f32 %v767, %v1574
      %v1587 = vmul.f32 %v768, %v1574
      %v1588 = vmul.f32 %v769, %v1574
      %v1589 = vmul.f32 %v770, %v1574
      %v1590 = vmul.f32 %v771, %v1574
      %v1591 = vmul.f32 %v772, %v1574
      %v1592 = vmul.f32 %v773, %v1574
      %v1593 = vmul.f32 %v774, %v1574
      %v1594 = vmul.f32 %v775, %v1574
      %v1595 = vmul.f32 %v776, %v1574
      %v1596 = vmul.f32 %v777, %v1574
      %v1597 = vmul.f32 %v778, %v1574
      %v1598 = vmul.f32 %v779, %v1574
      %v1599 = vmul.f32 %v780, %v1574
      %v1600 = vmul.f32 %v781, %v1574
      %v1601 = vmul.f32 %v782, %v1574
      %v1602 = vmul.f32 %v783, %v1574
      %v1603 = vmul.f32 %v784, %v1574
      %v1604 = vmul.f32 %v785, %v1574
      %v1605 = vmul.f32 %v786, %v1574
      %v1606 = vmul.f32 %v787, %v1574
      %v1607 = vadd.f32 %v1538, %v1575
      %v1608 = vadd.f32 %v1539, %v1576
      %v1609 = vadd.f32 %v1540, %v1577
      %v1610 = vadd.f32 %v1541, %v1578
      %v1611 = vadd.f32 %v1542, %v1579
      %v1612 = vadd.f32 %v1543, %v1580
      %v1613 = vadd.f32 %v1544, %v1581
      %v1614 = vadd.f32 %v1545, %v1582
      %v1615 = vadd.f32 %v1546, %v1583
      %v1616 = vadd.f32 %v1547, %v1584
      %v1617 = vadd.f32 %v1548, %v1585
      %v1618 = vadd.f32 %v1549, %v1586
      %v1619 = vadd.f32 %v1550, %v1587
      %v1620 = vadd.f32 %v1551, %v1588
      %v1621 = vadd.f32 %v1552, %v1589
      %v1622 = vadd.f32 %v1553, %v1590
      %v1623 = vadd.f32 %v1554, %v1591
      %v1624 = vadd.f32 %v1555, %v1592
      %v1625 = vadd.f32 %v1556, %v1593
      %v1626 = vadd.f32 %v1557, %v1594
      %v1627 = vadd.f32 %v1558, %v1595
      %v1628 = vadd.f32 %v1559, %v1596
      %v1629 = vadd.f32 %v1560, %v1597
      %v1630 = vadd.f32 %v1561, %v1598
      %v1631 = vadd.f32 %v1562, %v1599
      %v1632 = vadd.f32 %v1563, %v1600
      %v1633 = vadd.f32 %v1564, %v1601
      %v1634 = vadd.f32 %v1565, %v1602
      %v1635 = vadd.f32 %v1566, %v1603
      %v1636 = vadd.f32 %v1567, %v1604
      %v1637 = vadd.f32 %v1568, %v1605
      %v1638 = vadd.f32 %v1569, %v1606
      %v1639 = vld [vmem:[%s1 + $0x10] sm:$0x1]
      %v1640 = vlaneseq
      %v1641 = vshrl.u32 %v1640, 7
      %v1642 = vsub.s32 0, %v1641
      %v1643 = vrot.slane %v1639, %v1642
      %v1644 = vmul.f32 %v762, %v1643
      %v1645 = vmul.f32 %v763, %v1643
      %v1646 = vmul.f32 %v764, %v1643
      %v1647 = vmul.f32 %v765, %v1643
      %v1648 = vmul.f32 %v766, %v1643
      %v1649 = vmul.f32 %v767, %v1643
      %v1650 = vmul.f32 %v768, %v1643
      %v1651 = vmul.f32 %v769, %v1643
      %v1652 = vmul.f32 %v770, %v1643
      %v1653 = vmul.f32 %v771, %v1643
      %v1654 = vmul.f32 %v772, %v1643
      %v1655 = vmul.f32 %v773, %v1643
      %v1656 = vmul.f32 %v774, %v1643
      %v1657 = vmul.f32 %v775, %v1643
      %v1658 = vmul.f32 %v776, %v1643
      %v1659 = vmul.f32 %v777, %v1643
      %v1660 = vmul.f32 %v778, %v1643
      %v1661 = vmul.f32 %v779, %v1643
      %v1662 = vmul.f32 %v780, %v1643
      %v1663 = vmul.f32 %v781, %v1643
      %v1664 = vmul.f32 %v782, %v1643
      %v1665 = vmul.f32 %v783, %v1643
      %v1666 = vmul.f32 %v784, %v1643
      %v1667 = vmul.f32 %v785, %v1643
      %v1668 = vmul.f32 %v786, %v1643
      %v1669 = vmul.f32 %v787, %v1643
      %v1670 = vmul.f32 %v788, %v1643
      %v1671 = vmul.f32 %v789, %v1643
      %v1672 = vmul.f32 %v790, %v1643
      %v1673 = vmul.f32 %v791, %v1643
      %v1674 = vmul.f32 %v792, %v1643
      %v1675 = vmul.f32 %v793, %v1643
      %v1676 = vadd.f32 %v1607, %v1644
      %v1677 = vadd.f32 %v1608, %v1645
      %v1678 = vadd.f32 %v1609, %v1646
      %v1679 = vadd.f32 %v1610, %v1647
      %v1680 = vadd.f32 %v1611, %v1648
      %v1681 = vadd.f32 %v1612, %v1649
      %v1682 = vadd.f32 %v1613, %v1650
      %v1683 = vadd.f32 %v1614, %v1651
      %v1684 = vadd.f32 %v1615, %v1652
      %v1685 = vadd.f32 %v1616, %v1653
      %v1686 = vadd.f32 %v1617, %v1654
      %v1687 = vadd.f32 %v1618, %v1655
      %v1688 = vadd.f32 %v1619, %v1656
      %v1689 = vadd.f32 %v1620, %v1657
      %v1690 = vadd.f32 %v1621, %v1658
      %v1691 = vadd.f32 %v1622, %v1659
      %v1692 = vadd.f32 %v1623, %v1660
      %v1693 = vadd.f32 %v1624, %v1661
      %v1694 = vadd.f32 %v1625, %v1662
      %v1695 = vadd.f32 %v1626, %v1663
      %v1696 = vadd.f32 %v1627, %v1664
      %v1697 = vadd.f32 %v1628, %v1665
      %v1698 = vadd.f32 %v1629, %v1666
      %v1699 = vadd.f32 %v1630, %v1667
      %v1700 = vadd.f32 %v1631, %v1668
      %v1701 = vadd.f32 %v1632, %v1669
      %v1702 = vadd.f32 %v1633, %v1670
      %v1703 = vadd.f32 %v1634, %v1671
      %v1704 = vadd.f32 %v1635, %v1672
      %v1705 = vadd.f32 %v1636, %v1673
      %v1706 = vadd.f32 %v1637, %v1674
      %v1707 = vadd.f32 %v1638, %v1675
      %v1708 = vld [vmem:[#allocation2 + $0x1f] sm:$0xff]
      %v1709 = vld [vmem:[#allocation2 + $0x27] sm:$0xff]
      %v1710 = vld [vmem:[#allocation2 + $0x37] sm:$0xff]
      %v1711 = vld [vmem:[#allocation2 + $0x3f] sm:$0xff]
      %v1712 = vld [vmem:[#allocation2 + $0x4f] sm:$0xff]
      %v1713 = vld [vmem:[#allocation2 + $0x57] sm:$0xff]
      %v1714 = vld [vmem:[#allocation2 + $0x67] sm:$0xff]
      %v1715 = vld [vmem:[#allocation2 + $0x6f] sm:$0xff]
      %v1716 = vld [vmem:[#allocation2 + $0x7f] sm:$0xff]
      %v1717 = vld [vmem:[#allocation2 + $0x87] sm:$0xff]
      %v1718 = vld [vmem:[#allocation2 + $0x97] sm:$0xff]
      %v1719 = vld [vmem:[#allocation2 + $0x9f] sm:$0xff]
      %v1720 = vld [vmem:[#allocation2 + $0xaf] sm:$0xff]
      %v1721 = vld [vmem:[#allocation2 + $0xb7] sm:$0xff]
      %v1722 = vld [vmem:[#allocation2 + $0xc7] sm:$0xff]
      %v1723 = vld [vmem:[#allocation2 + $0xcf] sm:$0xff]
      %v1724 = vld [vmem:[#allocation2 + $0xdf] sm:$0xff]
      %v1725 = vld [vmem:[#allocation2 + $0xe7] sm:$0xff]
      %v1726 = vld [vmem:[#allocation2 + $0xf7] sm:$0xff]
      %v1727 = vld [vmem:[#allocation2 + $0xff] sm:$0xff]
      %v1728 = vld [vmem:[#allocation2 + $0x10f] sm:$0xff]
      %v1729 = vld [vmem:[#allocation2 + $0x117] sm:$0xff]
      %v1730 = vld [vmem:[#allocation2 + $0x127] sm:$0xff]
      %v1731 = vld [vmem:[#allocation2 + $0x12f] sm:$0xff]
      %v1732 = vld [vmem:[#allocation2 + $0x13f] sm:$0xff]
      %v1733 = vld [vmem:[#allocation2 + $0x147] sm:$0xff]
      %v1734 = vld [vmem:[#allocation2 + $0x157] sm:$0xff]
      %v1735 = vld [vmem:[#allocation2 + $0x15f] sm:$0xff]
      %v1736 = vld [vmem:[#allocation2 + $0x16f] sm:$0xff]
      %v1737 = vld [vmem:[#allocation2 + $0x177] sm:$0xff]
      %v1738 = vld [vmem:[#allocation2 + $0x187] sm:$0xff]
      %v1739 = vld [vmem:[#allocation2 + $0x18f] sm:$0xff]
      %v1740 = vld [vmem:[#allocation2 + $0x19f] sm:$0xff]
      %v1741 = vld [vmem:[#allocation2 + $0x1a7] sm:$0xff]
      %v1742 = vld [vmem:[#allocation2 + $0x1b7] sm:$0xff]
      %v1743 = vld [vmem:[#allocation2 + $0x1bf] sm:$0xff]
      %v1744 = vld [vmem:[#allocation2 + $0x1cf] sm:$0xff]
      %v1745 = vld [vmem:[#allocation2 + $0x1d7] sm:$0xff]
      %v1746 = vld [vmem:[#allocation2 + $0x1e7] sm:$0xff]
      %v1747 = vld [vmem:[#allocation2 + $0x1ef] sm:$0xff]
      %v1748 = vld [vmem:[#allocation2 + $0x1ff] sm:$0xff]
      %v1749 = vld [vmem:[#allocation2 + $0x207] sm:$0xff]
      %v1750 = vld [vmem:[#allocation2 + $0x217] sm:$0xff]
      %v1751 = vld [vmem:[#allocation2 + $0x21f] sm:$0xff]
      %v1752 = vld [vmem:[%s1 + $0xb] sm:$0x1]
      %v1753 = vlaneseq
      %v1754 = vshrl.u32 %v1753, 7
      %v1755 = vsub.s32 0, %v1754
      %v1756 = vrot.slane %v1752, %v1755
      %v1757 = vmul.f32 %v1708, %v1756
      %v1758 = vmul.f32 %v1709, %v1756
      %v1759 = vmul.f32 %v1710, %v1756
      %v1760 = vmul.f32 %v1711, %v1756
      %v1761 = vmul.f32 %v1712, %v1756
      %v1762 = vmul.f32 %v1713, %v1756
      %v1763 = vmul.f32 %v1714, %v1756
      %v1764 = vmul.f32 %v1715, %v1756
      %v1765 = vmul.f32 %v1716, %v1756
      %v1766 = vmul.f32 %v1717, %v1756
      %v1767 = vmul.f32 %v1718, %v1756
      %v1768 = vmul.f32 %v1719, %v1756
      %v1769 = vmul.f32 %v1720, %v1756
      %v1770 = vmul.f32 %v1721, %v1756
      %v1771 = vmul.f32 %v1722, %v1756
      %v1772 = vmul.f32 %v1723, %v1756
      %v1773 = vmul.f32 %v1724, %v1756
      %v1774 = vmul.f32 %v1725, %v1756
      %v1775 = vmul.f32 %v1726, %v1756
      %v1776 = vmul.f32 %v1727, %v1756
      %v1777 = vmul.f32 %v1728, %v1756
      %v1778 = vmul.f32 %v1729, %v1756
      %v1779 = vmul.f32 %v1730, %v1756
      %v1780 = vmul.f32 %v1731, %v1756
      %v1781 = vmul.f32 %v1732, %v1756
      %v1782 = vmul.f32 %v1733, %v1756
      %v1783 = vmul.f32 %v1734, %v1756
      %v1784 = vmul.f32 %v1735, %v1756
      %v1785 = vmul.f32 %v1736, %v1756
      %v1786 = vmul.f32 %v1737, %v1756
      %v1787 = vmul.f32 %v1738, %v1756
      %v1788 = vmul.f32 %v1739, %v1756
      %v1789 = vadd.f32 %v1676, %v1757
      %v1790 = vadd.f32 %v1677, %v1758
      %v1791 = vadd.f32 %v1678, %v1759
      %v1792 = vadd.f32 %v1679, %v1760
      %v1793 = vadd.f32 %v1680, %v1761
      %v1794 = vadd.f32 %v1681, %v1762
      %v1795 = vadd.f32 %v1682, %v1763
      %v1796 = vadd.f32 %v1683, %v1764
      %v1797 = vadd.f32 %v1684, %v1765
      %v1798 = vadd.f32 %v1685, %v1766
      %v1799 = vadd.f32 %v1686, %v1767
      %v1800 = vadd.f32 %v1687, %v1768
      %v1801 = vadd.f32 %v1688, %v1769
      %v1802 = vadd.f32 %v1689, %v1770
      %v1803 = vadd.f32 %v1690, %v1771
      %v1804 = vadd.f32 %v1691, %v1772
      %v1805 = vadd.f32 %v1692, %v1773
      %v1806 = vadd.f32 %v1693, %v1774
      %v1807 = vadd.f32 %v1694, %v1775
      %v1808 = vadd.f32 %v1695, %v1776
      %v1809 = vadd.f32 %v1696, %v1777
      %v1810 = vadd.f32 %v1697, %v1778
      %v1811 = vadd.f32 %v1698, %v1779
      %v1812 = vadd.f32 %v1699, %v1780
      %v1813 = vadd.f32 %v1700, %v1781
      %v1814 = vadd.f32 %v1701, %v1782
      %v1815 = vadd.f32 %v1702, %v1783
      %v1816 = vadd.f32 %v1703, %v1784
      %v1817 = vadd.f32 %v1704, %v1785
      %v1818 = vadd.f32 %v1705, %v1786
      %v1819 = vadd.f32 %v1706, %v1787
      %v1820 = vadd.f32 %v1707, %v1788
      %v1821 = vld [vmem:[%s1 + $0xe] sm:$0x1]
      %v1822 = vlaneseq
      %v1823 = vshrl.u32 %v1822, 7
      %v1824 = vsub.s32 0, %v1823
      %v1825 = vrot.slane %v1821, %v1824
      %v1826 = vmul.f32 %v1714, %v1825
      %v1827 = vmul.f32 %v1715, %v1825
      %v1828 = vmul.f32 %v1716, %v1825
      %v1829 = vmul.f32 %v1717, %v1825
      %v1830 = vmul.f32 %v1718, %v1825
      %v1831 = vmul.f32 %v1719, %v1825
      %v1832 = vmul.f32 %v1720, %v1825
      %v1833 = vmul.f32 %v1721, %v1825
      %v1834 = vmul.f32 %v1722, %v1825
      %v1835 = vmul.f32 %v1723, %v1825
      %v1836 = vmul.f32 %v1724, %v1825
      %v1837 = vmul.f32 %v1725, %v1825
      %v1838 = vmul.f32 %v1726, %v1825
      %v1839 = vmul.f32 %v1727, %v1825
      %v1840 = vmul.f32 %v1728, %v1825
      %v1841 = vmul.f32 %v1729, %v1825
      %v1842 = vmul.f32 %v1730, %v1825
      %v1843 = vmul.f32 %v1731, %v1825
      %v1844 = vmul.f32 %v1732, %v1825
      %v1845 = vmul.f32 %v1733, %v1825
      %v1846 = vmul.f32 %v1734, %v1825
      %v1847 = vmul.f32 %v1735, %v1825
      %v1848 = vmul.f32 %v1736, %v1825
      %v1849 = vmul.f32 %v1737, %v1825
      %v1850 = vmul.f32 %v1738, %v1825
      %v1851 = vmul.f32 %v1739, %v1825
      %v1852 = vmul.f32 %v1740, %v1825
      %v1853 = vmul.f32 %v1741, %v1825
      %v1854 = vmul.f32 %v1742, %v1825
      %v1855 = vmul.f32 %v1743, %v1825
      %v1856 = vmul.f32 %v1744, %v1825
      %v1857 = vmul.f32 %v1745, %v1825
      %v1858 = vadd.f32 %v1789, %v1826
      %v1859 = vadd.f32 %v1790, %v1827
      %v1860 = vadd.f32 %v1791, %v1828
      %v1861 = vadd.f32 %v1792, %v1829
      %v1862 = vadd.f32 %v1793, %v1830
      %v1863 = vadd.f32 %v1794, %v1831
      %v1864 = vadd.f32 %v1795, %v1832
      %v1865 = vadd.f32 %v1796, %v1833
      %v1866 = vadd.f32 %v1797, %v1834
      %v1867 = vadd.f32 %v1798, %v1835
      %v1868 = vadd.f32 %v1799, %v1836
      %v1869 = vadd.f32 %v1800, %v1837
      %v1870 = vadd.f32 %v1801, %v1838
      %v1871 = vadd.f32 %v1802, %v1839
      %v1872 = vadd.f32 %v1803, %v1840
      %v1873 = vadd.f32 %v1804, %v1841
      %v1874 = vadd.f32 %v1805, %v1842
      %v1875 = vadd.f32 %v1806, %v1843
      %v1876 = vadd.f32 %v1807, %v1844
      %v1877 = vadd.f32 %v1808, %v1845
      %v1878 = vadd.f32 %v1809, %v1846
      %v1879 = vadd.f32 %v1810, %v1847
      %v1880 = vadd.f32 %v1811, %v1848
      %v1881 = vadd.f32 %v1812, %v1849
      %v1882 = vadd.f32 %v1813, %v1850
      %v1883 = vadd.f32 %v1814, %v1851
      %v1884 = vadd.f32 %v1815, %v1852
      %v1885 = vadd.f32 %v1816, %v1853
      %v1886 = vadd.f32 %v1817, %v1854
      %v1887 = vadd.f32 %v1818, %v1855
      %v1888 = vadd.f32 %v1819, %v1856
      %v1889 = vadd.f32 %v1820, %v1857
      %v1890 = vld [vmem:[%s1 + $0x11] sm:$0x1]
      %v1891 = vlaneseq
      %v1892 = vshrl.u32 %v1891, 7
      %v1893 = vsub.s32 0, %v1892
      %v1894 = vrot.slane %v1890, %v1893
      %v1895 = vmul.f32 %v1720, %v1894
      %v1896 = vmul.f32 %v1721, %v1894
      %v1897 = vmul.f32 %v1722, %v1894
      %v1898 = vmul.f32 %v1723, %v1894
      %v1899 = vmul.f32 %v1724, %v1894
      %v1900 = vmul.f32 %v1725, %v1894
      %v1901 = vmul.f32 %v1726, %v1894
      %v1902 = vmul.f32 %v1727, %v1894
      %v1903 = vmul.f32 %v1728, %v1894
      %v1904 = vmul.f32 %v1729, %v1894
      %v1905 = vmul.f32 %v1730, %v1894
      %v1906 = vmul.f32 %v1731, %v1894
      %v1907 = vmul.f32 %v1732, %v1894
      %v1908 = vmul.f32 %v1733, %v1894
      %v1909 = vmul.f32 %v1734, %v1894
      %v1910 = vmul.f32 %v1735, %v1894
      %v1911 = vmul.f32 %v1736, %v1894
      %v1912 = vmul.f32 %v1737, %v1894
      %v1913 = vmul.f32 %v1738, %v1894
      %v1914 = vmul.f32 %v1739, %v1894
      %v1915 = vmul.f32 %v1740, %v1894
      %v1916 = vmul.f32 %v1741, %v1894
      %v1917 = vmul.f32 %v1742, %v1894
      %v1918 = vmul.f32 %v1743, %v1894
      %v1919 = vmul.f32 %v1744, %v1894
      %v1920 = vmul.f32 %v1745, %v1894
      %v1921 = vmul.f32 %v1746, %v1894
      %v1922 = vmul.f32 %v1747, %v1894
      %v1923 = vmul.f32 %v1748, %v1894
      %v1924 = vmul.f32 %v1749, %v1894
      %v1925 = vmul.f32 %v1750, %v1894
      %v1926 = vmul.f32 %v1751, %v1894
      %v1927 = vadd.f32 %v1858, %v1895
      %v1928 = vadd.f32 %v1859, %v1896
      %v1929 = vadd.f32 %v1860, %v1897
      %v1930 = vadd.f32 %v1861, %v1898
      %v1931 = vadd.f32 %v1862, %v1899
      %v1932 = vadd.f32 %v1863, %v1900
      %v1933 = vadd.f32 %v1864, %v1901
      %v1934 = vadd.f32 %v1865, %v1902
      %v1935 = vadd.f32 %v1866, %v1903
      %v1936 = vadd.f32 %v1867, %v1904
      %v1937 = vadd.f32 %v1868, %v1905
      %v1938 = vadd.f32 %v1869, %v1906
      %v1939 = vadd.f32 %v1870, %v1907
      %v1940 = vadd.f32 %v1871, %v1908
      %v1941 = vadd.f32 %v1872, %v1909
      %v1942 = vadd.f32 %v1873, %v1910
      %v1943 = vadd.f32 %v1874, %v1911
      %v1944 = vadd.f32 %v1875, %v1912
      %v1945 = vadd.f32 %v1876, %v1913
      %v1946 = vadd.f32 %v1877, %v1914
      %v1947 = vadd.f32 %v1878, %v1915
      %v1948 = vadd.f32 %v1879, %v1916
      %v1949 = vadd.f32 %v1880, %v1917
      %v1950 = vadd.f32 %v1881, %v1918
      %v1951 = vadd.f32 %v1882, %v1919
      %v1952 = vadd.f32 %v1883, %v1920
      %v1953 = vadd.f32 %v1884, %v1921
      %v1954 = vadd.f32 %v1885, %v1922
      %v1955 = vadd.f32 %v1886, %v1923
      %v1956 = vadd.f32 %v1887, %v1924
      %v1957 = vadd.f32 %v1888, %v1925
      %v1958 = vadd.f32 %v1889, %v1926
      %v1959 = vld [vmem:[#allocation2] sm:$0xff]
      %v1960 = vld [vmem:[#allocation2 + $0x8] sm:$0xff]
      %v1961 = vld [vmem:[#allocation2 + $0x18] sm:$0xff]
      %v1962 = vld [vmem:[#allocation2 + $0x20] sm:$0xff]
      %v1963 = vld [vmem:[#allocation2 + $0x30] sm:$0xff]
      %v1964 = vld [vmem:[#allocation2 + $0x38] sm:$0xff]
      %v1965 = vld [vmem:[#allocation2 + $0x48] sm:$0xff]
      %v1966 = vld [vmem:[#allocation2 + $0x50] sm:$0xff]
      %v1967 = vld [vmem:[#allocation2 + $0x60] sm:$0xff]
      %v1968 = vld [vmem:[#allocation2 + $0x68] sm:$0xff]
      %v1969 = vld [vmem:[#allocation2 + $0x78] sm:$0xff]
      %v1970 = vld [vmem:[#allocation2 + $0x80] sm:$0xff]
      %v1971 = vld [vmem:[#allocation2 + $0x90] sm:$0xff]
      %v1972 = vld [vmem:[#allocation2 + $0x98] sm:$0xff]
      %v1973 = vld [vmem:[#allocation2 + $0xa8] sm:$0xff]
      %v1974 = vld [vmem:[#allocation2 + $0xb0] sm:$0xff]
      %v1975 = vld [vmem:[#allocation2 + $0xc0] sm:$0xff]
      %v1976 = vld [vmem:[#allocation2 + $0xc8] sm:$0xff]
      %v1977 = vld [vmem:[#allocation2 + $0xd8] sm:$0xff]
      %v1978 = vld [vmem:[#allocation2 + $0xe0] sm:$0xff]
      %v1979 = vld [vmem:[#allocation2 + $0xf0] sm:$0xff]
      %v1980 = vld [vmem:[#allocation2 + $0xf8] sm:$0xff]
      %v1981 = vld [vmem:[#allocation2 + $0x108] sm:$0xff]
      %v1982 = vld [vmem:[#allocation2 + $0x110] sm:$0xff]
      %v1983 = vld [vmem:[#allocation2 + $0x120] sm:$0xff]
      %v1984 = vld [vmem:[#allocation2 + $0x128] sm:$0xff]
      %v1985 = vld [vmem:[#allocation2 + $0x138] sm:$0xff]
      %v1986 = vld [vmem:[#allocation2 + $0x140] sm:$0xff]
      %v1987 = vld [vmem:[#allocation2 + $0x150] sm:$0xff]
      %v1988 = vld [vmem:[#allocation2 + $0x158] sm:$0xff]
      %v1989 = vld [vmem:[#allocation2 + $0x168] sm:$0xff]
      %v1990 = vld [vmem:[#allocation2 + $0x170] sm:$0xff]
      %v1991 = vld [vmem:[#allocation2 + $0x180] sm:$0xff]
      %v1992 = vld [vmem:[#allocation2 + $0x188] sm:$0xff]
      %v1993 = vld [vmem:[#allocation2 + $0x198] sm:$0xff]
      %v1994 = vld [vmem:[#allocation2 + $0x1a0] sm:$0xff]
      %v1995 = vld [vmem:[#allocation2 + $0x1b0] sm:$0xff]
      %v1996 = vld [vmem:[#allocation2 + $0x1b8] sm:$0xff]
      %v1997 = vld [vmem:[#allocation2 + $0x1c8] sm:$0xff]
      %v1998 = vld [vmem:[#allocation2 + $0x1d0] sm:$0xff]
      %v1999 = vld [vmem:[#allocation2 + $0x1e0] sm:$0xff]
      %v2000 = vld [vmem:[#allocation2 + $0x1e8] sm:$0xff]
      %v2001 = vld [vmem:[#allocation2 + $0x1f8] sm:$0xff]
      %v2002 = vld [vmem:[#allocation2 + $0x200] sm:$0xff]
      %v2003 = vld [vmem:[#allocation2 + $0x210] sm:$0xff]
      %v2004 = vld [vmem:[#allocation2 + $0x218] sm:$0xff]
      %v2005 = vld [vmem:[#allocation2 + $0x228] sm:$0xff]
      %v2006 = vld [vmem:[#allocation2 + $0x230] sm:$0xff]
      %v2007 = vld [vmem:[%s1 + $0x12] sm:$0x1]
      %v2008 = vlaneseq
      %v2009 = vshrl.u32 %v2008, 7
      %v2010 = vsub.s32 0, %v2009
      %v2011 = vrot.slane %v2007, %v2010
      %v2012 = vmul.f32 %v1959, %v2011
      %v2013 = vmul.f32 %v1960, %v2011
      %v2014 = vmul.f32 %v1961, %v2011
      %v2015 = vmul.f32 %v1962, %v2011
      %v2016 = vmul.f32 %v1963, %v2011
      %v2017 = vmul.f32 %v1964, %v2011
      %v2018 = vmul.f32 %v1965, %v2011
      %v2019 = vmul.f32 %v1966, %v2011
      %v2020 = vmul.f32 %v1967, %v2011
      %v2021 = vmul.f32 %v1968, %v2011
      %v2022 = vmul.f32 %v1969, %v2011
      %v2023 = vmul.f32 %v1970, %v2011
      %v2024 = vmul.f32 %v1971, %v2011
      %v2025 = vmul.f32 %v1972, %v2011
      %v2026 = vmul.f32 %v1973, %v2011
      %v2027 = vmul.f32 %v1974, %v2011
      %v2028 = vmul.f32 %v1975, %v2011
      %v2029 = vmul.f32 %v1976, %v2011
      %v2030 = vmul.f32 %v1977, %v2011
      %v2031 = vmul.f32 %v1978, %v2011
      %v2032 = vmul.f32 %v1979, %v2011
      %v2033 = vmul.f32 %v1980, %v2011
      %v2034 = vmul.f32 %v1981, %v2011
      %v2035 = vmul.f32 %v1982, %v2011
      %v2036 = vmul.f32 %v1983, %v2011
      %v2037 = vmul.f32 %v1984, %v2011
      %v2038 = vmul.f32 %v1985, %v2011
      %v2039 = vmul.f32 %v1986, %v2011
      %v2040 = vmul.f32 %v1987, %v2011
      %v2041 = vmul.f32 %v1988, %v2011
      %v2042 = vmul.f32 %v1989, %v2011
      %v2043 = vmul.f32 %v1990, %v2011
      %v2044 = vadd.f32 %v2012, 0.0
      %v2045 = vadd.f32 %v2013, 0.0
      %v2046 = vadd.f32 %v2014, 0.0
      %v2047 = vadd.f32 %v2015, 0.0
      %v2048 = vadd.f32 %v2016, 0.0
      %v2049 = vadd.f32 %v2017, 0.0
      %v2050 = vadd.f32 %v2018, 0.0
      %v2051 = vadd.f32 %v2019, 0.0
      %v2052 = vadd.f32 %v2020, 0.0
      %v2053 = vadd.f32 %v2021, 0.0
      %v2054 = vadd.f32 %v2022, 0.0
      %v2055 = vadd.f32 %v2023, 0.0
      %v2056 = vadd.f32 %v2024, 0.0
      %v2057 = vadd.f32 %v2025, 0.0
      %v2058 = vadd.f32 %v2026, 0.0
      %v2059 = vadd.f32 %v2027, 0.0
      %v2060 = vadd.f32 %v2028, 0.0
      %v2061 = vadd.f32 %v2029, 0.0
      %v2062 = vadd.f32 %v2030, 0.0
      %v2063 = vadd.f32 %v2031, 0.0
      %v2064 = vadd.f32 %v2032, 0.0
      %v2065 = vadd.f32 %v2033, 0.0
      %v2066 = vadd.f32 %v2034, 0.0
      %v2067 = vadd.f32 %v2035, 0.0
      %v2068 = vadd.f32 %v2036, 0.0
      %v2069 = vadd.f32 %v2037, 0.0
      %v2070 = vadd.f32 %v2038, 0.0
      %v2071 = vadd.f32 %v2039, 0.0
      %v2072 = vadd.f32 %v2040, 0.0
      %v2073 = vadd.f32 %v2041, 0.0
      %v2074 = vadd.f32 %v2042, 0.0
      %v2075 = vadd.f32 %v2043, 0.0
      %v2076 = vld [vmem:[%s1 + $0x15] sm:$0x1]
      %v2077 = vlaneseq
      %v2078 = vshrl.u32 %v2077, 7
      %v2079 = vsub.s32 0, %v2078
      %v2080 = vrot.slane %v2076, %v2079
      %v2081 = vmul.f32 %v1967, %v2080
      %v2082 = vmul.f32 %v1968, %v2080
      %v2083 = vmul.f32 %v1969, %v2080
      %v2084 = vmul.f32 %v1970, %v2080
      %v2085 = vmul.f32 %v1971, %v2080
      %v2086 = vmul.f32 %v1972, %v2080
      %v2087 = vmul.f32 %v1973, %v2080
      %v2088 = vmul.f32 %v1974, %v2080
      %v2089 = vmul.f32 %v1975, %v2080
      %v2090 = vmul.f32 %v1976, %v2080
      %v2091 = vmul.f32 %v1977, %v2080
      %v2092 = vmul.f32 %v1978, %v2080
      %v2093 = vmul.f32 %v1979, %v2080
      %v2094 = vmul.f32 %v1980, %v2080
      %v2095 = vmul.f32 %v1981, %v2080
      %v2096 = vmul.f32 %v1982, %v2080
      %v2097 = vmul.f32 %v1983, %v2080
      %v2098 = vmul.f32 %v1984, %v2080
      %v2099 = vmul.f32 %v1985, %v2080
      %v2100 = vmul.f32 %v1986, %v2080
      %v2101 = vmul.f32 %v1987, %v2080
      %v2102 = vmul.f32 %v1988, %v2080
      %v2103 = vmul.f32 %v1989, %v2080
      %v2104 = vmul.f32 %v1990, %v2080
      %v2105 = vmul.f32 %v1991, %v2080
      %v2106 = vmul.f32 %v1992, %v2080
      %v2107 = vmul.f32 %v1993, %v2080
      %v2108 = vmul.f32 %v1994, %v2080
      %v2109 = vmul.f32 %v1995, %v2080
      %v2110 = vmul.f32 %v1996, %v2080
      %v2111 = vmul.f32 %v1997, %v2080
      %v2112 = vmul.f32 %v1998, %v2080
      %v2113 = vadd.f32 %v2044, %v2081
      %v2114 = vadd.f32 %v2045, %v2082
      %v2115 = vadd.f32 %v2046, %v2083
      %v2116 = vadd.f32 %v2047, %v2084
      %v2117 = vadd.f32 %v2048, %v2085
      %v2118 = vadd.f32 %v2049, %v2086
      %v2119 = vadd.f32 %v2050, %v2087
      %v2120 = vadd.f32 %v2051, %v2088
      %v2121 = vadd.f32 %v2052, %v2089
      %v2122 = vadd.f32 %v2053, %v2090
      %v2123 = vadd.f32 %v2054, %v2091
      %v2124 = vadd.f32 %v2055, %v2092
      %v2125 = vadd.f32 %v2056, %v2093
      %v2126 = vadd.f32 %v2057, %v2094
      %v2127 = vadd.f32 %v2058, %v2095
      %v2128 = vadd.f32 %v2059, %v2096
      %v2129 = vadd.f32 %v2060, %v2097
      %v2130 = vadd.f32 %v2061, %v2098
      %v2131 = vadd.f32 %v2062, %v2099
      %v2132 = vadd.f32 %v2063, %v2100
      %v2133 = vadd.f32 %v2064, %v2101
      %v2134 = vadd.f32 %v2065, %v2102
      %v2135 = vadd.f32 %v2066, %v2103
      %v2136 = vadd.f32 %v2067, %v2104
      %v2137 = vadd.f32 %v2068, %v2105
      %v2138 = vadd.f32 %v2069, %v2106
      %v2139 = vadd.f32 %v2070, %v2107
      %v2140 = vadd.f32 %v2071, %v2108
      %v2141 = vadd.f32 %v2072, %v2109
      %v2142 = vadd.f32 %v2073, %v2110
      %v2143 = vadd.f32 %v2074, %v2111
      %v2144 = vadd.f32 %v2075, %v2112
      %v2145 = vld [vmem:[%s1 + $0x18] sm:$0x1]
      %v2146 = vlaneseq
      %v2147 = vshrl.u32 %v2146, 7
      %v2148 = vsub.s32 0, %v2147
      %v2149 = vrot.slane %v2145, %v2148
      %v2150 = vmul.f32 %v1975, %v2149
      %v2151 = vmul.f32 %v1976, %v2149
      %v2152 = vmul.f32 %v1977, %v2149
      %v2153 = vmul.f32 %v1978, %v2149
      %v2154 = vmul.f32 %v1979, %v2149
      %v2155 = vmul.f32 %v1980, %v2149
      %v2156 = vmul.f32 %v1981, %v2149
      %v2157 = vmul.f32 %v1982, %v2149
      %v2158 = vmul.f32 %v1983, %v2149
      %v2159 = vmul.f32 %v1984, %v2149
      %v2160 = vmul.f32 %v1985, %v2149
      %v2161 = vmul.f32 %v1986, %v2149
      %v2162 = vmul.f32 %v1987, %v2149
      %v2163 = vmul.f32 %v1988, %v2149
      %v2164 = vmul.f32 %v1989, %v2149
      %v2165 = vmul.f32 %v1990, %v2149
      %v2166 = vmul.f32 %v1991, %v2149
      %v2167 = vmul.f32 %v1992, %v2149
      %v2168 = vmul.f32 %v1993, %v2149
      %v2169 = vmul.f32 %v1994, %v2149
      %v2170 = vmul.f32 %v1995, %v2149
      %v2171 = vmul.f32 %v1996, %v2149
      %v2172 = vmul.f32 %v1997, %v2149
      %v2173 = vmul.f32 %v1998, %v2149
      %v2174 = vmul.f32 %v1999, %v2149
      %v2175 = vmul.f32 %v2000, %v2149
      %v2176 = vmul.f32 %v2001, %v2149
      %v2177 = vmul.f32 %v2002, %v2149
      %v2178 = vmul.f32 %v2003, %v2149
      %v2179 = vmul.f32 %v2004, %v2149
      %v2180 = vmul.f32 %v2005, %v2149
      %v2181 = vmul.f32 %v2006, %v2149
      %v2182 = vadd.f32 %v2113, %v2150
      %v2183 = vadd.f32 %v2114, %v2151
      %v2184 = vadd.f32 %v2115, %v2152
      %v2185 = vadd.f32 %v2116, %v2153
      %v2186 = vadd.f32 %v2117, %v2154
      %v2187 = vadd.f32 %v2118, %v2155
      %v2188 = vadd.f32 %v2119, %v2156
      %v2189 = vadd.f32 %v2120, %v2157
      %v2190 = vadd.f32 %v2121, %v2158
      %v2191 = vadd.f32 %v2122, %v2159
      %v2192 = vadd.f32 %v2123, %v2160
      %v2193 = vadd.f32 %v2124, %v2161
      %v2194 = vadd.f32 %v2125, %v2162
      %v2195 = vadd.f32 %v2126, %v2163
      %v2196 = vadd.f32 %v2127, %v2164
      %v2197 = vadd.f32 %v2128, %v2165
      %v2198 = vadd.f32 %v2129, %v2166
      %v2199 = vadd.f32 %v2130, %v2167
      %v2200 = vadd.f32 %v2131, %v2168
      %v2201 = vadd.f32 %v2132, %v2169
      %v2202 = vadd.f32 %v2133, %v2170
      %v2203 = vadd.f32 %v2134, %v2171
      %v2204 = vadd.f32 %v2135, %v2172
      %v2205 = vadd.f32 %v2136, %v2173
      %v2206 = vadd.f32 %v2137, %v2174
      %v2207 = vadd.f32 %v2138, %v2175
      %v2208 = vadd.f32 %v2139, %v2176
      %v2209 = vadd.f32 %v2140, %v2177
      %v2210 = vadd.f32 %v2141, %v2178
      %v2211 = vadd.f32 %v2142, %v2179
      %v2212 = vadd.f32 %v2143, %v2180
      %v2213 = vadd.f32 %v2144, %v2181
      %v2214 = vld [vmem:[%s1 + $0x13] sm:$0x1]
      %v2215 = vlaneseq
      %v2216 = vshrl.u32 %v2215, 7
      %v2217 = vsub.s32 0, %v2216
      %v2218 = vrot.slane %v2214, %v2217
      %v2219 = vmul.f32 %v748, %v2218
      %v2220 = vmul.f32 %v749, %v2218
      %v2221 = vmul.f32 %v750, %v2218
      %v2222 = vmul.f32 %v751, %v2218
      %v2223 = vmul.f32 %v752, %v2218
      %v2224 = vmul.f32 %v753, %v2218
      %v2225 = vmul.f32 %v754, %v2218
      %v2226 = vmul.f32 %v755, %v2218
      %v2227 = vmul.f32 %v756, %v2218
      %v2228 = vmul.f32 %v757, %v2218
      %v2229 = vmul.f32 %v758, %v2218
      %v2230 = vmul.f32 %v759, %v2218
      %v2231 = vmul.f32 %v760, %v2218
      %v2232 = vmul.f32 %v761, %v2218
      %v2233 = vmul.f32 %v762, %v2218
      %v2234 = vmul.f32 %v763, %v2218
      %v2235 = vmul.f32 %v764, %v2218
      %v2236 = vmul.f32 %v765, %v2218
      %v2237 = vmul.f32 %v766, %v2218
      %v2238 = vmul.f32 %v767, %v2218
      %v2239 = vmul.f32 %v768, %v2218
      %v2240 = vmul.f32 %v769, %v2218
      %v2241 = vmul.f32 %v770, %v2218
      %v2242 = vmul.f32 %v771, %v2218
      %v2243 = vmul.f32 %v772, %v2218
      %v2244 = vmul.f32 %v773, %v2218
      %v2245 = vmul.f32 %v774, %v2218
      %v2246 = vmul.f32 %v775, %v2218
      %v2247 = vmul.f32 %v776, %v2218
      %v2248 = vmul.f32 %v777, %v2218
      %v2249 = vmul.f32 %v778, %v2218
      %v2250 = vmul.f32 %v779, %v2218
      %v2251 = vadd.f32 %v2182, %v2219
      %v2252 = vadd.f32 %v2183, %v2220
      %v2253 = vadd.f32 %v2184, %v2221
      %v2254 = vadd.f32 %v2185, %v2222
      %v2255 = vadd.f32 %v2186, %v2223
      %v2256 = vadd.f32 %v2187, %v2224
      %v2257 = vadd.f32 %v2188, %v2225
      %v2258 = vadd.f32 %v2189, %v2226
      %v2259 = vadd.f32 %v2190, %v2227
      %v2260 = vadd.f32 %v2191, %v2228
      %v2261 = vadd.f32 %v2192, %v2229
      %v2262 = vadd.f32 %v2193, %v2230
      %v2263 = vadd.f32 %v2194, %v2231
      %v2264 = vadd.f32 %v2195, %v2232
      %v2265 = vadd.f32 %v2196, %v2233
      %v2266 = vadd.f32 %v2197, %v2234
      %v2267 = vadd.f32 %v2198, %v2235
      %v2268 = vadd.f32 %v2199, %v2236
      %v2269 = vadd.f32 %v2200, %v2237
      %v2270 = vadd.f32 %v2201, %v2238
      %v2271 = vadd.f32 %v2202, %v2239
      %v2272 = vadd.f32 %v2203, %v2240
      %v2273 = vadd.f32 %v2204, %v2241
      %v2274 = vadd.f32 %v2205, %v2242
      %v2275 = vadd.f32 %v2206, %v2243
      %v2276 = vadd.f32 %v2207, %v2244
      %v2277 = vadd.f32 %v2208, %v2245
      %v2278 = vadd.f32 %v2209, %v2246
      %v2279 = vadd.f32 %v2210, %v2247
      %v2280 = vadd.f32 %v2211, %v2248
      %v2281 = vadd.f32 %v2212, %v2249
      %v2282 = vadd.f32 %v2213, %v2250
      %v2283 = vld [vmem:[%s1 + $0x16] sm:$0x1]
      %v2284 = vlaneseq
      %v2285 = vshrl.u32 %v2284, 7
      %v2286 = vsub.s32 0, %v2285
      %v2287 = vrot.slane %v2283, %v2286
      %v2288 = vmul.f32 %v756, %v2287
      %v2289 = vmul.f32 %v757, %v2287
      %v2290 = vmul.f32 %v758, %v2287
      %v2291 = vmul.f32 %v759, %v2287
      %v2292 = vmul.f32 %v760, %v2287
      %v2293 = vmul.f32 %v761, %v2287
      %v2294 = vmul.f32 %v762, %v2287
      %v2295 = vmul.f32 %v763, %v2287
      %v2296 = vmul.f32 %v764, %v2287
      %v2297 = vmul.f32 %v765, %v2287
      %v2298 = vmul.f32 %v766, %v2287
      %v2299 = vmul.f32 %v767, %v2287
      %v2300 = vmul.f32 %v768, %v2287
      %v2301 = vmul.f32 %v769, %v2287
      %v2302 = vmul.f32 %v770, %v2287
      %v2303 = vmul.f32 %v771, %v2287
      %v2304 = vmul.f32 %v772, %v2287
      %v2305 = vmul.f32 %v773, %v2287
      %v2306 = vmul.f32 %v774, %v2287
      %v2307 = vmul.f32 %v775, %v2287
      %v2308 = vmul.f32 %v776, %v2287
      %v2309 = vmul.f32 %v777, %v2287
      %v2310 = vmul.f32 %v778, %v2287
      %v2311 = vmul.f32 %v779, %v2287
      %v2312 = vmul.f32 %v780, %v2287
      %v2313 = vmul.f32 %v781, %v2287
      %v2314 = vmul.f32 %v782, %v2287
      %v2315 = vmul.f32 %v783, %v2287
      %v2316 = vmul.f32 %v784, %v2287
      %v2317 = vmul.f32 %v785, %v2287
      %v2318 = vmul.f32 %v786, %v2287
      %v2319 = vmul.f32 %v787, %v2287
      %v2320 = vadd.f32 %v2251, %v2288
      %v2321 = vadd.f32 %v2252, %v2289
      %v2322 = vadd.f32 %v2253, %v2290
      %v2323 = vadd.f32 %v2254, %v2291
      %v2324 = vadd.f32 %v2255, %v2292
      %v2325 = vadd.f32 %v2256, %v2293
      %v2326 = vadd.f32 %v2257, %v2294
      %v2327 = vadd.f32 %v2258, %v2295
      %v2328 = vadd.f32 %v2259, %v2296
      %v2329 = vadd.f32 %v2260, %v2297
      %v2330 = vadd.f32 %v2261, %v2298
      %v2331 = vadd.f32 %v2262, %v2299
      %v2332 = vadd.f32 %v2263, %v2300
      %v2333 = vadd.f32 %v2264, %v2301
      %v2334 = vadd.f32 %v2265, %v2302
      %v2335 = vadd.f32 %v2266, %v2303
      %v2336 = vadd.f32 %v2267, %v2304
      %v2337 = vadd.f32 %v2268, %v2305
      %v2338 = vadd.f32 %v2269, %v2306
      %v2339 = vadd.f32 %v2270, %v2307
      %v2340 = vadd.f32 %v2271, %v2308
      %v2341 = vadd.f32 %v2272, %v2309
      %v2342 = vadd.f32 %v2273, %v2310
      %v2343 = vadd.f32 %v2274, %v2311
      %v2344 = vadd.f32 %v2275, %v2312
      %v2345 = vadd.f32 %v2276, %v2313
      %v2346 = vadd.f32 %v2277, %v2314
      %v2347 = vadd.f32 %v2278, %v2315
      %v2348 = vadd.f32 %v2279, %v2316
      %v2349 = vadd.f32 %v2280, %v2317
      %v2350 = vadd.f32 %v2281, %v2318
      %v2351 = vadd.f32 %v2282, %v2319
      %v2352 = vld [vmem:[%s1 + $0x19] sm:$0x1]
      %v2353 = vlaneseq
      %v2354 = vshrl.u32 %v2353, 7
      %v2355 = vsub.s32 0, %v2354
      %v2356 = vrot.slane %v2352, %v2355
      %v2357 = vmul.f32 %v764, %v2356
      %v2358 = vmul.f32 %v765, %v2356
      %v2359 = vmul.f32 %v766, %v2356
      %v2360 = vmul.f32 %v767, %v2356
      %v2361 = vmul.f32 %v768, %v2356
      %v2362 = vmul.f32 %v769, %v2356
      %v2363 = vmul.f32 %v770, %v2356
      %v2364 = vmul.f32 %v771, %v2356
      %v2365 = vmul.f32 %v772, %v2356
      %v2366 = vmul.f32 %v773, %v2356
      %v2367 = vmul.f32 %v774, %v2356
      %v2368 = vmul.f32 %v775, %v2356
      %v2369 = vmul.f32 %v776, %v2356
      %v2370 = vmul.f32 %v777, %v2356
      %v2371 = vmul.f32 %v778, %v2356
      %v2372 = vmul.f32 %v779, %v2356
      %v2373 = vmul.f32 %v780, %v2356
      %v2374 = vmul.f32 %v781, %v2356
      %v2375 = vmul.f32 %v782, %v2356
      %v2376 = vmul.f32 %v783, %v2356
      %v2377 = vmul.f32 %v784, %v2356
      %v2378 = vmul.f32 %v785, %v2356
      %v2379 = vmul.f32 %v786, %v2356
      %v2380 = vmul.f32 %v787, %v2356
      %v2381 = vmul.f32 %v788, %v2356
      %v2382 = vmul.f32 %v789, %v2356
      %v2383 = vmul.f32 %v790, %v2356
      %v2384 = vmul.f32 %v791, %v2356
      %v2385 = vmul.f32 %v792, %v2356
      %v2386 = vmul.f32 %v793, %v2356
      %v2387 = vmul.f32 %v794, %v2356
      %v2388 = vmul.f32 %v795, %v2356
      %v2389 = vadd.f32 %v2320, %v2357
      %v2390 = vadd.f32 %v2321, %v2358
      %v2391 = vadd.f32 %v2322, %v2359
      %v2392 = vadd.f32 %v2323, %v2360
      %v2393 = vadd.f32 %v2324, %v2361
      %v2394 = vadd.f32 %v2325, %v2362
      %v2395 = vadd.f32 %v2326, %v2363
      %v2396 = vadd.f32 %v2327, %v2364
      %v2397 = vadd.f32 %v2328, %v2365
      %v2398 = vadd.f32 %v2329, %v2366
      %v2399 = vadd.f32 %v2330, %v2367
      %v2400 = vadd.f32 %v2331, %v2368
      %v2401 = vadd.f32 %v2332, %v2369
      %v2402 = vadd.f32 %v2333, %v2370
      %v2403 = vadd.f32 %v2334, %v2371
      %v2404 = vadd.f32 %v2335, %v2372
      %v2405 = vadd.f32 %v2336, %v2373
      %v2406 = vadd.f32 %v2337, %v2374
      %v2407 = vadd.f32 %v2338, %v2375
      %v2408 = vadd.f32 %v2339, %v2376
      %v2409 = vadd.f32 %v2340, %v2377
      %v2410 = vadd.f32 %v2341, %v2378
      %v2411 = vadd.f32 %v2342, %v2379
      %v2412 = vadd.f32 %v2343, %v2380
      %v2413 = vadd.f32 %v2344, %v2381
      %v2414 = vadd.f32 %v2345, %v2382
      %v2415 = vadd.f32 %v2346, %v2383
      %v2416 = vadd.f32 %v2347, %v2384
      %v2417 = vadd.f32 %v2348, %v2385
      %v2418 = vadd.f32 %v2349, %v2386
      %v2419 = vadd.f32 %v2350, %v2387
      %v2420 = vadd.f32 %v2351, %v2388
      %v2421 = vld [vmem:[#allocation2 + $0x10] sm:$0xff]
      %v2422 = vld [vmem:[#allocation2 + $0x28] sm:$0xff]
      %v2423 = vld [vmem:[#allocation2 + $0x40] sm:$0xff]
      %v2424 = vld [vmem:[#allocation2 + $0x58] sm:$0xff]
      %v2425 = vld [vmem:[#allocation2 + $0x70] sm:$0xff]
      %v2426 = vld [vmem:[#allocation2 + $0x88] sm:$0xff]
      %v2427 = vld [vmem:[#allocation2 + $0xa0] sm:$0xff]
      %v2428 = vld [vmem:[#allocation2 + $0xb8] sm:$0xff]
      %v2429 = vld [vmem:[#allocation2 + $0xd0] sm:$0xff]
      %v2430 = vld [vmem:[#allocation2 + $0xe8] sm:$0xff]
      %v2431 = vld [vmem:[#allocation2 + $0x100] sm:$0xff]
      %v2432 = vld [vmem:[#allocation2 + $0x118] sm:$0xff]
      %v2433 = vld [vmem:[#allocation2 + $0x130] sm:$0xff]
      %v2434 = vld [vmem:[#allocation2 + $0x148] sm:$0xff]
      %v2435 = vld [vmem:[#allocation2 + $0x160] sm:$0xff]
      %v2436 = vld [vmem:[#allocation2 + $0x178] sm:$0xff]
      %v2437 = vld [vmem:[#allocation2 + $0x190] sm:$0xff]
      %v2438 = vld [vmem:[#allocation2 + $0x1a8] sm:$0xff]
      %v2439 = vld [vmem:[#allocation2 + $0x1c0] sm:$0xff]
      %v2440 = vld [vmem:[#allocation2 + $0x1d8] sm:$0xff]
      %v2441 = vld [vmem:[#allocation2 + $0x1f0] sm:$0xff]
      %v2442 = vld [vmem:[#allocation2 + $0x208] sm:$0xff]
      %v2443 = vld [vmem:[#allocation2 + $0x220] sm:$0xff]
      %v2444 = vld [vmem:[#allocation2 + $0x238] sm:$0xff]
      %v2445 = vld [vmem:[%s1 + $0x14] sm:$0x1]
      %v2446 = vlaneseq
      %v2447 = vshrl.u32 %v2446, 7
      %v2448 = vsub.s32 0, %v2447
      %v2449 = vrot.slane %v2445, %v2448
      %v2450 = vmul.f32 %v1960, %v2449
      %v2451 = vmul.f32 %v2421, %v2449
      %v2452 = vmul.f32 %v1962, %v2449
      %v2453 = vmul.f32 %v2422, %v2449
      %v2454 = vmul.f32 %v1964, %v2449
      %v2455 = vmul.f32 %v2423, %v2449
      %v2456 = vmul.f32 %v1966, %v2449
      %v2457 = vmul.f32 %v2424, %v2449
      %v2458 = vmul.f32 %v1968, %v2449
      %v2459 = vmul.f32 %v2425, %v2449
      %v2460 = vmul.f32 %v1970, %v2449
      %v2461 = vmul.f32 %v2426, %v2449
      %v2462 = vmul.f32 %v1972, %v2449
      %v2463 = vmul.f32 %v2427, %v2449
      %v2464 = vmul.f32 %v1974, %v2449
      %v2465 = vmul.f32 %v2428, %v2449
      %v2466 = vmul.f32 %v1976, %v2449
      %v2467 = vmul.f32 %v2429, %v2449
      %v2468 = vmul.f32 %v1978, %v2449
      %v2469 = vmul.f32 %v2430, %v2449
      %v2470 = vmul.f32 %v1980, %v2449
      %v2471 = vmul.f32 %v2431, %v2449
      %v2472 = vmul.f32 %v1982, %v2449
      %v2473 = vmul.f32 %v2432, %v2449
      %v2474 = vmul.f32 %v1984, %v2449
      %v2475 = vmul.f32 %v2433, %v2449
      %v2476 = vmul.f32 %v1986, %v2449
      %v2477 = vmul.f32 %v2434, %v2449
      %v2478 = vmul.f32 %v1988, %v2449
      %v2479 = vmul.f32 %v2435, %v2449
      %v2480 = vmul.f32 %v1990, %v2449
      %v2481 = vmul.f32 %v2436, %v2449
      %v2482 = vadd.f32 %v2389, %v2450
      %v2483 = vadd.f32 %v2390, %v2451
      %v2484 = vadd.f32 %v2391, %v2452
      %v2485 = vadd.f32 %v2392, %v2453
      %v2486 = vadd.f32 %v2393, %v2454
      %v2487 = vadd.f32 %v2394, %v2455
      %v2488 = vadd.f32 %v2395, %v2456
      %v2489 = vadd.f32 %v2396, %v2457
      %v2490 = vadd.f32 %v2397, %v2458
      %v2491 = vadd.f32 %v2398, %v2459
      %v2492 = vadd.f32 %v2399, %v2460
      %v2493 = vadd.f32 %v2400, %v2461
      %v2494 = vadd.f32 %v2401, %v2462
      %v2495 = vadd.f32 %v2402, %v2463
      %v2496 = vadd.f32 %v2403, %v2464
      %v2497 = vadd.f32 %v2404, %v2465
      %v2498 = vadd.f32 %v2405, %v2466
      %v2499 = vadd.f32 %v2406, %v2467
      %v2500 = vadd.f32 %v2407, %v2468
      %v2501 = vadd.f32 %v2408, %v2469
      %v2502 = vadd.f32 %v2409, %v2470
      %v2503 = vadd.f32 %v2410, %v2471
      %v2504 = vadd.f32 %v2411, %v2472
      %v2505 = vadd.f32 %v2412, %v2473
      %v2506 = vadd.f32 %v2413, %v2474
      %v2507 = vadd.f32 %v2414, %v2475
      %v2508 = vadd.f32 %v2415, %v2476
      %v2509 = vadd.f32 %v2416, %v2477
      %v2510 = vadd.f32 %v2417, %v2478
      %v2511 = vadd.f32 %v2418, %v2479
      %v2512 = vadd.f32 %v2419, %v2480
      %v2513 = vadd.f32 %v2420, %v2481
      %v2514 = vld [vmem:[%s1 + $0x17] sm:$0x1]
      %v2515 = vlaneseq
      %v2516 = vshrl.u32 %v2515, 7
      %v2517 = vsub.s32 0, %v2516
      %v2518 = vrot.slane %v2514, %v2517
      %v2519 = vmul.f32 %v1968, %v2518
      %v2520 = vmul.f32 %v2425, %v2518
      %v2521 = vmul.f32 %v1970, %v2518
      %v2522 = vmul.f32 %v2426, %v2518
      %v2523 = vmul.f32 %v1972, %v2518
      %v2524 = vmul.f32 %v2427, %v2518
      %v2525 = vmul.f32 %v1974, %v2518
      %v2526 = vmul.f32 %v2428, %v2518
      %v2527 = vmul.f32 %v1976, %v2518
      %v2528 = vmul.f32 %v2429, %v2518
      %v2529 = vmul.f32 %v1978, %v2518
      %v2530 = vmul.f32 %v2430, %v2518
      %v2531 = vmul.f32 %v1980, %v2518
      %v2532 = vmul.f32 %v2431, %v2518
      %v2533 = vmul.f32 %v1982, %v2518
      %v2534 = vmul.f32 %v2432, %v2518
      %v2535 = vmul.f32 %v1984, %v2518
      %v2536 = vmul.f32 %v2433, %v2518
      %v2537 = vmul.f32 %v1986, %v2518
      %v2538 = vmul.f32 %v2434, %v2518
      %v2539 = vmul.f32 %v1988, %v2518
      %v2540 = vmul.f32 %v2435, %v2518
      %v2541 = vmul.f32 %v1990, %v2518
      %v2542 = vmul.f32 %v2436, %v2518
      %v2543 = vmul.f32 %v1992, %v2518
      %v2544 = vmul.f32 %v2437, %v2518
      %v2545 = vmul.f32 %v1994, %v2518
      %v2546 = vmul.f32 %v2438, %v2518
      %v2547 = vmul.f32 %v1996, %v2518
      %v2548 = vmul.f32 %v2439, %v2518
      %v2549 = vmul.f32 %v1998, %v2518
      %v2550 = vmul.f32 %v2440, %v2518
      %v2551 = vadd.f32 %v2482, %v2519
      %v2552 = vadd.f32 %v2483, %v2520
      %v2553 = vadd.f32 %v2484, %v2521
      %v2554 = vadd.f32 %v2485, %v2522
      %v2555 = vadd.f32 %v2486, %v2523
      %v2556 = vadd.f32 %v2487, %v2524
      %v2557 = vadd.f32 %v2488, %v2525
      %v2558 = vadd.f32 %v2489, %v2526
      %v2559 = vadd.f32 %v2490, %v2527
      %v2560 = vadd.f32 %v2491, %v2528
      %v2561 = vadd.f32 %v2492, %v2529
      %v2562 = vadd.f32 %v2493, %v2530
      %v2563 = vadd.f32 %v2494, %v2531
      %v2564 = vadd.f32 %v2495, %v2532
      %v2565 = vadd.f32 %v2496, %v2533
      %v2566 = vadd.f32 %v2497, %v2534
      %v2567 = vadd.f32 %v2498, %v2535
      %v2568 = vadd.f32 %v2499, %v2536
      %v2569 = vadd.f32 %v2500, %v2537
      %v2570 = vadd.f32 %v2501, %v2538
      %v2571 = vadd.f32 %v2502, %v2539
      %v2572 = vadd.f32 %v2503, %v2540
      %v2573 = vadd.f32 %v2504, %v2541
      %v2574 = vadd.f32 %v2505, %v2542
      %v2575 = vadd.f32 %v2506, %v2543
      %v2576 = vadd.f32 %v2507, %v2544
      %v2577 = vadd.f32 %v2508, %v2545
      %v2578 = vadd.f32 %v2509, %v2546
      %v2579 = vadd.f32 %v2510, %v2547
      %v2580 = vadd.f32 %v2511, %v2548
      %v2581 = vadd.f32 %v2512, %v2549
      %v2582 = vadd.f32 %v2513, %v2550
      %v2583 = vld [vmem:[%s1 + $0x1a] sm:$0x1]
      %v2584 = vlaneseq
      %v2585 = vshrl.u32 %v2584, 7
      %v2586 = vsub.s32 0, %v2585
      %v2587 = vrot.slane %v2583, %v2586
      %v2588 = vmul.f32 %v1976, %v2587
      %v2589 = vmul.f32 %v2429, %v2587
      %v2590 = vmul.f32 %v1978, %v2587
      %v2591 = vmul.f32 %v2430, %v2587
      %v2592 = vmul.f32 %v1980, %v2587
      %v2593 = vmul.f32 %v2431, %v2587
      %v2594 = vmul.f32 %v1982, %v2587
      %v2595 = vmul.f32 %v2432, %v2587
      %v2596 = vmul.f32 %v1984, %v2587
      %v2597 = vmul.f32 %v2433, %v2587
      %v2598 = vmul.f32 %v1986, %v2587
      %v2599 = vmul.f32 %v2434, %v2587
      %v2600 = vmul.f32 %v1988, %v2587
      %v2601 = vmul.f32 %v2435, %v2587
      %v2602 = vmul.f32 %v1990, %v2587
      %v2603 = vmul.f32 %v2436, %v2587
      %v2604 = vmul.f32 %v1992, %v2587
      %v2605 = vmul.f32 %v2437, %v2587
      %v2606 = vmul.f32 %v1994, %v2587
      %v2607 = vmul.f32 %v2438, %v2587
      %v2608 = vmul.f32 %v1996, %v2587
      %v2609 = vmul.f32 %v2439, %v2587
      %v2610 = vmul.f32 %v1998, %v2587
      %v2611 = vmul.f32 %v2440, %v2587
      %v2612 = vmul.f32 %v2000, %v2587
      %v2613 = vmul.f32 %v2441, %v2587
      %v2614 = vmul.f32 %v2002, %v2587
      %v2615 = vmul.f32 %v2442, %v2587
      %v2616 = vmul.f32 %v2004, %v2587
      %v2617 = vmul.f32 %v2443, %v2587
      %v2618 = vmul.f32 %v2006, %v2587
      %v2619 = vmul.f32 %v2444, %v2587
      %v2620 = vadd.f32 %v2551, %v2588
      %v2621 = vadd.f32 %v2552, %v2589
      %v2622 = vadd.f32 %v2553, %v2590
      %v2623 = vadd.f32 %v2554, %v2591
      %v2624 = vadd.f32 %v2555, %v2592
      %v2625 = vadd.f32 %v2556, %v2593
      %v2626 = vadd.f32 %v2557, %v2594
      %v2627 = vadd.f32 %v2558, %v2595
      %v2628 = vadd.f32 %v2559, %v2596
      %v2629 = vadd.f32 %v2560, %v2597
      %v2630 = vadd.f32 %v2561, %v2598
      %v2631 = vadd.f32 %v2562, %v2599
      %v2632 = vadd.f32 %v2563, %v2600
      %v2633 = vadd.f32 %v2564, %v2601
      %v2634 = vadd.f32 %v2565, %v2602
      %v2635 = vadd.f32 %v2566, %v2603
      %v2636 = vadd.f32 %v2567, %v2604
      %v2637 = vadd.f32 %v2568, %v2605
      %v2638 = vadd.f32 %v2569, %v2606
      %v2639 = vadd.f32 %v2570, %v2607
      %v2640 = vadd.f32 %v2571, %v2608
      %v2641 = vadd.f32 %v2572, %v2609
      %v2642 = vadd.f32 %v2573, %v2610
      %v2643 = vadd.f32 %v2574, %v2611
      %v2644 = vadd.f32 %v2575, %v2612
      %v2645 = vadd.f32 %v2576, %v2613
      %v2646 = vadd.f32 %v2577, %v2614
      %v2647 = vadd.f32 %v2578, %v2615
      %v2648 = vadd.f32 %v2579, %v2616
      %v2649 = vadd.f32 %v2580, %v2617
      %v2650 = vadd.f32 %v2581, %v2618
      %v2651 = vadd.f32 %v2582, %v2619
      %2684 = vrot.lane.b32.xlu0 %v1218, 8
      %v2685 = vpop.permute.xlu0 %2684
      %2686 = vrot.lane.b32.xlu0 %v1219, 8
      %v2687 = vpop.permute.xlu0 %2686
      %2688 = vrot.lane.b32.xlu0 %v1220, 8
      %v2689 = vpop.permute.xlu0 %2688
      %2690 = vrot.lane.b32.xlu0 %v1221, 8
      %v2691 = vpop.permute.xlu0 %2690
      %2692 = vrot.lane.b32.xlu0 %v1222, 8
      %v2693 = vpop.permute.xlu0 %2692
      %2694 = vrot.lane.b32.xlu0 %v1223, 8
      %v2695 = vpop.permute.xlu0 %2694
      %2696 = vrot.lane.b32.xlu0 %v1224, 8
      %v2697 = vpop.permute.xlu0 %2696
      %2698 = vrot.lane.b32.xlu0 %v1225, 8
      %v2699 = vpop.permute.xlu0 %2698
      %2700 = vrot.lane.b32.xlu0 %v1226, 8
      %v2701 = vpop.permute.xlu0 %2700
      %2702 = vrot.lane.b32.xlu0 %v1227, 8
      %v2703 = vpop.permute.xlu0 %2702
      %2704 = vrot.lane.b32.xlu0 %v1228, 8
      %v2705 = vpop.permute.xlu0 %2704
      %2706 = vrot.lane.b32.xlu0 %v1229, 8
      %v2707 = vpop.permute.xlu0 %2706
      %2708 = vrot.lane.b32.xlu0 %v1230, 8
      %v2709 = vpop.permute.xlu0 %2708
      %2710 = vrot.lane.b32.xlu0 %v1231, 8
      %v2711 = vpop.permute.xlu0 %2710
      %2712 = vrot.lane.b32.xlu0 %v1232, 8
      %v2713 = vpop.permute.xlu0 %2712
      %2714 = vrot.lane.b32.xlu0 %v1233, 8
      %v2715 = vpop.permute.xlu0 %2714
      %2716 = vrot.lane.b32.xlu0 %v1234, 8
      %v2717 = vpop.permute.xlu0 %2716
      %2718 = vrot.lane.b32.xlu0 %v1235, 8
      %v2719 = vpop.permute.xlu0 %2718
      %2720 = vrot.lane.b32.xlu0 %v1236, 8
      %v2721 = vpop.permute.xlu0 %2720
      %2722 = vrot.lane.b32.xlu0 %v1237, 8
      %v2723 = vpop.permute.xlu0 %2722
      %2724 = vrot.lane.b32.xlu0 %v1238, 8
      %v2725 = vpop.permute.xlu0 %2724
      %2726 = vrot.lane.b32.xlu0 %v1239, 8
      %v2727 = vpop.permute.xlu0 %2726
      %2728 = vrot.lane.b32.xlu0 %v1240, 8
      %v2729 = vpop.permute.xlu0 %2728
      %2730 = vrot.lane.b32.xlu0 %v1241, 8
      %v2731 = vpop.permute.xlu0 %2730
      %2732 = vrot.lane.b32.xlu0 %v1242, 8
      %v2733 = vpop.permute.xlu0 %2732
      %2734 = vrot.lane.b32.xlu0 %v1243, 8
      %v2735 = vpop.permute.xlu0 %2734
      %2736 = vrot.lane.b32.xlu0 %v1244, 8
      %v2737 = vpop.permute.xlu0 %2736
      %2738 = vrot.lane.b32.xlu0 %v1245, 8
      %v2739 = vpop.permute.xlu0 %2738
      %2740 = vrot.lane.b32.xlu0 %v1246, 8
      %v2741 = vpop.permute.xlu0 %2740
      %2742 = vrot.lane.b32.xlu0 %v1247, 8
      %v2743 = vpop.permute.xlu0 %2742
      %2744 = vrot.lane.b32.xlu0 %v1248, 8
      %v2745 = vpop.permute.xlu0 %2744
      %2746 = vrot.lane.b32.xlu0 %v1249, 8
      %v2747 = vpop.permute.xlu0 %2746
      %2812 = vrot.lane.b32.xlu0 %v1927, 16
      %v2813 = vpop.permute.xlu0 %2812
      %2814 = vrot.lane.b32.xlu0 %v1928, 16
      %v2815 = vpop.permute.xlu0 %2814
      %2816 = vrot.lane.b32.xlu0 %v1929, 16
      %v2817 = vpop.permute.xlu0 %2816
      %2818 = vrot.lane.b32.xlu0 %v1930, 16
      %v2819 = vpop.permute.xlu0 %2818
      %2820 = vrot.lane.b32.xlu0 %v1931, 16
      %v2821 = vpop.permute.xlu0 %2820
      %2822 = vrot.lane.b32.xlu0 %v1932, 16
      %v2823 = vpop.permute.xlu0 %2822
      %2824 = vrot.lane.b32.xlu0 %v1933, 16
      %v2825 = vpop.permute.xlu0 %2824
      %2826 = vrot.lane.b32.xlu0 %v1934, 16
      %v2827 = vpop.permute.xlu0 %2826
      %2828 = vrot.lane.b32.xlu0 %v1935, 16
      %v2829 = vpop.permute.xlu0 %2828
      %2830 = vrot.lane.b32.xlu0 %v1936, 16
      %v2831 = vpop.permute.xlu0 %2830
      %2832 = vrot.lane.b32.xlu0 %v1937, 16
      %v2833 = vpop.permute.xlu0 %2832
      %2834 = vrot.lane.b32.xlu0 %v1938, 16
      %v2835 = vpop.permute.xlu0 %2834
      %2836 = vrot.lane.b32.xlu0 %v1939, 16
      %v2837 = vpop.permute.xlu0 %2836
      %2838 = vrot.lane.b32.xlu0 %v1940, 16
      %v2839 = vpop.permute.xlu0 %2838
      %2840 = vrot.lane.b32.xlu0 %v1941, 16
      %v2841 = vpop.permute.xlu0 %2840
      %2842 = vrot.lane.b32.xlu0 %v1942, 16
      %v2843 = vpop.permute.xlu0 %2842
      %2844 = vrot.lane.b32.xlu0 %v1943, 16
      %v2845 = vpop.permute.xlu0 %2844
      %2846 = vrot.lane.b32.xlu0 %v1944, 16
      %v2847 = vpop.permute.xlu0 %2846
      %2848 = vrot.lane.b32.xlu0 %v1945, 16
      %v2849 = vpop.permute.xlu0 %2848
      %2850 = vrot.lane.b32.xlu0 %v1946, 16
      %v2851 = vpop.permute.xlu0 %2850
      %2852 = vrot.lane.b32.xlu0 %v1947, 16
      %v2853 = vpop.permute.xlu0 %2852
      %2854 = vrot.lane.b32.xlu0 %v1948, 16
      %v2855 = vpop.permute.xlu0 %2854
      %2856 = vrot.lane.b32.xlu0 %v1949, 16
      %v2857 = vpop.permute.xlu0 %2856
      %2858 = vrot.lane.b32.xlu0 %v1950, 16
      %v2859 = vpop.permute.xlu0 %2858
      %2860 = vrot.lane.b32.xlu0 %v1951, 16
      %v2861 = vpop.permute.xlu0 %2860
      %2862 = vrot.lane.b32.xlu0 %v1952, 16
      %v2863 = vpop.permute.xlu0 %2862
      %2864 = vrot.lane.b32.xlu0 %v1953, 16
      %v2865 = vpop.permute.xlu0 %2864
      %2866 = vrot.lane.b32.xlu0 %v1954, 16
      %v2867 = vpop.permute.xlu0 %2866
      %2868 = vrot.lane.b32.xlu0 %v1955, 16
      %v2869 = vpop.permute.xlu0 %2868
      %2870 = vrot.lane.b32.xlu0 %v1956, 16
      %v2871 = vpop.permute.xlu0 %2870
      %2872 = vrot.lane.b32.xlu0 %v1957, 16
      %v2873 = vpop.permute.xlu0 %2872
      %2874 = vrot.lane.b32.xlu0 %v1958, 16
      %v2875 = vpop.permute.xlu0 %2874
      %2940 = vrot.lane.b32.xlu0 %v2620, 24
      %v2941 = vpop.permute.xlu0 %2940
      %2942 = vrot.lane.b32.xlu0 %v2621, 24
      %v2943 = vpop.permute.xlu0 %2942
      %2944 = vrot.lane.b32.xlu0 %v2622, 24
      %v2945 = vpop.permute.xlu0 %2944
      %2946 = vrot.lane.b32.xlu0 %v2623, 24
      %v2947 = vpop.permute.xlu0 %2946
      %2948 = vrot.lane.b32.xlu0 %v2624, 24
      %v2949 = vpop.permute.xlu0 %2948
      %2950 = vrot.lane.b32.xlu0 %v2625, 24
      %v2951 = vpop.permute.xlu0 %2950
      %2952 = vrot.lane.b32.xlu0 %v2626, 24
      %v2953 = vpop.permute.xlu0 %2952
      %2954 = vrot.lane.b32.xlu0 %v2627, 24
      %v2955 = vpop.permute.xlu0 %2954
      %2956 = vrot.lane.b32.xlu0 %v2628, 24
      %v2957 = vpop.permute.xlu0 %2956
      %2958 = vrot.lane.b32.xlu0 %v2629, 24
      %v2959 = vpop.permute.xlu0 %2958
      %2960 = vrot.lane.b32.xlu0 %v2630, 24
      %v2961 = vpop.permute.xlu0 %2960
      %2962 = vrot.lane.b32.xlu0 %v2631, 24
      %v2963 = vpop.permute.xlu0 %2962
      %2964 = vrot.lane.b32.xlu0 %v2632, 24
      %v2965 = vpop.permute.xlu0 %2964
      %2966 = vrot.lane.b32.xlu0 %v2633, 24
      %v2967 = vpop.permute.xlu0 %2966
      %2968 = vrot.lane.b32.xlu0 %v2634, 24
      %v2969 = vpop.permute.xlu0 %2968
      %2970 = vrot.lane.b32.xlu0 %v2635, 24
      %v2971 = vpop.permute.xlu0 %2970
      %2972 = vrot.lane.b32.xlu0 %v2636, 24
      %v2973 = vpop.permute.xlu0 %2972
      %2974 = vrot.lane.b32.xlu0 %v2637, 24
      %v2975 = vpop.permute.xlu0 %2974
      %2976 = vrot.lane.b32.xlu0 %v2638, 24
      %v2977 = vpop.permute.xlu0 %2976
      %2978 = vrot.lane.b32.xlu0 %v2639, 24
      %v2979 = vpop.permute.xlu0 %2978
      %2980 = vrot.lane.b32.xlu0 %v2640, 24
      %v2981 = vpop.permute.xlu0 %2980
      %2982 = vrot.lane.b32.xlu0 %v2641, 24
      %v2983 = vpop.permute.xlu0 %2982
      %2984 = vrot.lane.b32.xlu0 %v2642, 24
      %v2985 = vpop.permute.xlu0 %2984
      %2986 = vrot.lane.b32.xlu0 %v2643, 24
      %v2987 = vpop.permute.xlu0 %2986
      %2988 = vrot.lane.b32.xlu0 %v2644, 24
      %v2989 = vpop.permute.xlu0 %2988
      %2990 = vrot.lane.b32.xlu0 %v2645, 24
      %v2991 = vpop.permute.xlu0 %2990
      %2992 = vrot.lane.b32.xlu0 %v2646, 24
      %v2993 = vpop.permute.xlu0 %2992
      %2994 = vrot.lane.b32.xlu0 %v2647, 24
      %v2995 = vpop.permute.xlu0 %2994
      %2996 = vrot.lane.b32.xlu0 %v2648, 24
      %v2997 = vpop.permute.xlu0 %2996
      %2998 = vrot.lane.b32.xlu0 %v2649, 24
      %v2999 = vpop.permute.xlu0 %2998
      %3000 = vrot.lane.b32.xlu0 %v2650, 24
      %v3001 = vpop.permute.xlu0 %3000
      %3002 = vrot.lane.b32.xlu0 %v2651, 24
      %v3003 = vpop.permute.xlu0 %3002
      %v3036 = vsel %vm409, %v377, %v2685
      %v3037 = vsel %vm409, %v378, %v2687
      %v3038 = vsel %vm409, %v379, %v2689
      %v3039 = vsel %vm409, %v380, %v2691
      %v3040 = vsel %vm409, %v381, %v2693
      %v3041 = vsel %vm409, %v382, %v2695
      %v3042 = vsel %vm409, %v383, %v2697
      %v3043 = vsel %vm409, %v384, %v2699
      %v3044 = vsel %vm409, %v385, %v2701
      %v3045 = vsel %vm409, %v386, %v2703
      %v3046 = vsel %vm409, %v387, %v2705
      %v3047 = vsel %vm409, %v388, %v2707
      %v3048 = vsel %vm409, %v389, %v2709
      %v3049 = vsel %vm409, %v390, %v2711
      %v3050 = vsel %vm409, %v391, %v2713
      %v3051 = vsel %vm409, %v392, %v2715
      %v3052 = vsel %vm409, %v393, %v2717
      %v3053 = vsel %vm409, %v394, %v2719
      %v3054 = vsel %vm409, %v395, %v2721
      %v3055 = vsel %vm409, %v396, %v2723
      %v3056 = vsel %vm409, %v397, %v2725
      %v3057 = vsel %vm409, %v398, %v2727
      %v3058 = vsel %vm409, %v399, %v2729
      %v3059 = vsel %vm409, %v400, %v2731
      %v3060 = vsel %vm409, %v401, %v2733
      %v3061 = vsel %vm409, %v402, %v2735
      %v3062 = vsel %vm409, %v403, %v2737
      %v3063 = vsel %vm409, %v404, %v2739
      %v3064 = vsel %vm409, %v405, %v2741
      %v3065 = vsel %vm409, %v406, %v2743
      %v3066 = vsel %vm409, %v407, %v2745
      %v3067 = vsel %vm409, %v408, %v2747
      %vm3068 = vcmask 130048
      %v3069 = vsel %vm3068, %v3036, %v2813
      %v3070 = vsel %vm3068, %v3037, %v2815
      %v3071 = vsel %vm3068, %v3038, %v2817
      %v3072 = vsel %vm3068, %v3039, %v2819
      %v3073 = vsel %vm3068, %v3040, %v2821
      %v3074 = vsel %vm3068, %v3041, %v2823
      %v3075 = vsel %vm3068, %v3042, %v2825
      %v3076 = vsel %vm3068, %v3043, %v2827
      %v3077 = vsel %vm3068, %v3044, %v2829
      %v3078 = vsel %vm3068, %v3045, %v2831
      %v3079 = vsel %vm3068, %v3046, %v2833
      %v3080 = vsel %vm3068, %v3047, %v2835
      %v3081 = vsel %vm3068, %v3048, %v2837
      %v3082 = vsel %vm3068, %v3049, %v2839
      %v3083 = vsel %vm3068, %v3050, %v2841
      %v3084 = vsel %vm3068, %v3051, %v2843
      %v3085 = vsel %vm3068, %v3052, %v2845
      %v3086 = vsel %vm3068, %v3053, %v2847
      %v3087 = vsel %vm3068, %v3054, %v2849
      %v3088 = vsel %vm3068, %v3055, %v2851
      %v3089 = vsel %vm3068, %v3056, %v2853
      %v3090 = vsel %vm3068, %v3057, %v2855
      %v3091 = vsel %vm3068, %v3058, %v2857
      %v3092 = vsel %vm3068, %v3059, %v2859
      %v3093 = vsel %vm3068, %v3060, %v2861
      %v3094 = vsel %vm3068, %v3061, %v2863
      %v3095 = vsel %vm3068, %v3062, %v2865
      %v3096 = vsel %vm3068, %v3063, %v2867
      %v3097 = vsel %vm3068, %v3064, %v2869
      %v3098 = vsel %vm3068, %v3065, %v2871
      %v3099 = vsel %vm3068, %v3066, %v2873
      %v3100 = vsel %vm3068, %v3067, %v2875
      %vm3101 = vcmask 195584
      %v3102 = vsel %vm3101, %v3069, %v2941
      %v3103 = vsel %vm3101, %v3070, %v2943
      %v3104 = vsel %vm3101, %v3071, %v2945
      %v3105 = vsel %vm3101, %v3072, %v2947
      %v3106 = vsel %vm3101, %v3073, %v2949
      %v3107 = vsel %vm3101, %v3074, %v2951
      %v3108 = vsel %vm3101, %v3075, %v2953
      %v3109 = vsel %vm3101, %v3076, %v2955
      %v3110 = vsel %vm3101, %v3077, %v2957
      %v3111 = vsel %vm3101, %v3078, %v2959
      %v3112 = vsel %vm3101, %v3079, %v2961
      %v3113 = vsel %vm3101, %v3080, %v2963
      %v3114 = vsel %vm3101, %v3081, %v2965
      %v3115 = vsel %vm3101, %v3082, %v2967
      %v3116 = vsel %vm3101, %v3083, %v2969
      %v3117 = vsel %vm3101, %v3084, %v2971
      %v3118 = vsel %vm3101, %v3085, %v2973
      %v3119 = vsel %vm3101, %v3086, %v2975
      %v3120 = vsel %vm3101, %v3087, %v2977
      %v3121 = vsel %vm3101, %v3088, %v2979
      %v3122 = vsel %vm3101, %v3089, %v2981
      %v3123 = vsel %vm3101, %v3090, %v2983
      %v3124 = vsel %vm3101, %v3091, %v2985
      %v3125 = vsel %vm3101, %v3092, %v2987
      %v3126 = vsel %vm3101, %v3093, %v2989
      %v3127 = vsel %vm3101, %v3094, %v2991
      %v3128 = vsel %vm3101, %v3095, %v2993
      %v3129 = vsel %vm3101, %v3096, %v2995
      %v3130 = vsel %vm3101, %v3097, %v2997
      %v3131 = vsel %vm3101, %v3098, %v2999
      %v3132 = vsel %vm3101, %v3099, %v3001
      %v3133 = vsel %vm3101, %v3100, %v3003
      %v3134 = vld [vmem:[%s2] sm:$0xff]
      %v3135 = vld [vmem:[%s2 + $0x8] sm:$0xff]
      %v3136 = vld [vmem:[%s2 + $0x10] sm:$0xff]
      %v3137 = vld [vmem:[%s2 + $0x18] sm:$0xff]
      %v3138 = vld [vmem:[%s3] sm:$0xff]
      %v3139 = vld [vmem:[%s3 + $0x8] sm:$0xff]
      %v3140 = vld [vmem:[%s3 + $0x10] sm:$0xff]
      %v3141 = vld [vmem:[%s3 + $0x18] sm:$0xff]
      %v3142 = vld [vmem:[%s3 + $0x20] sm:$0xff]
      %v3143 = vld [vmem:[%s3 + $0x28] sm:$0xff]
      %v3144 = vld [vmem:[%s3 + $0x30] sm:$0xff]
      %v3145 = vld [vmem:[%s3 + $0x38] sm:$0xff]
      %v3146 = vld [vmem:[%s3 + $0x40] sm:$0xff]
      %v3147 = vld [vmem:[%s3 + $0x48] sm:$0xff]
      %v3148 = vld [vmem:[%s3 + $0x50] sm:$0xff]
      %v3149 = vld [vmem:[%s3 + $0x58] sm:$0xff]
      %v3150 = vld [vmem:[%s3 + $0x60] sm:$0xff]
      %v3151 = vld [vmem:[%s3 + $0x68] sm:$0xff]
      %v3152 = vld [vmem:[%s3 + $0x70] sm:$0xff]
      %v3153 = vld [vmem:[%s3 + $0x78] sm:$0xff]
      %v3154 = vld [vmem:[%s3 + $0x80] sm:$0xff]
      %v3155 = vld [vmem:[%s3 + $0x88] sm:$0xff]
      %v3156 = vld [vmem:[%s3 + $0x90] sm:$0xff]
      %v3157 = vld [vmem:[%s3 + $0x98] sm:$0xff]
      %v3158 = vld [vmem:[%s3 + $0xa0] sm:$0xff]
      %v3159 = vld [vmem:[%s3 + $0xa8] sm:$0xff]
      %v3160 = vld [vmem:[%s3 + $0xb0] sm:$0xff]
      %v3161 = vld [vmem:[%s3 + $0xb8] sm:$0xff]
      %v3162 = vld [vmem:[%s3 + $0xc0] sm:$0xff]
      %v3163 = vld [vmem:[%s3 + $0xc8] sm:$0xff]
      %v3164 = vld [vmem:[%s3 + $0xd0] sm:$0xff]
      %v3165 = vld [vmem:[%s3 + $0xd8] sm:$0xff]
      %v3166 = vld [vmem:[%s3 + $0xe0] sm:$0xff]
      %v3167 = vld [vmem:[%s3 + $0xe8] sm:$0xff]
      %v3168 = vld [vmem:[%s3 + $0xf0] sm:$0xff]
      %v3169 = vld [vmem:[%s3 + $0xf8] sm:$0xff]
      %vm3170 = vcmask 261120
      %v3172 = vsel %vm3170, %v3102, 0
      %v3175 = vsel %vm3170, %v3103, 0
      %v3178 = vsel %vm3170, %v3104, 0
      %v3181 = vsel %vm3170, %v3105, 0
      %v3184 = vsel %vm3170, %v3106, 0
      %v3187 = vsel %vm3170, %v3107, 0
      %v3190 = vsel %vm3170, %v3108, 0
      %v3193 = vsel %vm3170, %v3109, 0
      %v3196 = vsel %vm3170, %v3110, 0
      %v3199 = vsel %vm3170, %v3111, 0
      %v3202 = vsel %vm3170, %v3112, 0
      %v3205 = vsel %vm3170, %v3113, 0
      %v3208 = vsel %vm3170, %v3114, 0
      %v3211 = vsel %vm3170, %v3115, 0
      %v3214 = vsel %vm3170, %v3116, 0
      %v3217 = vsel %vm3170, %v3117, 0
      %v3220 = vsel %vm3170, %v3118, 0
      %v3223 = vsel %vm3170, %v3119, 0
      %v3226 = vsel %vm3170, %v3120, 0
      %v3229 = vsel %vm3170, %v3121, 0
      %v3232 = vsel %vm3170, %v3122, 0
      %v3235 = vsel %vm3170, %v3123, 0
      %v3238 = vsel %vm3170, %v3124, 0
      %v3241 = vsel %vm3170, %v3125, 0
      %v3244 = vsel %vm3170, %v3126, 0
      %v3247 = vsel %vm3170, %v3127, 0
      %v3250 = vsel %vm3170, %v3128, 0
      %v3253 = vsel %vm3170, %v3129, 0
      %v3256 = vsel %vm3170, %v3130, 0
      %v3259 = vsel %vm3170, %v3131, 0
      %v3262 = vsel %vm3170, %v3132, 0
      %v3265 = vsel %vm3170, %v3133, 0
      %3267 = vmatprep.subr.mxu0 0.0
      %3268 = vmatpush1.msra.mxu0 %v3134
      %3269 = vmatprep.subr.mxu0 0.0
      %3270 = vmatpush1.msra.mxu0 %v3135
      %3271 = vmatprep.subr.mxu0 0.0
      %3272 = vmatpush1.msra.mxu0 %v3136
      %3273 = vmatprep.subr.mxu0 0.0
      %3274 = vmatpush1.msra.mxu0 %v3137
      %3275 = vmatprep.subr.mxu0 0.0
      %3276 = vmatpush1.msra.mxu0 0.0
      %3277 = vmatprep.subr.mxu0 0.0
      %3278 = vmatpush1.msra.mxu0 0.0
      %3279 = vmatprep.subr.mxu0 0.0
      %3280 = vmatpush1.msra.mxu0 0.0
      %3281 = vmatprep.subr.mxu0 0.0
      %3282 = vmatpush1.msra.mxu0 0.0
      %3283 = vmatprep.subr.mxu0 0.0
      %3284 = vmatpush1.msra.mxu0 0.0
      %3285 = vmatprep.subr.mxu0 0.0
      %3286 = vmatpush1.msra.mxu0 0.0
      %3287 = vmatprep.subr.mxu0 0.0
      %3288 = vmatpush1.msra.mxu0 0.0
      %3289 = vmatprep.subr.mxu0 0.0
      %3290 = vmatpush1.msra.mxu0 0.0
      %3291 = vmatprep.subr.mxu0 0.0
      %3292 = vmatpush1.msra.mxu0 0.0
      %3293 = vmatprep.subr.mxu0 0.0
      %3294 = vmatpush1.msra.mxu0 0.0
      %3295 = vmatprep.subr.mxu0 0.0
      %3296 = vmatpush1.msra.mxu0 0.0
      %3297 = vmatprep.subr.mxu0 0.0
      %3298 = vmatpush1.msra.mxu0 0.0
      %3299 = vmatprep.subr.mxu0 0.0
      %3300 = vmatpush1.msra.mxu0 0.0
      %3301 = vmatprep.subr.mxu0 0.0
      %3302 = vmatpush1.msra.mxu0 0.0
      %3303 = vmatprep.subr.mxu0 0.0
      %3304 = vmatpush1.msra.mxu0 0.0
      %3305 = vmatprep.subr.mxu0 0.0
      %3306 = vmatpush1.msra.mxu0 0.0
      %3307 = vmatprep.subr.mxu0 0.0
      %3308 = vmatpush1.msra.mxu0 0.0
      %3309 = vmatprep.subr.mxu0 0.0
      %3310 = vmatpush1.msra.mxu0 0.0
      %3311 = vmatprep.subr.mxu0 0.0
      %3312 = vmatpush1.msra.mxu0 0.0
      %3313 = vmatprep.subr.mxu0 0.0
      %3314 = vmatpush1.msra.mxu0 0.0
      %3315 = vmatprep.subr.mxu0 0.0
      %3316 = vmatpush1.msra.mxu0 0.0
      %3317 = vmatprep.subr.mxu0 0.0
      %3318 = vmatpush1.msra.mxu0 0.0
      %3319 = vmatprep.subr.mxu0 0.0
      %3320 = vmatpush1.msra.mxu0 0.0
      %3321 = vmatprep.subr.mxu0 0.0
      %3322 = vmatpush1.msra.mxu0 0.0
      %3323 = vmatprep.subr.mxu0 0.0
      %3324 = vmatpush1.msra.mxu0 0.0
      %3325 = vmatprep.subr.mxu0 0.0
      %3326 = vmatpush1.msra.mxu0 0.0
      %3327 = vmatprep.subr.mxu0 0.0
      %3328 = vmatpush1.msra.mxu0 0.0
      %3329 = vmatprep.subr.mxu0 0.0
      %3330 = vmatpush1.msra.mxu0 0.0
      %3331 = vmatprep.mubr.f32.mxu0 0.0
      %3332 = vmatmul.mubr.f32.gmra.mrb[0].mxu0 %v3172
      %v3333 = vpop.f32.mrb[0].mxu0
      %v3334 = vadd.f32 %v3138, %v3333
      %v3335 = vpop.f32.mrb[0].mxu0
      %3336 = vmatprep.mubr.f32.mxu0 0.0
      %3337 = vmatmul.mubr.f32.gmra.mrb[0].mxu0 %v3175
      %v3338 = vpop.f32.mrb[0].mxu0
      %v3339 = vadd.f32 %v3139, %v3338
      %v3340 = vpop.f32.mrb[0].mxu0
      %3341 = vmatprep.mubr.f32.mxu0 0.0
      %3342 = vmatmul.mubr.f32.gmra.mrb[0].mxu0 %v3178
      %v3343 = vpop.f32.mrb[0].mxu0
      %v3344 = vadd.f32 %v3140, %v3343
      %v3345 = vpop.f32.mrb[0].mxu0
      %3346 = vmatprep.mubr.f32.mxu0 0.0
      %3347 = vmatmul.mubr.f32.gmra.mrb[0].mxu0 %v3181
      %v3348 = vpop.f32.mrb[0].mxu0
      %v3349 = vadd.f32 %v3141, %v3348
      %v3350 = vpop.f32.mrb[0].mxu0
      %3351 = vmatprep.mubr.f32.mxu0 0.0
      %3352 = vmatmul.mubr.f32.gmra.mrb[0].mxu0 %v3184
      %v3353 = vpop.f32.mrb[0].mxu0
      %v3354 = vadd.f32 %v3142, %v3353
      %v3355 = vpop.f32.mrb[0].mxu0
      %3356 = vmatprep.mubr.f32.mxu0 0.0
      %3357 = vmatmul.mubr.f32.gmra.mrb[0].mxu0 %v3187
      %v3358 = vpop.f32.mrb[0].mxu0
      %v3359 = vadd.f32 %v3143, %v3358
      %v3360 = vpop.f32.mrb[0].mxu0
      %3361 = vmatprep.mubr.f32.mxu0 0.0
      %3362 = vmatmul.mubr.f32.gmra.mrb[0].mxu0 %v3190
      %v3363 = vpop.f32.mrb[0].mxu0
      %v3364 = vadd.f32 %v3144, %v3363
      %v3365 = vpop.f32.mrb[0].mxu0
      %3366 = vmatprep.mubr.f32.mxu0 0.0
      %3367 = vmatmul.mubr.f32.gmra.mrb[0].mxu0 %v3193
      %v3368 = vpop.f32.mrb[0].mxu0
      %v3369 = vadd.f32 %v3145, %v3368
      %v3370 = vpop.f32.mrb[0].mxu0
      %3371 = vmatprep.mubr.f32.mxu0 0.0
      %3372 = vmatmul.mubr.f32.gmra.mrb[0].mxu0 %v3196
      %v3373 = vpop.f32.mrb[0].mxu0
      %v3374 = vadd.f32 %v3146, %v3373
      %v3375 = vpop.f32.mrb[0].mxu0
      %3376 = vmatprep.mubr.f32.mxu0 0.0
      %3377 = vmatmul.mubr.f32.gmra.mrb[0].mxu0 %v3199
      %v3378 = vpop.f32.mrb[0].mxu0
      %v3379 = vadd.f32 %v3147, %v3378
      %v3380 = vpop.f32.mrb[0].mxu0
      %3381 = vmatprep.mubr.f32.mxu0 0.0
      %3382 = vmatmul.mubr.f32.gmra.mrb[0].mxu0 %v3202
      %v3383 = vpop.f32.mrb[0].mxu0
      %v3384 = vadd.f32 %v3148, %v3383
      %v3385 = vpop.f32.mrb[0].mxu0
      %3386 = vmatprep.mubr.f32.mxu0 0.0
      %3387 = vmatmul.mubr.f32.gmra.mrb[0].mxu0 %v3205
      %v3388 = vpop.f32.mrb[0].mxu0
      %v3389 = vadd.f32 %v3149, %v3388
      %v3390 = vpop.f32.mrb[0].mxu0
      %3391 = vmatprep.mubr.f32.mxu0 0.0
      %3392 = vmatmul.mubr.f32.gmra.mrb[0].mxu0 %v3208
      %v3393 = vpop.f32.mrb[0].mxu0
      %v3394 = vadd.f32 %v3150, %v3393
      %v3395 = vpop.f32.mrb[0].mxu0
      %3396 = vmatprep.mubr.f32.mxu0 0.0
      %3397 = vmatmul.mubr.f32.gmra.mrb[0].mxu0 %v3211
      %v3398 = vpop.f32.mrb[0].mxu0
      %v3399 = vadd.f32 %v3151, %v3398
      %v3400 = vpop.f32.mrb[0].mxu0
      %3401 = vmatprep.mubr.f32.mxu0 0.0
      %3402 = vmatmul.mubr.f32.gmra.mrb[0].mxu0 %v3214
      %v3403 = vpop.f32.mrb[0].mxu0
      %v3404 = vadd.f32 %v3152, %v3403
      %v3405 = vpop.f32.mrb[0].mxu0
      %3406 = vmatprep.mubr.f32.mxu0 0.0
      %3407 = vmatmul.mubr.f32.gmra.mrb[0].mxu0 %v3217
      %v3408 = vpop.f32.mrb[0].mxu0
      %v3409 = vadd.f32 %v3153, %v3408
      %v3410 = vpop.f32.mrb[0].mxu0
      %3411 = vmatprep.mubr.f32.mxu0 0.0
      %3412 = vmatmul.mubr.f32.gmra.mrb[0].mxu0 %v3220
      %v3413 = vpop.f32.mrb[0].mxu0
      %v3414 = vadd.f32 %v3154, %v3413
      %v3415 = vpop.f32.mrb[0].mxu0
      %3416 = vmatprep.mubr.f32.mxu0 0.0
      %3417 = vmatmul.mubr.f32.gmra.mrb[0].mxu0 %v3223
      %v3418 = vpop.f32.mrb[0].mxu0
      %v3419 = vadd.f32 %v3155, %v3418
      %v3420 = vpop.f32.mrb[0].mxu0
      %3421 = vmatprep.mubr.f32.mxu0 0.0
      %3422 = vmatmul.mubr.f32.gmra.mrb[0].mxu0 %v3226
      %v3423 = vpop.f32.mrb[0].mxu0
      %v3424 = vadd.f32 %v3156, %v3423
      %v3425 = vpop.f32.mrb[0].mxu0
      %3426 = vmatprep.mubr.f32.mxu0 0.0
      %3427 = vmatmul.mubr.f32.gmra.mrb[0].mxu0 %v3229
      %v3428 = vpop.f32.mrb[0].mxu0
      %v3429 = vadd.f32 %v3157, %v3428
      %v3430 = vpop.f32.mrb[0].mxu0
      %3431 = vmatprep.mubr.f32.mxu0 0.0
      %3432 = vmatmul.mubr.f32.gmra.mrb[0].mxu0 %v3232
      %v3433 = vpop.f32.mrb[0].mxu0
      %v3434 = vadd.f32 %v3158, %v3433
      %v3435 = vpop.f32.mrb[0].mxu0
      %3436 = vmatprep.mubr.f32.mxu0 0.0
      %3437 = vmatmul.mubr.f32.gmra.mrb[0].mxu0 %v3235
      %v3438 = vpop.f32.mrb[0].mxu0
      %v3439 = vadd.f32 %v3159, %v3438
      %v3440 = vpop.f32.mrb[0].mxu0
      %3441 = vmatprep.mubr.f32.mxu0 0.0
      %3442 = vmatmul.mubr.f32.gmra.mrb[0].mxu0 %v3238
      %v3443 = vpop.f32.mrb[0].mxu0
      %v3444 = vadd.f32 %v3160, %v3443
      %v3445 = vpop.f32.mrb[0].mxu0
      %3446 = vmatprep.mubr.f32.mxu0 0.0
      %3447 = vmatmul.mubr.f32.gmra.mrb[0].mxu0 %v3241
      %v3448 = vpop.f32.mrb[0].mxu0
      %v3449 = vadd.f32 %v3161, %v3448
      %v3450 = vpop.f32.mrb[0].mxu0
      %3451 = vmatprep.mubr.f32.mxu0 0.0
      %3452 = vmatmul.mubr.f32.gmra.mrb[0].mxu0 %v3244
      %v3453 = vpop.f32.mrb[0].mxu0
      %v3454 = vadd.f32 %v3162, %v3453
      %v3455 = vpop.f32.mrb[0].mxu0
      %3456 = vmatprep.mubr.f32.mxu0 0.0
      %3457 = vmatmul.mubr.f32.gmra.mrb[0].mxu0 %v3247
      %v3458 = vpop.f32.mrb[0].mxu0
      %v3459 = vadd.f32 %v3163, %v3458
      %v3460 = vpop.f32.mrb[0].mxu0
      %3461 = vmatprep.mubr.f32.mxu0 0.0
      %3462 = vmatmul.mubr.f32.gmra.mrb[0].mxu0 %v3250
      %v3463 = vpop.f32.mrb[0].mxu0
      %v3464 = vadd.f32 %v3164, %v3463
      %v3465 = vpop.f32.mrb[0].mxu0
      %3466 = vmatprep.mubr.f32.mxu0 0.0
      %3467 = vmatmul.mubr.f32.gmra.mrb[0].mxu0 %v3253
      %v3468 = vpop.f32.mrb[0].mxu0
      %v3469 = vadd.f32 %v3165, %v3468
      %v3470 = vpop.f32.mrb[0].mxu0
      %3471 = vmatprep.mubr.f32.mxu0 0.0
      %3472 = vmatmul.mubr.f32.gmra.mrb[0].mxu0 %v3256
      %v3473 = vpop.f32.mrb[0].mxu0
      %v3474 = vadd.f32 %v3166, %v3473
      %v3475 = vpop.f32.mrb[0].mxu0
      %3476 = vmatprep.mubr.f32.mxu0 0.0
      %3477 = vmatmul.mubr.f32.gmra.mrb[0].mxu0 %v3259
      %v3478 = vpop.f32.mrb[0].mxu0
      %v3479 = vadd.f32 %v3167, %v3478
      %v3480 = vpop.f32.mrb[0].mxu0
      %3481 = vmatprep.mubr.f32.mxu0 0.0
      %3482 = vmatmul.mubr.f32.gmra.mrb[0].mxu0 %v3262
      %v3483 = vpop.f32.mrb[0].mxu0
      %v3484 = vadd.f32 %v3168, %v3483
      %v3485 = vpop.f32.mrb[0].mxu0
      %3486 = vmatprep.mubr.f32.mxu0 0.0
      %3487 = vmatmul.mubr.f32.gmra.mrb[0].mxu0 %v3265
      %v3488 = vpop.f32.mrb[0].mxu0
      %v3489 = vadd.f32 %v3169, %v3488
      %v3490 = vpop.f32.mrb[0].mxu0
      %3491 = vdwg.mxu0
      %v3492 = vmax.f32 %v3334, 0.0
      %v3493 = vmax.f32 %v3339, 0.0
      %v3494 = vmax.f32 %v3344, 0.0
      %v3495 = vmax.f32 %v3349, 0.0
      %v3496 = vmax.f32 %v3354, 0.0
      %v3497 = vmax.f32 %v3359, 0.0
      %v3498 = vmax.f32 %v3364, 0.0
      %v3499 = vmax.f32 %v3369, 0.0
      %v3500 = vmax.f32 %v3374, 0.0
      %v3501 = vmax.f32 %v3379, 0.0
      %v3502 = vmax.f32 %v3384, 0.0
      %v3503 = vmax.f32 %v3389, 0.0
      %v3504 = vmax.f32 %v3394, 0.0
      %v3505 = vmax.f32 %v3399, 0.0
      %v3506 = vmax.f32 %v3404, 0.0
      %v3507 = vmax.f32 %v3409, 0.0
      %v3508 = vmax.f32 %v3414, 0.0
      %v3509 = vmax.f32 %v3419, 0.0
      %v3510 = vmax.f32 %v3424, 0.0
      %v3511 = vmax.f32 %v3429, 0.0
      %v3512 = vmax.f32 %v3434, 0.0
      %v3513 = vmax.f32 %v3439, 0.0
      %v3514 = vmax.f32 %v3444, 0.0
      %v3515 = vmax.f32 %v3449, 0.0
      %v3516 = vmax.f32 %v3454, 0.0
      %v3517 = vmax.f32 %v3459, 0.0
      %v3518 = vmax.f32 %v3464, 0.0
      %v3519 = vmax.f32 %v3469, 0.0
      %v3520 = vmax.f32 %v3474, 0.0
      %v3521 = vmax.f32 %v3479, 0.0
      %v3522 = vmax.f32 %v3484, 0.0
      %v3523 = vmax.f32 %v3489, 0.0
      %v3524 = vld [vmem:[%s6] sm:$0xff]
      %v3525 = vld [vmem:[%s6 + $0x8] sm:$0xff]
      %v3526 = vld [vmem:[%s6 + $0x10] sm:$0xff]
      %v3527 = vld [vmem:[%s6 + $0x18] sm:$0xff]
      %v3528 = vld [vmem:[%s6 + $0x20] sm:$0xff]
      %v3529 = vld [vmem:[%s6 + $0x28] sm:$0xff]
      %v3530 = vld [vmem:[%s6 + $0x30] sm:$0xff]
      %v3531 = vld [vmem:[%s6 + $0x38] sm:$0xff]
      %v3532 = vld [vmem:[%s6 + $0x40] sm:$0xff]
      %v3533 = vld [vmem:[%s6 + $0x48] sm:$0xff]
      %v3534 = vld [vmem:[%s6 + $0x50] sm:$0xff]
      %v3535 = vld [vmem:[%s6 + $0x58] sm:$0xff]
      %v3536 = vld [vmem:[%s6 + $0x60] sm:$0xff]
      %v3537 = vld [vmem:[%s6 + $0x68] sm:$0xff]
      %v3538 = vld [vmem:[%s6 + $0x70] sm:$0xff]
      %v3539 = vld [vmem:[%s6 + $0x78] sm:$0xff]
      %v3540 = vsel %vm409, %v377, 0.0
      %v3541 = vsel %vm409, %v378, 0.0
      %v3542 = vadd.f32 %v3540, %v3541
      %v3543 = vsel %vm409, %v379, 0.0
      %v3544 = vadd.f32 %v3542, %v3543
      %v3545 = vsel %vm409, %v380, 0.0
      %v3546 = vadd.f32 %v3544, %v3545
      %v3547 = vsel %vm409, %v381, 0.0
      %v3548 = vadd.f32 %v3546, %v3547
      %v3549 = vsel %vm409, %v382, 0.0
      %v3550 = vadd.f32 %v3548, %v3549
      %v3551 = vsel %vm409, %v383, 0.0
      %v3552 = vadd.f32 %v3550, %v3551
      %v3553 = vsel %vm409, %v384, 0.0
      %v3554 = vadd.f32 %v3552, %v3553
      %v3555 = vsel %vm409, %v385, 0.0
      %v3556 = vadd.f32 %v3554, %v3555
      %v3557 = vsel %vm409, %v386, 0.0
      %v3558 = vadd.f32 %v3556, %v3557
      %v3559 = vsel %vm409, %v387, 0.0
      %v3560 = vadd.f32 %v3558, %v3559
      %v3561 = vsel %vm409, %v388, 0.0
      %v3562 = vadd.f32 %v3560, %v3561
      %v3563 = vsel %vm409, %v389, 0.0
      %v3564 = vadd.f32 %v3562, %v3563
      %v3565 = vsel %vm409, %v390, 0.0
      %v3566 = vadd.f32 %v3564, %v3565
      %v3567 = vsel %vm409, %v391, 0.0
      %v3568 = vadd.f32 %v3566, %v3567
      %v3569 = vsel %vm409, %v392, 0.0
      %v3570 = vadd.f32 %v3568, %v3569
      %v3571 = vsel %vm409, %v393, 0.0
      %v3572 = vadd.f32 %v3570, %v3571
      %v3573 = vsel %vm409, %v394, 0.0
      %v3574 = vadd.f32 %v3572, %v3573
      %v3575 = vsel %vm409, %v395, 0.0
      %v3576 = vadd.f32 %v3574, %v3575
      %v3577 = vsel %vm409, %v396, 0.0
      %v3578 = vadd.f32 %v3576, %v3577
      %v3579 = vsel %vm409, %v397, 0.0
      %v3580 = vadd.f32 %v3578, %v3579
      %v3581 = vsel %vm409, %v398, 0.0
      %v3582 = vadd.f32 %v3580, %v3581
      %v3583 = vsel %vm409, %v399, 0.0
      %v3584 = vadd.f32 %v3582, %v3583
      %v3585 = vsel %vm409, %v400, 0.0
      %v3586 = vadd.f32 %v3584, %v3585
      %v3587 = vsel %vm409, %v401, 0.0
      %v3588 = vadd.f32 %v3586, %v3587
      %v3589 = vsel %vm409, %v402, 0.0
      %v3590 = vadd.f32 %v3588, %v3589
      %v3591 = vsel %vm409, %v403, 0.0
      %v3592 = vadd.f32 %v3590, %v3591
      %v3593 = vsel %vm409, %v404, 0.0
      %v3594 = vadd.f32 %v3592, %v3593
      %v3595 = vsel %vm409, %v405, 0.0
      %v3596 = vadd.f32 %v3594, %v3595
      %v3597 = vsel %vm409, %v406, 0.0
      %v3598 = vadd.f32 %v3596, %v3597
      %v3599 = vsel %vm409, %v407, 0.0
      %v3600 = vadd.f32 %v3598, %v3599
      %v3601 = vsel %vm409, %v408, 0.0
      %v3602 = vadd.f32 %v3600, %v3601
      %v3603 = vrot.slane %v3602, 4
      %v3604 = vadd.f32 %v3602, %v3603
      %v3605 = vrot.slane %v3604, 2
      %v3606 = vadd.f32 %v3604, %v3605
      %v3607 = vrot.slane %v3606, 1
      %v3608 = vadd.f32 %v3606, %v3607
      %v3609 = vrcp.pop 256.0
      %v3610 = vmul.f32 %v3608, %v3609
      %v3611 = vld [vmem:[%s4] sm:$0xff]
      %v3612 = vld [vmem:[%s5] sm:$0x1]
      %v3614 = vsel %vm409, %v3610, 0
      %3616 = vmatprep.subr.mxu0 0.0
      %3617 = vmatpush1.msra.mxu0 %v3611
      %3618 = vmatprep.subr.mxu0 0.0
      %3619 = vmatpush1.msra.mxu0 0.0
      %3620 = vmatprep.subr.mxu0 0.0
      %3621 = vmatpush1.msra.mxu0 0.0
      %3622 = vmatprep.subr.mxu0 0.0
      %3623 = vmatpush1.msra.mxu0 0.0
      %3624 = vmatprep.subr.mxu0 0.0
      %3625 = vmatpush1.msra.mxu0 0.0
      %3626 = vmatprep.subr.mxu0 0.0
      %3627 = vmatpush1.msra.mxu0 0.0
      %3628 = vmatprep.subr.mxu0 0.0
      %3629 = vmatpush1.msra.mxu0 0.0
      %3630 = vmatprep.subr.mxu0 0.0
      %3631 = vmatpush1.msra.mxu0 0.0
      %3632 = vmatprep.subr.mxu0 0.0
      %3633 = vmatpush1.msra.mxu0 0.0
      %3634 = vmatprep.subr.mxu0 0.0
      %3635 = vmatpush1.msra.mxu0 0.0
      %3636 = vmatprep.subr.mxu0 0.0
      %3637 = vmatpush1.msra.mxu0 0.0
      %3638 = vmatprep.subr.mxu0 0.0
      %3639 = vmatpush1.msra.mxu0 0.0
      %3640 = vmatprep.subr.mxu0 0.0
      %3641 = vmatpush1.msra.mxu0 0.0
      %3642 = vmatprep.subr.mxu0 0.0
      %3643 = vmatpush1.msra.mxu0 0.0
      %3644 = vmatprep.subr.mxu0 0.0
      %3645 = vmatpush1.msra.mxu0 0.0
      %3646 = vmatprep.subr.mxu0 0.0
      %3647 = vmatpush1.msra.mxu0 0.0
      %3648 = vmatprep.subr.mxu0 0.0
      %3649 = vmatpush1.msra.mxu0 0.0
      %3650 = vmatprep.subr.mxu0 0.0
      %3651 = vmatpush1.msra.mxu0 0.0
      %3652 = vmatprep.subr.mxu0 0.0
      %3653 = vmatpush1.msra.mxu0 0.0
      %3654 = vmatprep.subr.mxu0 0.0
      %3655 = vmatpush1.msra.mxu0 0.0
      %3656 = vmatprep.subr.mxu0 0.0
      %3657 = vmatpush1.msra.mxu0 0.0
      %3658 = vmatprep.subr.mxu0 0.0
      %3659 = vmatpush1.msra.mxu0 0.0
      %3660 = vmatprep.subr.mxu0 0.0
      %3661 = vmatpush1.msra.mxu0 0.0
      %3662 = vmatprep.subr.mxu0 0.0
      %3663 = vmatpush1.msra.mxu0 0.0
      %3664 = vmatprep.subr.mxu0 0.0
      %3665 = vmatpush1.msra.mxu0 0.0
      %3666 = vmatprep.subr.mxu0 0.0
      %3667 = vmatpush1.msra.mxu0 0.0
      %3668 = vmatprep.subr.mxu0 0.0
      %3669 = vmatpush1.msra.mxu0 0.0
      %3670 = vmatprep.subr.mxu0 0.0
      %3671 = vmatpush1.msra.mxu0 0.0
      %3672 = vmatprep.subr.mxu0 0.0
      %3673 = vmatpush1.msra.mxu0 0.0
      %3674 = vmatprep.subr.mxu0 0.0
      %3675 = vmatpush1.msra.mxu0 0.0
      %3676 = vmatprep.subr.mxu0 0.0
      %3677 = vmatpush1.msra.mxu0 0.0
      %3678 = vmatprep.subr.mxu0 0.0
      %3679 = vmatpush1.msra.mxu0 0.0
      %3680 = vmatprep.mubr.f32.mxu0 0.0
      %3681 = vmatmul.mubr.f32.gmra.mrb[0].mxu0 %v3614
      %v3682 = vpop.f32.mrb[0].mxu0
      %v3683 = vadd.f32 %v3612, %v3682
      %v3684 = vpop.f32.mrb[0].mxu0
      %3685 = vdwg.mxu0
      %v3686 = vmax.f32 %v3683, 0.0
      %v3687 = vld [vmem:[%s7] sm:$0xff]
      %v3688 = vld [vmem:[%s7 + $0x8] sm:$0xff]
      %v3689 = vld [vmem:[%s7 + $0x10] sm:$0xff]
      %v3690 = vld [vmem:[%s7 + $0x18] sm:$0xff]
      %v3692 = vsel %vm3170, %v3686, 0
      %3694 = vmatprep.subr.mxu0 0.0
      %3695 = vmatpush1.msra.mxu0 %v3687
      %3696 = vmatprep.subr.mxu0 0.0
      %3697 = vmatpush1.msra.mxu0 %v3688
      %3698 = vmatprep.subr.mxu0 0.0
      %3699 = vmatpush1.msra.mxu0 %v3689
      %3700 = vmatprep.subr.mxu0 0.0
      %3701 = vmatpush1.msra.mxu0 %v3690
      %3702 = vmatprep.subr.mxu0 0.0
      %3703 = vmatpush1.msra.mxu0 0.0
      %3704 = vmatprep.subr.mxu0 0.0
      %3705 = vmatpush1.msra.mxu0 0.0
      %3706 = vmatprep.subr.mxu0 0.0
      %3707 = vmatpush1.msra.mxu0 0.0
      %3708 = vmatprep.subr.mxu0 0.0
      %3709 = vmatpush1.msra.mxu0 0.0
      %3710 = vmatprep.subr.mxu0 0.0
      %3711 = vmatpush1.msra.mxu0 0.0
      %3712 = vmatprep.subr.mxu0 0.0
      %3713 = vmatpush1.msra.mxu0 0.0
      %3714 = vmatprep.subr.mxu0 0.0
      %3715 = vmatpush1.msra.mxu0 0.0
      %3716 = vmatprep.subr.mxu0 0.0
      %3717 = vmatpush1.msra.mxu0 0.0
      %3718 = vmatprep.subr.mxu0 0.0
      %3719 = vmatpush1.msra.mxu0 0.0
      %3720 = vmatprep.subr.mxu0 0.0
      %3721 = vmatpush1.msra.mxu0 0.0
      %3722 = vmatprep.subr.mxu0 0.0
      %3723 = vmatpush1.msra.mxu0 0.0
      %3724 = vmatprep.subr.mxu0 0.0
      %3725 = vmatpush1.msra.mxu0 0.0
      %3726 = vmatprep.subr.mxu0 0.0
      %3727 = vmatpush1.msra.mxu0 0.0
      %3728 = vmatprep.subr.mxu0 0.0
      %3729 = vmatpush1.msra.mxu0 0.0
      %3730 = vmatprep.subr.mxu0 0.0
      %3731 = vmatpush1.msra.mxu0 0.0
      %3732 = vmatprep.subr.mxu0 0.0
      %3733 = vmatpush1.msra.mxu0 0.0
      %3734 = vmatprep.subr.mxu0 0.0
      %3735 = vmatpush1.msra.mxu0 0.0
      %3736 = vmatprep.subr.mxu0 0.0
      %3737 = vmatpush1.msra.mxu0 0.0
      %3738 = vmatprep.subr.mxu0 0.0
      %3739 = vmatpush1.msra.mxu0 0.0
      %3740 = vmatprep.subr.mxu0 0.0
      %3741 = vmatpush1.msra.mxu0 0.0
      %3742 = vmatprep.subr.mxu0 0.0
      %3743 = vmatpush1.msra.mxu0 0.0
      %3744 = vmatprep.subr.mxu0 0.0
      %3745 = vmatpush1.msra.mxu0 0.0
      %3746 = vmatprep.subr.mxu0 0.0
      %3747 = vmatpush1.msra.mxu0 0.0
      %3748 = vmatprep.subr.mxu0 0.0
      %3749 = vmatpush1.msra.mxu0 0.0
      %3750 = vmatprep.subr.mxu0 0.0
      %3751 = vmatpush1.msra.mxu0 0.0
      %3752 = vmatprep.subr.mxu0 0.0
      %3753 = vmatpush1.msra.mxu0 0.0
      %3754 = vmatprep.subr.mxu0 0.0
      %3755 = vmatpush1.msra.mxu0 0.0
      %3756 = vmatprep.subr.mxu0 0.0
      %3757 = vmatpush1.msra.mxu0 0.0
      %3758 = vmatprep.mubr.f32.mxu0 0.0
      %3759 = vmatmul.mubr.f32.gmra.mrb[0].mxu0 %v3692
      %v3760 = vpop.f32.mrb[0].mxu0
      %v3761 = vadd.f32 0.0, %v3760
      %v3762 = vpop.f32.mrb[0].mxu0
      %3763 = vdwg.mxu0
      %v3764 = vlaneseq
      %v3765 = vshrl.u32 %v3764, 7
      %v3766 = vsub.s32 0, %v3765
      %v3767 = vrot.slane %v3761, %v3766
      %3768 = vmatprep.subr.mxu0 0.0
      %3769 = vmatpush1.msra.mxu0 %v3524
      %3770 = vmatprep.subr.mxu0 0.0
      %3771 = vmatpush1.msra.mxu0 %v3525
      %3772 = vmatprep.subr.mxu0 0.0
      %3773 = vmatpush1.msra.mxu0 %v3526
      %3774 = vmatprep.subr.mxu0 0.0
      %3775 = vmatpush1.msra.mxu0 %v3527
      %3776 = vmatprep.subr.mxu0 0.0
      %3777 = vmatpush1.msra.mxu0 %v3528
      %3778 = vmatprep.subr.mxu0 0.0
      %3779 = vmatpush1.msra.mxu0 %v3529
      %3780 = vmatprep.subr.mxu0 0.0
      %3781 = vmatpush1.msra.mxu0 %v3530
      %3782 = vmatprep.subr.mxu0 0.0
      %3783 = vmatpush1.msra.mxu0 %v3531
      %3784 = vmatprep.subr.mxu0 0.0
      %3785 = vmatpush1.msra.mxu0 %v3532
      %3786 = vmatprep.subr.mxu0 0.0
      %3787 = vmatpush1.msra.mxu0 %v3533
      %3788 = vmatprep.subr.mxu0 0.0
      %3789 = vmatpush1.msra.mxu0 %v3534
      %3790 = vmatprep.subr.mxu0 0.0
      %3791 = vmatpush1.msra.mxu0 %v3535
      %3792 = vmatprep.subr.mxu0 0.0
      %3793 = vmatpush1.msra.mxu0 %v3536
      %3794 = vmatprep.subr.mxu0 0.0
      %3795 = vmatpush1.msra.mxu0 %v3537
      %3796 = vmatprep.subr.mxu0 0.0
      %3797 = vmatpush1.msra.mxu0 %v3538
      %3798 = vmatprep.subr.mxu0 0.0
      %3799 = vmatpush1.msra.mxu0 %v3539
      %3800 = vmatprep.subr.mxu0 0.0
      %3801 = vmatpush1.msra.mxu0 0.0
      %3802 = vmatprep.subr.mxu0 0.0
      %3803 = vmatpush1.msra.mxu0 0.0
      %3804 = vmatprep.subr.mxu0 0.0
      %3805 = vmatpush1.msra.mxu0 0.0
      %3806 = vmatprep.subr.mxu0 0.0
      %3807 = vmatpush1.msra.mxu0 0.0
      %3808 = vmatprep.subr.mxu0 0.0
      %3809 = vmatpush1.msra.mxu0 0.0
      %3810 = vmatprep.subr.mxu0 0.0
      %3811 = vmatpush1.msra.mxu0 0.0
      %3812 = vmatprep.subr.mxu0 0.0
      %3813 = vmatpush1.msra.mxu0 0.0
      %3814 = vmatprep.subr.mxu0 0.0
      %3815 = vmatpush1.msra.mxu0 0.0
      %3816 = vmatprep.subr.mxu0 0.0
      %3817 = vmatpush1.msra.mxu0 0.0
      %3818 = vmatprep.subr.mxu0 0.0
      %3819 = vmatpush1.msra.mxu0 0.0
      %3820 = vmatprep.subr.mxu0 0.0
      %3821 = vmatpush1.msra.mxu0 0.0
      %3822 = vmatprep.subr.mxu0 0.0
      %3823 = vmatpush1.msra.mxu0 0.0
      %3824 = vmatprep.subr.mxu0 0.0
      %3825 = vmatpush1.msra.mxu0 0.0
      %3826 = vmatprep.subr.mxu0 0.0
      %3827 = vmatpush1.msra.mxu0 0.0
      %3828 = vmatprep.subr.mxu0 0.0
      %3829 = vmatpush1.msra.mxu0 0.0
      %3830 = vmatprep.subr.mxu0 0.0
      %3831 = vmatpush1.msra.mxu0 0.0
      %3832 = vmatprep.mubr.f32.mxu0 0.0
      %3833 = vmatmul.mubr.f32.gmra.mrb[0].mxu0 %v3492
      %v3834 = vpop.f32.mrb[0].mxu0
      %v3835 = vadd.f32 %v3767, %v3834
      %v3836 = vpop.f32.mrb[0].mxu0
      %3837 = vmatprep.mubr.f32.mxu0 0.0
      %3838 = vmatmul.mubr.f32.gmra.mrb[0].mxu0 %v3493
      %v3839 = vpop.f32.mrb[0].mxu0
      %v3840 = vadd.f32 %v3767, %v3839
      %v3841 = vpop.f32.mrb[0].mxu0
      %3842 = vmatprep.mubr.f32.mxu0 0.0
      %3843 = vmatmul.mubr.f32.gmra.mrb[0].mxu0 %v3494
      %v3844 = vpop.f32.mrb[0].mxu0
      %v3845 = vadd.f32 %v3767, %v3844
      %v3846 = vpop.f32.mrb[0].mxu0
      %3847 = vmatprep.mubr.f32.mxu0 0.0
      %3848 = vmatmul.mubr.f32.gmra.mrb[0].mxu0 %v3495
      %v3849 = vpop.f32.mrb[0].mxu0
      %v3850 = vadd.f32 %v3767, %v3849
      %v3851 = vpop.f32.mrb[0].mxu0
      %3852 = vmatprep.mubr.f32.mxu0 0.0
      %3853 = vmatmul.mubr.f32.gmra.mrb[0].mxu0 %v3496
      %v3854 = vpop.f32.mrb[0].mxu0
      %v3855 = vadd.f32 %v3767, %v3854
      %v3856 = vpop.f32.mrb[0].mxu0
      %3857 = vmatprep.mubr.f32.mxu0 0.0
      %3858 = vmatmul.mubr.f32.gmra.mrb[0].mxu0 %v3497
      %v3859 = vpop.f32.mrb[0].mxu0
      %v3860 = vadd.f32 %v3767, %v3859
      %v3861 = vpop.f32.mrb[0].mxu0
      %3862 = vmatprep.mubr.f32.mxu0 0.0
      %3863 = vmatmul.mubr.f32.gmra.mrb[0].mxu0 %v3498
      %v3864 = vpop.f32.mrb[0].mxu0
      %v3865 = vadd.f32 %v3767, %v3864
      %v3866 = vpop.f32.mrb[0].mxu0
      %3867 = vmatprep.mubr.f32.mxu0 0.0
      %3868 = vmatmul.mubr.f32.gmra.mrb[0].mxu0 %v3499
      %v3869 = vpop.f32.mrb[0].mxu0
      %v3870 = vadd.f32 %v3767, %v3869
      %v3871 = vpop.f32.mrb[0].mxu0
      %3872 = vmatprep.mubr.f32.mxu0 0.0
      %3873 = vmatmul.mubr.f32.gmra.mrb[0].mxu0 %v3500
      %v3874 = vpop.f32.mrb[0].mxu0
      %v3875 = vadd.f32 %v3767, %v3874
      %v3876 = vpop.f32.mrb[0].mxu0
      %3877 = vmatprep.mubr.f32.mxu0 0.0
      %3878 = vmatmul.mubr.f32.gmra.mrb[0].mxu0 %v3501
      %v3879 = vpop.f32.mrb[0].mxu0
      %v3880 = vadd.f32 %v3767, %v3879
      %v3881 = vpop.f32.mrb[0].mxu0
      %3882 = vmatprep.mubr.f32.mxu0 0.0
      %3883 = vmatmul.mubr.f32.gmra.mrb[0].mxu0 %v3502
      %v3884 = vpop.f32.mrb[0].mxu0
      %v3885 = vadd.f32 %v3767, %v3884
      %v3886 = vpop.f32.mrb[0].mxu0
      %3887 = vmatprep.mubr.f32.mxu0 0.0
      %3888 = vmatmul.mubr.f32.gmra.mrb[0].mxu0 %v3503
      %v3889 = vpop.f32.mrb[0].mxu0
      %v3890 = vadd.f32 %v3767, %v3889
      %v3891 = vpop.f32.mrb[0].mxu0
      %3892 = vmatprep.mubr.f32.mxu0 0.0
      %3893 = vmatmul.mubr.f32.gmra.mrb[0].mxu0 %v3504
      %v3894 = vpop.f32.mrb[0].mxu0
      %v3895 = vadd.f32 %v3767, %v3894
      %v3896 = vpop.f32.mrb[0].mxu0
      %3897 = vmatprep.mubr.f32.mxu0 0.0
      %3898 = vmatmul.mubr.f32.gmra.mrb[0].mxu0 %v3505
      %v3899 = vpop.f32.mrb[0].mxu0
      %v3900 = vadd.f32 %v3767, %v3899
      %v3901 = vpop.f32.mrb[0].mxu0
      %3902 = vmatprep.mubr.f32.mxu0 0.0
      %3903 = vmatmul.mubr.f32.gmra.mrb[0].mxu0 %v3506
      %v3904 = vpop.f32.mrb[0].mxu0
      %v3905 = vadd.f32 %v3767, %v3904
      %v3906 = vpop.f32.mrb[0].mxu0
      %3907 = vmatprep.mubr.f32.mxu0 0.0
      %3908 = vmatmul.mubr.f32.gmra.mrb[0].mxu0 %v3507
      %v3909 = vpop.f32.mrb[0].mxu0
      %v3910 = vadd.f32 %v3767, %v3909
      %v3911 = vpop.f32.mrb[0].mxu0
      %3912 = vmatprep.mubr.f32.mxu0 0.0
      %3913 = vmatmul.mubr.f32.gmra.mrb[0].mxu0 %v3508
      %v3914 = vpop.f32.mrb[0].mxu0
      %v3915 = vadd.f32 %v3767, %v3914
      %v3916 = vpop.f32.mrb[0].mxu0
      %3917 = vmatprep.mubr.f32.mxu0 0.0
      %3918 = vmatmul.mubr.f32.gmra.mrb[0].mxu0 %v3509
      %v3919 = vpop.f32.mrb[0].mxu0
      %v3920 = vadd.f32 %v3767, %v3919
      %v3921 = vpop.f32.mrb[0].mxu0
      %3922 = vmatprep.mubr.f32.mxu0 0.0
      %3923 = vmatmul.mubr.f32.gmra.mrb[0].mxu0 %v3510
      %v3924 = vpop.f32.mrb[0].mxu0
      %v3925 = vadd.f32 %v3767, %v3924
      %v3926 = vpop.f32.mrb[0].mxu0
      %3927 = vmatprep.mubr.f32.mxu0 0.0
      %3928 = vmatmul.mubr.f32.gmra.mrb[0].mxu0 %v3511
      %v3929 = vpop.f32.mrb[0].mxu0
      %v3930 = vadd.f32 %v3767, %v3929
      %v3931 = vpop.f32.mrb[0].mxu0
      %3932 = vmatprep.mubr.f32.mxu0 0.0
      %3933 = vmatmul.mubr.f32.gmra.mrb[0].mxu0 %v3512
      %v3934 = vpop.f32.mrb[0].mxu0
      %v3935 = vadd.f32 %v3767, %v3934
      %v3936 = vpop.f32.mrb[0].mxu0
      %3937 = vmatprep.mubr.f32.mxu0 0.0
      %3938 = vmatmul.mubr.f32.gmra.mrb[0].mxu0 %v3513
      %v3939 = vpop.f32.mrb[0].mxu0
      %v3940 = vadd.f32 %v3767, %v3939
      %v3941 = vpop.f32.mrb[0].mxu0
      %3942 = vmatprep.mubr.f32.mxu0 0.0
      %3943 = vmatmul.mubr.f32.gmra.mrb[0].mxu0 %v3514
      %v3944 = vpop.f32.mrb[0].mxu0
      %v3945 = vadd.f32 %v3767, %v3944
      %v3946 = vpop.f32.mrb[0].mxu0
      %3947 = vmatprep.mubr.f32.mxu0 0.0
      %3948 = vmatmul.mubr.f32.gmra.mrb[0].mxu0 %v3515
      %v3949 = vpop.f32.mrb[0].mxu0
      %v3950 = vadd.f32 %v3767, %v3949
      %v3951 = vpop.f32.mrb[0].mxu0
      %3952 = vmatprep.mubr.f32.mxu0 0.0
      %3953 = vmatmul.mubr.f32.gmra.mrb[0].mxu0 %v3516
      %v3954 = vpop.f32.mrb[0].mxu0
      %v3955 = vadd.f32 %v3767, %v3954
      %v3956 = vpop.f32.mrb[0].mxu0
      %3957 = vmatprep.mubr.f32.mxu0 0.0
      %3958 = vmatmul.mubr.f32.gmra.mrb[0].mxu0 %v3517
      %v3959 = vpop.f32.mrb[0].mxu0
      %v3960 = vadd.f32 %v3767, %v3959
      %v3961 = vpop.f32.mrb[0].mxu0
      %3962 = vmatprep.mubr.f32.mxu0 0.0
      %3963 = vmatmul.mubr.f32.gmra.mrb[0].mxu0 %v3518
      %v3964 = vpop.f32.mrb[0].mxu0
      %v3965 = vadd.f32 %v3767, %v3964
      %v3966 = vpop.f32.mrb[0].mxu0
      %3967 = vmatprep.mubr.f32.mxu0 0.0
      %3968 = vmatmul.mubr.f32.gmra.mrb[0].mxu0 %v3519
      %v3969 = vpop.f32.mrb[0].mxu0
      %v3970 = vadd.f32 %v3767, %v3969
      %v3971 = vpop.f32.mrb[0].mxu0
      %3972 = vmatprep.mubr.f32.mxu0 0.0
      %3973 = vmatmul.mubr.f32.gmra.mrb[0].mxu0 %v3520
      %v3974 = vpop.f32.mrb[0].mxu0
      %v3975 = vadd.f32 %v3767, %v3974
      %v3976 = vpop.f32.mrb[0].mxu0
      %3977 = vmatprep.mubr.f32.mxu0 0.0
      %3978 = vmatmul.mubr.f32.gmra.mrb[0].mxu0 %v3521
      %v3979 = vpop.f32.mrb[0].mxu0
      %v3980 = vadd.f32 %v3767, %v3979
      %v3981 = vpop.f32.mrb[0].mxu0
      %3982 = vmatprep.mubr.f32.mxu0 0.0
      %3983 = vmatmul.mubr.f32.gmra.mrb[0].mxu0 %v3522
      %v3984 = vpop.f32.mrb[0].mxu0
      %v3985 = vadd.f32 %v3767, %v3984
      %v3986 = vpop.f32.mrb[0].mxu0
      %3987 = vmatprep.mubr.f32.mxu0 0.0
      %3988 = vmatmul.mubr.f32.gmra.mrb[0].mxu0 %v3523
      %v3989 = vpop.f32.mrb[0].mxu0
      %v3990 = vadd.f32 %v3767, %v3989
      %v3991 = vpop.f32.mrb[0].mxu0
      %3992 = vdwg.mxu0
      %3993 = vst.msk [vmem:[%s370] sm:$0xff] %vm3068, %v3835
      %3994 = vst.msk [vmem:[%s370 + $0x8] sm:$0xff] %vm3068, %v3840
      %3995 = vst.msk [vmem:[%s370 + $0x10] sm:$0xff] %vm3068, %v3845
      %3996 = vst.msk [vmem:[%s370 + $0x18] sm:$0xff] %vm3068, %v3850
      %3997 = vst.msk [vmem:[%s370 + $0x20] sm:$0xff] %vm3068, %v3855
      %3998 = vst.msk [vmem:[%s370 + $0x28] sm:$0xff] %vm3068, %v3860
      %3999 = vst.msk [vmem:[%s370 + $0x30] sm:$0xff] %vm3068, %v3865
      %4000 = vst.msk [vmem:[%s370 + $0x38] sm:$0xff] %vm3068, %v3870
      %4001 = vst.msk [vmem:[%s370 + $0x40] sm:$0xff] %vm3068, %v3875
      %4002 = vst.msk [vmem:[%s370 + $0x48] sm:$0xff] %vm3068, %v3880
      %4003 = vst.msk [vmem:[%s370 + $0x50] sm:$0xff] %vm3068, %v3885
      %4004 = vst.msk [vmem:[%s370 + $0x58] sm:$0xff] %vm3068, %v3890
      %4005 = vst.msk [vmem:[%s370 + $0x60] sm:$0xff] %vm3068, %v3895
      %4006 = vst.msk [vmem:[%s370 + $0x68] sm:$0xff] %vm3068, %v3900
      %4007 = vst.msk [vmem:[%s370 + $0x70] sm:$0xff] %vm3068, %v3905
      %4008 = vst.msk [vmem:[%s370 + $0x78] sm:$0xff] %vm3068, %v3910
      %4009 = vst.msk [vmem:[%s370 + $0x80] sm:$0xff] %vm3068, %v3915
      %4010 = vst.msk [vmem:[%s370 + $0x88] sm:$0xff] %vm3068, %v3920
      %4011 = vst.msk [vmem:[%s370 + $0x90] sm:$0xff] %vm3068, %v3925
      %4012 = vst.msk [vmem:[%s370 + $0x98] sm:$0xff] %vm3068, %v3930
      %4013 = vst.msk [vmem:[%s370 + $0xa0] sm:$0xff] %vm3068, %v3935
      %4014 = vst.msk [vmem:[%s370 + $0xa8] sm:$0xff] %vm3068, %v3940
      %4015 = vst.msk [vmem:[%s370 + $0xb0] sm:$0xff] %vm3068, %v3945
      %4016 = vst.msk [vmem:[%s370 + $0xb8] sm:$0xff] %vm3068, %v3950
      %4017 = vst.msk [vmem:[%s370 + $0xc0] sm:$0xff] %vm3068, %v3955
      %4018 = vst.msk [vmem:[%s370 + $0xc8] sm:$0xff] %vm3068, %v3960
      %4019 = vst.msk [vmem:[%s370 + $0xd0] sm:$0xff] %vm3068, %v3965
      %4020 = vst.msk [vmem:[%s370 + $0xd8] sm:$0xff] %vm3068, %v3970
      %4021 = vst.msk [vmem:[%s370 + $0xe0] sm:$0xff] %vm3068, %v3975
      %4022 = vst.msk [vmem:[%s370 + $0xe8] sm:$0xff] %vm3068, %v3980
      %4023 = vst.msk [vmem:[%s370 + $0xf0] sm:$0xff] %vm3068, %v3985
      %4024 = vst.msk [vmem:[%s370 + $0xf8] sm:$0xff] %vm3068, %v3990
      %v4025 = vsel %vm3068, %v3835, 0.0
      %v4026 = vsel %vm3068, %v3840, 0.0
      %v4027 = vadd.f32 %v4025, %v4026
      %v4028 = vsel %vm3068, %v3845, 0.0
      %v4029 = vadd.f32 %v4027, %v4028
      %v4030 = vsel %vm3068, %v3850, 0.0
      %v4031 = vadd.f32 %v4029, %v4030
      %v4032 = vsel %vm3068, %v3855, 0.0
      %v4033 = vadd.f32 %v4031, %v4032
      %v4034 = vsel %vm3068, %v3860, 0.0
      %v4035 = vadd.f32 %v4033, %v4034
      %v4036 = vsel %vm3068, %v3865, 0.0
      %v4037 = vadd.f32 %v4035, %v4036
      %v4038 = vsel %vm3068, %v3870, 0.0
      %v4039 = vadd.f32 %v4037, %v4038
      %v4040 = vsel %vm3068, %v3875, 0.0
      %v4041 = vadd.f32 %v4039, %v4040
      %v4042 = vsel %vm3068, %v3880, 0.0
      %v4043 = vadd.f32 %v4041, %v4042
      %v4044 = vsel %vm3068, %v3885, 0.0
      %v4045 = vadd.f32 %v4043, %v4044
      %v4046 = vsel %vm3068, %v3890, 0.0
      %v4047 = vadd.f32 %v4045, %v4046
      %v4048 = vsel %vm3068, %v3895, 0.0
      %v4049 = vadd.f32 %v4047, %v4048
      %v4050 = vsel %vm3068, %v3900, 0.0
      %v4051 = vadd.f32 %v4049, %v4050
      %v4052 = vsel %vm3068, %v3905, 0.0
      %v4053 = vadd.f32 %v4051, %v4052
      %v4054 = vsel %vm3068, %v3910, 0.0
      %v4055 = vadd.f32 %v4053, %v4054
      %v4056 = vsel %vm3068, %v3915, 0.0
      %v4057 = vadd.f32 %v4055, %v4056
      %v4058 = vsel %vm3068, %v3920, 0.0
      %v4059 = vadd.f32 %v4057, %v4058
      %v4060 = vsel %vm3068, %v3925, 0.0
      %v4061 = vadd.f32 %v4059, %v4060
      %v4062 = vsel %vm3068, %v3930, 0.0
      %v4063 = vadd.f32 %v4061, %v4062
      %v4064 = vsel %vm3068, %v3935, 0.0
      %v4065 = vadd.f32 %v4063, %v4064
      %v4066 = vsel %vm3068, %v3940, 0.0
      %v4067 = vadd.f32 %v4065, %v4066
      %v4068 = vsel %vm3068, %v3945, 0.0
      %v4069 = vadd.f32 %v4067, %v4068
      %v4070 = vsel %vm3068, %v3950, 0.0
      %v4071 = vadd.f32 %v4069, %v4070
      %v4072 = vsel %vm3068, %v3955, 0.0
      %v4073 = vadd.f32 %v4071, %v4072
      %v4074 = vsel %vm3068, %v3960, 0.0
      %v4075 = vadd.f32 %v4073, %v4074
      %v4076 = vsel %vm3068, %v3965, 0.0
      %v4077 = vadd.f32 %v4075, %v4076
      %v4078 = vsel %vm3068, %v3970, 0.0
      %v4079 = vadd.f32 %v4077, %v4078
      %v4080 = vsel %vm3068, %v3975, 0.0
      %v4081 = vadd.f32 %v4079, %v4080
      %v4082 = vsel %vm3068, %v3980, 0.0
      %v4083 = vadd.f32 %v4081, %v4082
      %v4084 = vsel %vm3068, %v3985, 0.0
      %v4085 = vadd.f32 %v4083, %v4084
      %v4086 = vsel %vm3068, %v3990, 0.0
      %v4087 = vadd.f32 %v4085, %v4086
      %v4088 = vrot.slane %v4087, 4
      %v4089 = vadd.f32 %v4087, %v4088
      %v4090 = vrot.slane %v4089, 2
      %v4091 = vadd.f32 %v4089, %v4090
      %v4092 = vrot.slane %v4091, 1
      %v4093 = vadd.f32 %v4091, %v4092
      %vm4094 = vcmask 122880
      %4095 = vst.msk [vmem:[%s373] sm:$0x1] %vm4094, %v4093
      %v4096 = vmul.f32 %v3835, %v3835
      %v4097 = vmul.f32 %v3840, %v3840
      %v4098 = vmul.f32 %v3845, %v3845
      %v4099 = vmul.f32 %v3850, %v3850
      %v4100 = vmul.f32 %v3855, %v3855
      %v4101 = vmul.f32 %v3860, %v3860
      %v4102 = vmul.f32 %v3865, %v3865
      %v4103 = vmul.f32 %v3870, %v3870
      %v4104 = vmul.f32 %v3875, %v3875
      %v4105 = vmul.f32 %v3880, %v3880
      %v4106 = vmul.f32 %v3885, %v3885
      %v4107 = vmul.f32 %v3890, %v3890
      %v4108 = vmul.f32 %v3895, %v3895
      %v4109 = vmul.f32 %v3900, %v3900
      %v4110 = vmul.f32 %v3905, %v3905
      %v4111 = vmul.f32 %v3910, %v3910
      %v4112 = vmul.f32 %v3915, %v3915
      %v4113 = vmul.f32 %v3920, %v3920
      %v4114 = vmul.f32 %v3925, %v3925
      %v4115 = vmul.f32 %v3930, %v3930
      %v4116 = vmul.f32 %v3935, %v3935
      %v4117 = vmul.f32 %v3940, %v3940
      %v4118 = vmul.f32 %v3945, %v3945
      %v4119 = vmul.f32 %v3950, %v3950
      %v4120 = vmul.f32 %v3955, %v3955
      %v4121 = vmul.f32 %v3960, %v3960
      %v4122 = vmul.f32 %v3965, %v3965
      %v4123 = vmul.f32 %v3970, %v3970
      %v4124 = vmul.f32 %v3975, %v3975
      %v4125 = vmul.f32 %v3980, %v3980
      %v4126 = vmul.f32 %v3985, %v3985
      %v4127 = vmul.f32 %v3990, %v3990
      %v4128 = vsel %vm3068, %v4096, 0.0
      %v4129 = vsel %vm3068, %v4097, 0.0
      %v4130 = vadd.f32 %v4128, %v4129
      %v4131 = vsel %vm3068, %v4098, 0.0
      %v4132 = vadd.f32 %v4130, %v4131
      %v4133 = vsel %vm3068, %v4099, 0.0
      %v4134 = vadd.f32 %v4132, %v4133
      %v4135 = vsel %vm3068, %v4100, 0.0
      %v4136 = vadd.f32 %v4134, %v4135
      %v4137 = vsel %vm3068, %v4101, 0.0
      %v4138 = vadd.f32 %v4136, %v4137
      %v4139 = vsel %vm3068, %v4102, 0.0
      %v4140 = vadd.f32 %v4138, %v4139
      %v4141 = vsel %vm3068, %v4103, 0.0
      %v4142 = vadd.f32 %v4140, %v4141
      %v4143 = vsel %vm3068, %v4104, 0.0
      %v4144 = vadd.f32 %v4142, %v4143
      %v4145 = vsel %vm3068, %v4105, 0.0
      %v4146 = vadd.f32 %v4144, %v4145
      %v4147 = vsel %vm3068, %v4106, 0.0
      %v4148 = vadd.f32 %v4146, %v4147
      %v4149 = vsel %vm3068, %v4107, 0.0
      %v4150 = vadd.f32 %v4148, %v4149
      %v4151 = vsel %vm3068, %v4108, 0.0
      %v4152 = vadd.f32 %v4150, %v4151
      %v4153 = vsel %vm3068, %v4109, 0.0
      %v4154 = vadd.f32 %v4152, %v4153
      %v4155 = vsel %vm3068, %v4110, 0.0
      %v4156 = vadd.f32 %v4154, %v4155
      %v4157 = vsel %vm3068, %v4111, 0.0
      %v4158 = vadd.f32 %v4156, %v4157
      %v4159 = vsel %vm3068, %v4112, 0.0
      %v4160 = vadd.f32 %v4158, %v4159
      %v4161 = vsel %vm3068, %v4113, 0.0
      %v4162 = vadd.f32 %v4160, %v4161
      %v4163 = vsel %vm3068, %v4114, 0.0
      %v4164 = vadd.f32 %v4162, %v4163
      %v4165 = vsel %vm3068, %v4115, 0.0
      %v4166 = vadd.f32 %v4164, %v4165
      %v4167 = vsel %vm3068, %v4116, 0.0
      %v4168 = vadd.f32 %v4166, %v4167
      %v4169 = vsel %vm3068, %v4117, 0.0
      %v4170 = vadd.f32 %v4168, %v4169
      %v4171 = vsel %vm3068, %v4118, 0.0
      %v4172 = vadd.f32 %v4170, %v4171
      %v4173 = vsel %vm3068, %v4119, 0.0
      %v4174 = vadd.f32 %v4172, %v4173
      %v4175 = vsel %vm3068, %v4120, 0.0
      %v4176 = vadd.f32 %v4174, %v4175
      %v4177 = vsel %vm3068, %v4121, 0.0
      %v4178 = vadd.f32 %v4176, %v4177
      %v4179 = vsel %vm3068, %v4122, 0.0
      %v4180 = vadd.f32 %v4178, %v4179
      %v4181 = vsel %vm3068, %v4123, 0.0
      %v4182 = vadd.f32 %v4180, %v4181
      %v4183 = vsel %vm3068, %v4124, 0.0
      %v4184 = vadd.f32 %v4182, %v4183
      %v4185 = vsel %vm3068, %v4125, 0.0
      %v4186 = vadd.f32 %v4184, %v4185
      %v4187 = vsel %vm3068, %v4126, 0.0
      %v4188 = vadd.f32 %v4186, %v4187
      %v4189 = vsel %vm3068, %v4127, 0.0
      %v4190 = vadd.f32 %v4188, %v4189
      %v4191 = vrot.slane %v4190, 4
      %v4192 = vadd.f32 %v4190, %v4191
      %v4193 = vrot.slane %v4192, 2
      %v4194 = vadd.f32 %v4192, %v4193
      %v4195 = vrot.slane %v4194, 1
      %v4196 = vadd.f32 %v4194, %v4195
      %4197 = vst.msk [vmem:[%s376] sm:$0x1] %vm4094, %v4196
      %p4198 = scmp.lt.s32.totalorder %s22, 1
      %s4199 = scalar_select %p4198, %s22, 1
      %s4200 = smul.addr %s4199, 32
      %s4201 = smul.addr %s4200, 8
      %s4202 = scalar_lea.vmem %s8, %s4201
      %p4203 = scmp.lt.s32.totalorder %s22, 1
      %s4204 = scalar_select %p4203, %s22, 1
      %s4205 = scalar_lea.vmem %s9, %s4204
      %p4206 = scmp.lt.s32.totalorder %s22, 1
      %s4207 = scalar_select %p4206, %s22, 1
      %s4208 = scalar_lea.vmem %s10, %s4207
      // Predicated region
      $region53: #{_lambda_.2} parent=51 // pred_check
        %p4209 = pneg %p213
      $region54: #{_lambda_.2} parent=51 // pred_check_branch
        %4211 = sbr.rel (%p4209) target = $region56
      $region55: #{_lambda_.2} parent=51 // pred_region
        _
      $region56: #{_lambda_.2} parent=51 // pred_fallthru
        _
      // Predicated region
      $region57: #{_lambda_.2} parent=51 // pred_check
        %p4212 = pneg %p239
      $region58: #{_lambda_.2} parent=51 // pred_check_branch
        %4214 = sbr.rel (%p4212) target = $region60
      $region59: #{_lambda_.2} parent=51 // pred_region
        _
      $region60: #{_lambda_.2} parent=51 // pred_fallthru
        _
      // Predicated region
      $region61: #{_lambda_.2} parent=51 // pred_check
        %p4215 = pneg %p265
      $region62: #{_lambda_.2} parent=51 // pred_check_branch
        %4217 = sbr.rel (%p4215) target = $region64
      $region63: #{_lambda_.2} parent=51 // pred_region
        _
      $region64: #{_lambda_.2} parent=51 // pred_fallthru
        _
    $region52: #{_lambda_.2} parent=5 // pred_fallthru
      _
    %p4218 = scmp.le.s32.totalorder 2, %s17
    // Predicated region
    $region65: #{_lambda_.2} parent=5 // pred_check
      %p4219 = pneg %p4218
    $region66: #{_lambda_.2} parent=5 // pred_check_branch
      %4221 = sbr.rel (%p4219) target = $region68
    $region67: #{_lambda_.2} parent=5 // pred_region
      %s4222 = ssub.s32 %s17, 2
      // Predicated region
      $region69: #{_lambda_.2} parent=67 // pred_check
        %p4223 = pneg %p219
      $region70: #{_lambda_.2} parent=67 // pred_check_branch
        %4225 = sbr.rel (%p4223) target = $region72
      $region71: #{_lambda_.2} parent=67 // pred_region
        %p4226 = scmp.lt.s32.totalorder %s23, 1
        %s4227 = scalar_select %p4226, %s23, 1
        %s4228 = smul.addr %s4227, 32
        %s4229 = smul.addr %s4228, 8
        %s4230 = scalar_lea.vmem %s8, %s4229
      $region72: #{_lambda_.2} parent=67 // pred_fallthru
        _
      // Predicated region
      $region73: #{_lambda_.2} parent=67 // pred_check
        %p4231 = pneg %p245
      $region74: #{_lambda_.2} parent=67 // pred_check_branch
        %4233 = sbr.rel (%p4231) target = $region76
      $region75: #{_lambda_.2} parent=67 // pred_region
        %p4234 = scmp.lt.s32.totalorder %s23, 1
        %s4235 = scalar_select %p4234, %s23, 1
        %s4236 = scalar_lea.vmem %s9, %s4235
      $region76: #{_lambda_.2} parent=67 // pred_fallthru
        _
      // Predicated region
      $region77: #{_lambda_.2} parent=67 // pred_check
        %p4237 = pneg %p271
      $region78: #{_lambda_.2} parent=67 // pred_check_branch
        %4239 = sbr.rel (%p4237) target = $region80
      $region79: #{_lambda_.2} parent=67 // pred_region
        %p4240 = scmp.lt.s32.totalorder %s23, 1
        %s4241 = scalar_select %p4240, %s23, 1
        %s4242 = scalar_lea.vmem %s10, %s4241
      $region80: #{_lambda_.2} parent=67 // pred_fallthru
        _
    $region68: #{_lambda_.2} parent=5 // pred_fallthru
      _
  $region6: #{_lambda_.2} parent=0 // loop_footer
    %s21 = sadd.s32 1, %s17
  $region7: #{_lambda_.2} parent=0 // loop_footer_branch
    %16 = sbr.rel target = $region3
  $region8: #{_lambda_.2} parent=0 // loop_exit
    _

</llo_original>
